<compile_context>
chip_gen: v5e
topology: v5e:2x2
jax: 0.10.0
libtpu: 0.0.40
codegen_flags: <defaults>
</compile_context>

<pallas_src>
import numpy as np
import jax
import jax.numpy as jnp
from jax import lax
from jax.experimental import pallas as pl
from jax.experimental.pallas import tpu as pltpu


# ---------------- Dio config (mirrors the torch module's __init__) ----------------
FS = 8000            # sampling rate (small for test; module default is 22050)
N_FFT = 256          # kept for parity with the module (unused by the stand-in)
HOP_LENGTH = 64
F0MIN = 200
F0MAX = 800
USE_TOKEN_AVERAGED_F0 = True
USE_CONTINUOUS_F0 = True
USE_LOG_F0 = True
REDUCTION_FACTOR = 1

# Stand-in pitch-detector constants (normalized autocorrelation over candidate lags).
# TODO(synk): pyworld.dio + pyworld.stonemask are external NumPy/C algorithms with no
# Pallas equivalent; a normalized-autocorrelation pitch estimator stands in here.
WIN = 64                          # analysis window (== HOP_LENGTH)
LAG_MIN = FS // F0MAX             # 10
LAG_MAX = FS // F0MIN             # 40
FRAME_LEN = WIN + LAG_MAX         # 104 (samples needed per frame, <= 2*HOP)
VOICED_THRESH = 0.30

FB = 256                          # frames per block (lane tile for kernel 1)
TB = 128                          # tokens per block (lane tile for kernel 2)
NFB = 256                         # frames per reduction chunk in kernel 2


# ------------------------- Pallas kernel 1: frame-level F0 -------------------------
def _f0_kernel(frames_ref, f0_ref, x_scr):
    # frames_ref: (1, FB, 2*HOP)  overlapped frames for this block (lane-dense rows)
    # f0_ref:     (1, 1, FB)      lane-dense f0 for this frame block
    # x_scr:      (2*HOP, FB)     frames-on-lanes scratch: x[s, f] = frame_f[sample s]
    # Single transpose straight into scratch (no concat intermediate, low vst pressure).
    x_scr[...] = frames_ref[0].T                                      # (2*HOP, FB)

    base = x_scr[0:WIN, :]                                            # (WIN, FB)
    # Sublane-axis reductions: VPU vreg adds + one 8-sublane fold (full lane width).
    e0 = jnp.sum(base * base, axis=0, keepdims=True)                  # (1, FB)

    seg = x_scr[LAG_MIN:LAG_MIN + WIN, :]
    e1 = jnp.sum(seg * seg, axis=0, keepdims=True)
    corr = jnp.sum(base * seg, axis=0, keepdims=True)
    best_nacf = corr * lax.rsqrt(e0 * e1 + 1e-12)                     # rsqrt on EUP slot
    best_lag = jnp.full_like(best_nacf, float(LAG_MIN))

    # Static unroll over the 30 remaining candidate lags: per-lag seg values are
    # re-loaded from VMEM scratch at static sublane offsets (small live ranges);
    # e1 is updated incrementally, only `corr` needs a reduce per lag.
    for lag in range(LAG_MIN + 1, LAG_MAX + 1):
        lo = x_scr[lag - 1:lag, :]                                    # (1, FB)
        hi = x_scr[lag + WIN - 1:lag + WIN, :]                        # (1, FB)
        e1 = e1 - lo * lo + hi * hi
        seg = x_scr[lag:lag + WIN, :]                                 # (WIN, FB)
        corr = jnp.sum(base * seg, axis=0, keepdims=True)
        nacf = corr * lax.rsqrt(e0 * e1 + 1e-12)
        upd = nacf > best_nacf
        best_nacf = jnp.where(upd, nacf, best_nacf)
        best_lag = jnp.where(upd, jnp.float32(lag), best_lag)

    voiced = best_nacf > VOICED_THRESH
    f0_ref[0] = jnp.where(voiced, jnp.float32(FS) / best_lag, jnp.float32(0.0))


def _frame_f0(frames, nf_pad):
    B = frames.shape[0]
    nfb = nf_pad // FB
    return pl.pallas_call(
        _f0_kernel,
        out_shape=jax.ShapeDtypeStruct((B, 1, nf_pad), jnp.float32),
        grid=(B, nfb),
        in_specs=[pl.BlockSpec((1, FB, 2 * HOP_LENGTH), lambda b, fb: (b, fb, 0))],
        out_specs=pl.BlockSpec((1, 1, FB), lambda b, fb: (b, 0, fb)),
        scratch_shapes=[pltpu.VMEM((2 * HOP_LENGTH, FB), jnp.float32)],
        compiler_params=pltpu.CompilerParams(
            dimension_semantics=("parallel", "parallel"),
            vmem_limit_bytes=32 * 1024 * 1024),
    )(frames)


# --------------- Pallas kernel 2: duration-segmented masked mean -------------------
# _average_by_duration: for each token segment [start, end), average the positive
# (log-)f0 values, else 0.0.  The (sum, count) per token is one small MXU matmul per
# NFB-frame chunk, accumulated into an (8, TB) scratch (frame axis = "arbitrary").
def _token_avg_kernel(blo_ref, bhi_ref, y_ref, start_ref, end_ref, out_ref, acc):
    # blo/bhi:  SMEM (B, ntb) int32 — frame range covered by each token block (prefetch)
    # y_ref:    (1, 8, NFB) f32 — rows: [positive log-f0, positive count, 0 .. 0]
    # start/end_ref: (1, 1, TB) int32 ; out_ref: (1, 1, TB) f32 ; acc: VMEM (8, TB) f32
    b = pl.program_id(0)
    t = pl.program_id(1)
    k = pl.program_id(2)

    @pl.when(k == 0)
    def _():
        acc[...] = jnp.zeros_like(acc)

    lo = blo_ref[b, t]
    hi = bhi_ref[b, t]
    cbase = k * NFB

    # Skip frame chunks that cannot intersect this token block's [lo, hi) range.
    @pl.when(jnp.logical_and(cbase < hi, cbase + NFB > lo))
    def _():
        st = start_ref[0]                                             # (1, TB) int32
        en = end_ref[0]                                               # (1, TB) int32
        fidx = cbase + lax.broadcasted_iota(jnp.int32, (NFB, TB), 0)
        # Segments are contiguous -> mask = [fidx >= st] - [fidx >= en] (no AND).
        mask = (fidx >= st).astype(jnp.float32) - (fidx >= en).astype(jnp.float32)
        acc[...] += jnp.dot(y_ref[0], mask, preferred_element_type=jnp.float32)

    @pl.when(k == pl.num_programs(2) - 1)
    def _():
        s = acc[0:1, :]
        c = acc[1:2, :]
        out_ref[0] = jnp.where(c > 0.0, s / jnp.maximum(c, 1.0), jnp.float32(0.0))


def _token_average(y, starts, ends, blo, bhi):
    B, _, nf_pad = y.shape
    ntok_pad = starts.shape[-1]
    ntb = ntok_pad // TB
    nkb = nf_pad // NFB
    grid_spec = pltpu.PrefetchScalarGridSpec(
        num_scalar_prefetch=2,
        grid=(B, ntb, nkb),
        in_specs=[
            pl.BlockSpec((1, 8, NFB), lambda b, t, k, blo, bhi: (b, 0, k)),
            pl.BlockSpec((1, 1, TB), lambda b, t, k, blo, bhi: (b, 0, t)),
            pl.BlockSpec((1, 1, TB), lambda b, t, k, blo, bhi: (b, 0, t)),
        ],
        out_specs=pl.BlockSpec((1, 1, TB), lambda b, t, k, blo, bhi: (b, 0, t)),
        scratch_shapes=[pltpu.VMEM((8, TB), jnp.float32)],
    )
    return pl.pallas_call(
        _token_avg_kernel,
        out_shape=jax.ShapeDtypeStruct((B, 1, ntok_pad), jnp.float32),
        grid_spec=grid_spec,
        compiler_params=pltpu.CompilerParams(
            dimension_semantics=("parallel", "parallel", "arbitrary"),
            vmem_limit_bytes=32 * 1024 * 1024),
    )(blo, bhi, y, starts, ends)


# ----------------------- JAX glue: continuous-f0 interpolation ---------------------
# TODO(synk): the continuous-f0 fill needs a global prev/next-voiced scan over the
# whole utterance; it stays as (tiny) XLA glue between the two kernels rather than
# being fused into a per-block kernel epilogue.
def _convert_to_continuous_f0(f0):
    # mirrors Dio._convert_to_continuous_f0 (constant boundary fill + linear interp)
    n = f0.shape[0]
    nz = f0 != 0.0
    any_nz = jnp.any(nz)
    idx = jnp.arange(n, dtype=jnp.int32)
    prev = lax.associative_scan(jnp.maximum, jnp.where(nz, idx, -1))
    nxt = lax.associative_scan(jnp.minimum, jnp.where(nz, idx, n), reverse=True)
    first = jnp.argmax(nz).astype(jnp.int32)
    last = (n - 1 - jnp.argmax(nz[::-1])).astype(jnp.int32)
    prev_c = jnp.where(prev < 0, first, prev)
    nxt_c = jnp.where(nxt >= n, last, nxt)
    f0p = f0[prev_c]
    f0n = f0[nxt_c]
    denom = jnp.maximum(nxt_c - prev_c, 1).astype(jnp.float32)
    w = jnp.clip((idx - prev_c).astype(jnp.float32) / denom, 0.0, 1.0)
    interp = f0p + (f0n - f0p) * w
    out = jnp.where(nz, f0, interp)
    return jnp.where(any_nz, out, f0)


# ----------------------------------- forward ---------------------------------------
def dio_forward(speech, input_lengths=None, durations=None, durations_lengths=None):
    """Dio.forward equivalent (use_token_averaged_f0 path).

    speech: (B, T) float32; durations: (B, n_tok) int; durations_lengths: (B,) int.
    Assumes full input_lengths (all == T) for batched framing.
    Returns (pitch (B, n_tok, 1) float32, pitch_lengths (B,) int32).
    """
    B, T = speech.shape
    n_frames = T // HOP_LENGTH
    nf_pad = max(FB, ((n_frames + FB - 1) // FB) * FB)

    # Overlapped, lane-dense frames (B, nf_pad, 2*HOP) built with two reshapes + stack
    # (2x waveform HBM footprint, negligible; kernel-1 VMEM per step stays O(FB)).
    L = (nf_pad + 2) * HOP_LENGTH
    w = jnp.zeros((B, L), jnp.float32).at[:, :T].set(speech.astype(jnp.float32))
    half = nf_pad // 2
    f_even = w[:, : half * 2 * HOP_LENGTH].reshape(B, half, 2 * HOP_LENGTH)
    f_odd = w[:, HOP_LENGTH: HOP_LENGTH + half * 2 * HOP_LENGTH].reshape(
        B, half, 2 * HOP_LENGTH)
    frames = jnp.stack([f_even, f_odd], axis=2).reshape(B, nf_pad, 2 * HOP_LENGTH)

    # frame-level F0 (Pallas kernel 1), lane-dense (B, 1, nf_pad)
    f0_row = _frame_f0(frames, nf_pad)
    f0 = f0_row[:, 0, :n_frames]                            # (B, n_frames)

    if USE_CONTINUOUS_F0:
        f0 = jax.vmap(_convert_to_continuous_f0)(f0)
    if USE_LOG_F0:
        nz = f0 != 0.0
        f0 = jnp.where(nz, jnp.log(jnp.where(nz, f0, 1.0)), f0)

    # Hoisted once (not per token block): positive log-f0 + count rows for the MXU LHS.
    pos = (f0 > 0.0).astype(jnp.float32)
    y = jnp.zeros((B, 8, nf_pad), jnp.float32)
    y = y.at[:, 0, :n_frames].set(f0 * pos)
    y = y.at[:, 1, :n_frames].set(pos)

    # durations * reduction_factor, cumsum boundaries (F.pad(cumsum, (1, 0)))
    d = durations.astype(jnp.int32) * REDUCTION_FACTOR      # (B, n_tok)
    dc = jnp.concatenate(
        [jnp.zeros((B, 1), jnp.int32), jnp.cumsum(d, axis=1)], axis=1)
    n_tok = durations.shape[1]
    ntok_pad = max(TB, ((n_tok + TB - 1) // TB) * TB)
    starts = jnp.zeros((B, 1, ntok_pad), jnp.int32).at[:, 0, :n_tok].set(dc[:, :-1])
    ends = jnp.zeros((B, 1, ntok_pad), jnp.int32).at[:, 0, :n_tok].set(dc[:, 1:])

    # per-token-block frame ranges for the scalar-prefetch chunk-skip guard
    ntb = ntok_pad // TB
    blo = starts[:, 0, :].reshape(B, ntb, TB)[:, :, 0]                 # (B, ntb)
    bhi = jnp.max(ends[:, 0, :].reshape(B, ntb, TB), axis=-1)          # (B, ntb)

    # token-averaged pitch (Pallas kernel 2); zero-duration pad tokens -> 0.0 (pad_list)
    pitch_row = _token_average(y, starts, ends, blo, bhi)   # (B, 1, ntok_pad)
    pitch = pitch_row[:, 0, :n_tok][..., None]              # (B, n_tok, 1)
    pitch_lengths = durations_lengths.astype(jnp.int32)
    return pitch, pitch_lengths


if __name__ == "__main__":
    key = jax.random.PRNGKey(0)
    B, T = 2, 1024
    n_frames = T // HOP_LENGTH  # 16

    # deterministic test waveform: per-sample sine + tiny noise
    t = jnp.arange(T, dtype=jnp.float32) / FS
    f0_true = jnp.array([300.0, 250.0], dtype=jnp.float32)
    sig = jnp.sin(2.0 * jnp.pi * f0_true[:, None] * t[None, :])
    noise = 0.01 * jax.random.normal(key, (B, T), dtype=jnp.float32)
    speech = sig + noise

    input_lengths = jnp.full((B,), T, dtype=jnp.int32)
    durations = jnp.array([[4, 4, 4, 4],
                           [6, 5, 5, 0]], dtype=jnp.int32)   # sums == n_frames
    durations_lengths = jnp.array([4, 3], dtype=jnp.int32)

    # matches torch assert: 0 <= n_frames - d.sum() < reduction_factor
    for s in np.asarray(durations.sum(axis=1)):
        assert 0 <= n_frames - int(s) < REDUCTION_FACTOR

    pitch, pitch_lengths = dio_forward(
        speech, input_lengths, durations, durations_lengths)
    pitch = jax.block_until_ready(pitch)
    pitch_lengths = jax.block_until_ready(pitch_lengths)

    assert pitch.shape == (B, durations.shape[1], 1)
    assert pitch.dtype == jnp.float32
    assert pitch_lengths.shape == (B,)
    assert bool(jnp.all(jnp.isfinite(pitch)))
    print("KERNEL_OK")
</pallas_src>

<mosaic_0001>
module attributes {stable_mosaic.version = 11 : i64} {
  func.func @_f0_kernel(%arg0: i32, %arg1: i32, %arg2: memref<1x256x128xf32, #tpu.memory_space<vmem>>, %arg3: memref<1x1x256xf32, #tpu.memory_space<vmem>>, %arg4: memref<128x256xf32, #tpu.memory_space<vmem>>) attributes {dimension_semantics = [#tpu.dimension_semantics<parallel>, #tpu.dimension_semantics<parallel>], iteration_bounds = array<i64: 2, 1>, scalar_prefetch = 0 : i64, scratch_operands = 1 : i64, tpu.core_type = #tpu.core_type<tc>, window_params = [{transform_indices = @transform_0, window_bounds = array<i64: 1, 256, 128>}, {transform_indices = @transform_1, window_bounds = array<i64: 1, 1, 256>}]} {
    %c0 = arith.constant 0 : index
    %c0_0 = arith.constant 0 : index
    %c0_1 = arith.constant 0 : index
    %0 = vector.load %arg2[%c0, %c0_0, %c0_1] : memref<1x256x128xf32, #tpu.memory_space<vmem>>, vector<1x256x128xf32>
    %1 = vector.shape_cast %0 : vector<1x256x128xf32> to vector<256x128xf32>
    %2 = tpu.transpose %1, [1, 0] : vector<256x128xf32> -> vector<128x256xf32>
    %c0_2 = arith.constant 0 : index
    %c0_3 = arith.constant 0 : index
    %3 = vector.load %arg4[%c0_2, %c0_3] : memref<128x256xf32, #tpu.memory_space<vmem>>, vector<128x256xf32>
    tpu.vector_store %arg4[%c0_2, %c0_3], %2 {strides = array<i32>} : memref<128x256xf32, #tpu.memory_space<vmem>>, vector<128x256xf32>,
    %c0_4 = arith.constant 0 : index
    %c0_5 = arith.constant 0 : index
    %4 = vector.load %arg4[%c0_4, %c0_5] : memref<128x256xf32, #tpu.memory_space<vmem>>, vector<64x256xf32>
    %5 = arith.mulf %4, %4 : vector<64x256xf32>
    %cst = arith.constant dense<0.000000e+00> : vector<256xf32>
    %6 = vector.multi_reduction <add>, %5, %cst [0] : vector<64x256xf32> to vector<256xf32>
    %7 = vector.shape_cast %6 : vector<256xf32> to vector<1x256xf32>
    %c10 = arith.constant 10 : index
    %c0_6 = arith.constant 0 : index
    %8 = vector.load %arg4[%c10, %c0_6] : memref<128x256xf32, #tpu.memory_space<vmem>>, vector<64x256xf32>
    %9 = arith.mulf %8, %8 : vector<64x256xf32>
    %cst_7 = arith.constant dense<0.000000e+00> : vector<256xf32>
    %10 = vector.multi_reduction <add>, %9, %cst_7 [0] : vector<64x256xf32> to vector<256xf32>
    %11 = vector.shape_cast %10 : vector<256xf32> to vector<1x256xf32>
    %12 = arith.mulf %4, %8 : vector<64x256xf32>
    %cst_8 = arith.constant dense<0.000000e+00> : vector<256xf32>
    %13 = vector.multi_reduction <add>, %12, %cst_8 [0] : vector<64x256xf32> to vector<256xf32>
    %14 = vector.shape_cast %13 : vector<256xf32> to vector<1x256xf32>
    %15 = arith.mulf %7, %11 : vector<1x256xf32>
    %cst_9 = arith.constant 9.99999996E-13 : f32
    %16 = vector.broadcast %cst_9 : f32 to vector<1x256xf32>
    %17 = arith.addf %15, %16 : vector<1x256xf32>
    %18 = math.rsqrt %17 : vector<1x256xf32>
    %19 = arith.mulf %14, %18 : vector<1x256xf32>
    %cst_10 = arith.constant 1.000000e+01 : f32
    %20 = vector.broadcast %cst_10 : f32 to vector<1x256xf32>
    %c10_11 = arith.constant 10 : index
    %c0_12 = arith.constant 0 : index
    %21 = vector.load %arg4[%c10_11, %c0_12] : memref<128x256xf32, #tpu.memory_space<vmem>>, vector<1x256xf32>
    %c74 = arith.constant 74 : index
    %c0_13 = arith.constant 0 : index
    %22 = vector.load %arg4[%c74, %c0_13] : memref<128x256xf32, #tpu.memory_space<vmem>>, vector<1x256xf32>
    %23 = arith.mulf %21, %21 : vector<1x256xf32>
    %24 = arith.subf %11, %23 : vector<1x256xf32>
    %25 = arith.mulf %22, %22 : vector<1x256xf32>
    %26 = arith.addf %24, %25 : vector<1x256xf32>
    %c11 = arith.constant 11 : index
    %c0_14 = arith.constant 0 : index
    %27 = vector.load %arg4[%c11, %c0_14] : memref<128x256xf32, #tpu.memory_space<vmem>>, vector<64x256xf32>
    %28 = arith.mulf %4, %27 : vector<64x256xf32>
    %cst_15 = arith.constant dense<0.000000e+00> : vector<256xf32>
    %29 = vector.multi_reduction <add>, %28, %cst_15 [0] : vector<64x256xf32> to vector<256xf32>
    %30 = vector.shape_cast %29 : vector<256xf32> to vector<1x256xf32>
    %31 = arith.mulf %7, %26 : vector<1x256xf32>
    %cst_16 = arith.constant 9.99999996E-13 : f32
    %32 = vector.broadcast %cst_16 : f32 to vector<1x256xf32>
    %33 = arith.addf %31, %32 : vector<1x256xf32>
    %34 = math.rsqrt %33 : vector<1x256xf32>
    %35 = arith.mulf %30, %34 : vector<1x256xf32>
    %36 = arith.cmpf ogt, %35, %19 : vector<1x256xf32>
    %37 = arith.select %36, %35, %19 : vector<1x256xi1>, vector<1x256xf32>
    %cst_17 = arith.constant 1.100000e+01 : f32
    %38 = vector.broadcast %cst_17 : f32 to vector<1x256xf32>
    %39 = arith.select %36, %38, %20 : vector<1x256xi1>, vector<1x256xf32>
    %c11_18 = arith.constant 11 : index
    %c0_19 = arith.constant 0 : index
    %40 = vector.load %arg4[%c11_18, %c0_19] : memref<128x256xf32, #tpu.memory_space<vmem>>, vector<1x256xf32>
    %c75 = arith.constant 75 : index
    %c0_20 = arith.constant 0 : index
    %41 = vector.load %arg4[%c75, %c0_20] : memref<128x256xf32, #tpu.memory_space<vmem>>, vector<1x256xf32>
    %42 = arith.mulf %40, %40 : vector<1x256xf32>
    %43 = arith.subf %26, %42 : vector<1x256xf32>
    %44 = arith.mulf %41, %41 : vector<1x256xf32>
    %45 = arith.addf %43, %44 : vector<1x256xf32>
    %c12 = arith.constant 12 : index
    %c0_21 = arith.constant 0 : index
    %46 = vector.load %arg4[%c12, %c0_21] : memref<128x256xf32, #tpu.memory_space<vmem>>, vector<64x256xf32>
    %47 = arith.mulf %4, %46 : vector<64x256xf32>
    %cst_22 = arith.constant dense<0.000000e+00> : vector<256xf32>
    %48 = vector.multi_reduction <add>, %47, %cst_22 [0] : vector<64x256xf32> to vector<256xf32>
    %49 = vector.shape_cast %48 : vector<256xf32> to vector<1x256xf32>
    %50 = arith.mulf %7, %45 : vector<1x256xf32>
    %cst_23 = arith.constant 9.99999996E-13 : f32
    %51 = vector.broadcast %cst_23 : f32 to vector<1x256xf32>
    %52 = arith.addf %50, %51 : vector<1x256xf32>
    %53 = math.rsqrt %52 : vector<1x256xf32>
    %54 = arith.mulf %49, %53 : vector<1x256xf32>
    %55 = arith.cmpf ogt, %54, %37 : vector<1x256xf32>
    %56 = arith.select %55, %54, %37 : vector<1x256xi1>, vector<1x256xf32>
    %cst_24 = arith.constant 1.200000e+01 : f32
    %57 = vector.broadcast %cst_24 : f32 to vector<1x256xf32>
    %58 = arith.select %55, %57, %39 : vector<1x256xi1>, vector<1x256xf32>
    %c12_25 = arith.constant 12 : index
    %c0_26 = arith.constant 0 : index
    %59 = vector.load %arg4[%c12_25, %c0_26] : memref<128x256xf32, #tpu.memory_space<vmem>>, vector<1x256xf32>
    %c76 = arith.constant 76 : index
    %c0_27 = arith.constant 0 : index
    %60 = vector.load %arg4[%c76, %c0_27] : memref<128x256xf32, #tpu.memory_space<vmem>>, vector<1x256xf32>
    %61 = arith.mulf %59, %59 : vector<1x256xf32>
    %62 = arith.subf %45, %61 : vector<1x256xf32>
    %63 = arith.mulf %60, %60 : vector<1x256xf32>
    %64 = arith.addf %62, %63 : vector<1x256xf32>
    %c13 = arith.constant 13 : index
    %c0_28 = arith.constant 0 : index
    %65 = vector.load %arg4[%c13, %c0_28] : memref<128x256xf32, #tpu.memory_space<vmem>>, vector<64x256xf32>
    %66 = arith.mulf %4, %65 : vector<64x256xf32>
    %cst_29 = arith.constant dense<0.000000e+00> : vector<256xf32>
    %67 = vector.multi_reduction <add>, %66, %cst_29 [0] : vector<64x256xf32> to vector<256xf32>
    %68 = vector.shape_cast %67 : vector<256xf32> to vector<1x256xf32>
    %69 = arith.mulf %7, %64 : vector<1x256xf32>
    %cst_30 = arith.constant 9.99999996E-13 : f32
    %70 = vector.broadcast %cst_30 : f32 to vector<1x256xf32>
    %71 = arith.addf %69, %70 : vector<1x256xf32>
    %72 = math.rsqrt %71 : vector<1x256xf32>
    %73 = arith.mulf %68, %72 : vector<1x256xf32>
    %74 = arith.cmpf ogt, %73, %56 : vector<1x256xf32>
    %75 = arith.select %74, %73, %56 : vector<1x256xi1>, vector<1x256xf32>
    %cst_31 = arith.constant 1.300000e+01 : f32
    %76 = vector.broadcast %cst_31 : f32 to vector<1x256xf32>
    %77 = arith.select %74, %76, %58 : vector<1x256xi1>, vector<1x256xf32>
    %c13_32 = arith.constant 13 : index
    %c0_33 = arith.constant 0 : index
    %78 = vector.load %arg4[%c13_32, %c0_33] : memref<128x256xf32, #tpu.memory_space<vmem>>, vector<1x256xf32>
    %c77 = arith.constant 77 : index
    %c0_34 = arith.constant 0 : index
    %79 = vector.load %arg4[%c77, %c0_34] : memref<128x256xf32, #tpu.memory_space<vmem>>, vector<1x256xf32>
    %80 = arith.mulf %78, %78 : vector<1x256xf32>
    %81 = arith.subf %64, %80 : vector<1x256xf32>
    %82 = arith.mulf %79, %79 : vector<1x256xf32>
    %83 = arith.addf %81, %82 : vector<1x256xf32>
    %c14 = arith.constant 14 : index
    %c0_35 = arith.constant 0 : index
    %84 = vector.load %arg4[%c14, %c0_35] : memref<128x256xf32, #tpu.memory_space<vmem>>, vector<64x256xf32>
    %85 = arith.mulf %4, %84 : vector<64x256xf32>
    %cst_36 = arith.constant dense<0.000000e+00> : vector<256xf32>
    %86 = vector.multi_reduction <add>, %85, %cst_36 [0] : vector<64x256xf32> to vector<256xf32>
    %87 = vector.shape_cast %86 : vector<256xf32> to vector<1x256xf32>
    %88 = arith.mulf %7, %83 : vector<1x256xf32>
    %cst_37 = arith.constant 9.99999996E-13 : f32
    %89 = vector.broadcast %cst_37 : f32 to vector<1x256xf32>
    %90 = arith.addf %88, %89 : vector<1x256xf32>
    %91 = math.rsqrt %90 : vector<1x256xf32>
    %92 = arith.mulf %87, %91 : vector<1x256xf32>
    %93 = arith.cmpf ogt, %92, %75 : vector<1x256xf32>
    %94 = arith.select %93, %92, %75 : vector<1x256xi1>, vector<1x256xf32>
    %cst_38 = arith.constant 1.400000e+01 : f32
    %95 = vector.broadcast %cst_38 : f32 to vector<1x256xf32>
    %96 = arith.select %93, %95, %77 : vector<1x256xi1>, vector<1x256xf32>
    %c14_39 = arith.constant 14 : index
    %c0_40 = arith.constant 0 : index
    %97 = vector.load %arg4[%c14_39, %c0_40] : memref<128x256xf32, #tpu.memory_space<vmem>>, vector<1x256xf32>
    %c78 = arith.constant 78 : index
    %c0_41 = arith.constant 0 : index
    %98 = vector.load %arg4[%c78, %c0_41] : memref<128x256xf32, #tpu.memory_space<vmem>>, vector<1x256xf32>
    %99 = arith.mulf %97, %97 : vector<1x256xf32>
    %100 = arith.subf %83, %99 : vector<1x256xf32>
    %101 = arith.mulf %98, %98 : vector<1x256xf32>
    %102 = arith.addf %100, %101 : vector<1x256xf32>
    %c15 = arith.constant 15 : index
    %c0_42 = arith.constant 0 : index
    %103 = vector.load %arg4[%c15, %c0_42] : memref<128x256xf32, #tpu.memory_space<vmem>>, vector<64x256xf32>
    %104 = arith.mulf %4, %103 : vector<64x256xf32>
    %cst_43 = arith.constant dense<0.000000e+00> : vector<256xf32>
    %105 = vector.multi_reduction <add>, %104, %cst_43 [0] : vector<64x256xf32> to vector<256xf32>
    %106 = vector.shape_cast %105 : vector<256xf32> to vector<1x256xf32>
    %107 = arith.mulf %7, %102 : vector<1x256xf32>
    %cst_44 = arith.constant 9.99999996E-13 : f32
    %108 = vector.broadcast %cst_44 : f32 to vector<1x256xf32>
    %109 = arith.addf %107, %108 : vector<1x256xf32>
    %110 = math.rsqrt %109 : vector<1x256xf32>
    %111 = arith.mulf %106, %110 : vector<1x256xf32>
    %112 = arith.cmpf ogt, %111, %94 : vector<1x256xf32>
    %113 = arith.select %112, %111, %94 : vector<1x256xi1>, vector<1x256xf32>
    %cst_45 = arith.constant 1.500000e+01 : f32
    %114 = vector.broadcast %cst_45 : f32 to vector<1x256xf32>
    %115 = arith.select %112, %114, %96 : vector<1x256xi1>, vector<1x256xf32>
    %c15_46 = arith.constant 15 : index
    %c0_47 = arith.constant 0 : index
    %116 = vector.load %arg4[%c15_46, %c0_47] : memref<128x256xf32, #tpu.memory_space<vmem>>, vector<1x256xf32>
    %c79 = arith.constant 79 : index
    %c0_48 = arith.constant 0 : index
    %117 = vector.load %arg4[%c79, %c0_48] : memref<128x256xf32, #tpu.memory_space<vmem>>, vector<1x256xf32>
    %118 = arith.mulf %116, %116 : vector<1x256xf32>
    %119 = arith.subf %102, %118 : vector<1x256xf32>
    %120 = arith.mulf %117, %117 : vector<1x256xf32>
    %121 = arith.addf %119, %120 : vector<1x256xf32>
    %c16 = arith.constant 16 : index
    %c0_49 = arith.constant 0 : index
    %122 = vector.load %arg4[%c16, %c0_49] : memref<128x256xf32, #tpu.memory_space<vmem>>, vector<64x256xf32>
    %123 = arith.mulf %4, %122 : vector<64x256xf32>
    %cst_50 = arith.constant dense<0.000000e+00> : vector<256xf32>
    %124 = vector.multi_reduction <add>, %123, %cst_50 [0] : vector<64x256xf32> to vector<256xf32>
    %125 = vector.shape_cast %124 : vector<256xf32> to vector<1x256xf32>
    %126 = arith.mulf %7, %121 : vector<1x256xf32>
    %cst_51 = arith.constant 9.99999996E-13 : f32
    %127 = vector.broadcast %cst_51 : f32 to vector<1x256xf32>
    %128 = arith.addf %126, %127 : vector<1x256xf32>
    %129 = math.rsqrt %128 : vector<1x256xf32>
    %130 = arith.mulf %125, %129 : vector<1x256xf32>
    %131 = arith.cmpf ogt, %130, %113 : vector<1x256xf32>
    %132 = arith.select %131, %130, %113 : vector<1x256xi1>, vector<1x256xf32>
    %cst_52 = arith.constant 1.600000e+01 : f32
    %133 = vector.broadcast %cst_52 : f32 to vector<1x256xf32>
    %134 = arith.select %131, %133, %115 : vector<1x256xi1>, vector<1x256xf32>
    %c16_53 = arith.constant 16 : index
    %c0_54 = arith.constant 0 : index
    %135 = vector.load %arg4[%c16_53, %c0_54] : memref<128x256xf32, #tpu.memory_space<vmem>>, vector<1x256xf32>
    %c80 = arith.constant 80 : index
    %c0_55 = arith.constant 0 : index
    %136 = vector.load %arg4[%c80, %c0_55] : memref<128x256xf32, #tpu.memory_space<vmem>>, vector<1x256xf32>
    %137 = arith.mulf %135, %135 : vector<1x256xf32>
    %138 = arith.subf %121, %137 : vector<1x256xf32>
    %139 = arith.mulf %136, %136 : vector<1x256xf32>
    %140 = arith.addf %138, %139 : vector<1x256xf32>
    %c17 = arith.constant 17 : index
    %c0_56 = arith.constant 0 : index
    %141 = vector.load %arg4[%c17, %c0_56] : memref<128x256xf32, #tpu.memory_space<vmem>>, vector<64x256xf32>
    %142 = arith.mulf %4, %141 : vector<64x256xf32>
    %cst_57 = arith.constant dense<0.000000e+00> : vector<256xf32>
    %143 = vector.multi_reduction <add>, %142, %cst_57 [0] : vector<64x256xf32> to vector<256xf32>
    %144 = vector.shape_cast %143 : vector<256xf32> to vector<1x256xf32>
    %145 = arith.mulf %7, %140 : vector<1x256xf32>
    %cst_58 = arith.constant 9.99999996E-13 : f32
    %146 = vector.broadcast %cst_58 : f32 to vector<1x256xf32>
    %147 = arith.addf %145, %146 : vector<1x256xf32>
    %148 = math.rsqrt %147 : vector<1x256xf32>
    %149 = arith.mulf %144, %148 : vector<1x256xf32>
    %150 = arith.cmpf ogt, %149, %132 : vector<1x256xf32>
    %151 = arith.select %150, %149, %132 : vector<1x256xi1>, vector<1x256xf32>
    %cst_59 = arith.constant 1.700000e+01 : f32
    %152 = vector.broadcast %cst_59 : f32 to vector<1x256xf32>
    %153 = arith.select %150, %152, %134 : vector<1x256xi1>, vector<1x256xf32>
    %c17_60 = arith.constant 17 : index
    %c0_61 = arith.constant 0 : index
    %154 = vector.load %arg4[%c17_60, %c0_61] : memref<128x256xf32, #tpu.memory_space<vmem>>, vector<1x256xf32>
    %c81 = arith.constant 81 : index
    %c0_62 = arith.constant 0 : index
    %155 = vector.load %arg4[%c81, %c0_62] : memref<128x256xf32, #tpu.memory_space<vmem>>, vector<1x256xf32>
    %156 = arith.mulf %154, %154 : vector<1x256xf32>
    %157 = arith.subf %140, %156 : vector<1x256xf32>
    %158 = arith.mulf %155, %155 : vector<1x256xf32>
    %159 = arith.addf %157, %158 : vector<1x256xf32>
    %c18 = arith.constant 18 : index
    %c0_63 = arith.constant 0 : index
    %160 = vector.load %arg4[%c18, %c0_63] : memref<128x256xf32, #tpu.memory_space<vmem>>, vector<64x256xf32>
    %161 = arith.mulf %4, %160 : vector<64x256xf32>
    %cst_64 = arith.constant dense<0.000000e+00> : vector<256xf32>
    %162 = vector.multi_reduction <add>, %161, %cst_64 [0] : vector<64x256xf32> to vector<256xf32>
    %163 = vector.shape_cast %162 : vector<256xf32> to vector<1x256xf32>
    %164 = arith.mulf %7, %159 : vector<1x256xf32>
    %cst_65 = arith.constant 9.99999996E-13 : f32
    %165 = vector.broadcast %cst_65 : f32 to vector<1x256xf32>
    %166 = arith.addf %164, %165 : vector<1x256xf32>
    %167 = math.rsqrt %166 : vector<1x256xf32>
    %168 = arith.mulf %163, %167 : vector<1x256xf32>
    %169 = arith.cmpf ogt, %168, %151 : vector<1x256xf32>
    %170 = arith.select %169, %168, %151 : vector<1x256xi1>, vector<1x256xf32>
    %cst_66 = arith.constant 1.800000e+01 : f32
    %171 = vector.broadcast %cst_66 : f32 to vector<1x256xf32>
    %172 = arith.select %169, %171, %153 : vector<1x256xi1>, vector<1x256xf32>
    %c18_67 = arith.constant 18 : index
    %c0_68 = arith.constant 0 : index
    %173 = vector.load %arg4[%c18_67, %c0_68] : memref<128x256xf32, #tpu.memory_space<vmem>>, vector<1x256xf32>
    %c82 = arith.constant 82 : index
    %c0_69 = arith.constant 0 : index
    %174 = vector.load %arg4[%c82, %c0_69] : memref<128x256xf32, #tpu.memory_space<vmem>>, vector<1x256xf32>
    %175 = arith.mulf %173, %173 : vector<1x256xf32>
    %176 = arith.subf %159, %175 : vector<1x256xf32>
    %177 = arith.mulf %174, %174 : vector<1x256xf32>
    %178 = arith.addf %176, %177 : vector<1x256xf32>
    %c19 = arith.constant 19 : index
    %c0_70 = arith.constant 0 : index
    %179 = vector.load %arg4[%c19, %c0_70] : memref<128x256xf32, #tpu.memory_space<vmem>>, vector<64x256xf32>
    %180 = arith.mulf %4, %179 : vector<64x256xf32>
    %cst_71 = arith.constant dense<0.000000e+00> : vector<256xf32>
    %181 = vector.multi_reduction <add>, %180, %cst_71 [0] : vector<64x256xf32> to vector<256xf32>
    %182 = vector.shape_cast %181 : vector<256xf32> to vector<1x256xf32>
    %183 = arith.mulf %7, %178 : vector<1x256xf32>
    %cst_72 = arith.constant 9.99999996E-13 : f32
    %184 = vector.broadcast %cst_72 : f32 to vector<1x256xf32>
    %185 = arith.addf %183, %184 : vector<1x256xf32>
    %186 = math.rsqrt %185 : vector<1x256xf32>
    %187 = arith.mulf %182, %186 : vector<1x256xf32>
    %188 = arith.cmpf ogt, %187, %170 : vector<1x256xf32>
    %189 = arith.select %188, %187, %170 : vector<1x256xi1>, vector<1x256xf32>
    %cst_73 = arith.constant 1.900000e+01 : f32
    %190 = vector.broadcast %cst_73 : f32 to vector<1x256xf32>
    %191 = arith.select %188, %190, %172 : vector<1x256xi1>, vector<1x256xf32>
    %c19_74 = arith.constant 19 : index
    %c0_75 = arith.constant 0 : index
    %192 = vector.load %arg4[%c19_74, %c0_75] : memref<128x256xf32, #tpu.memory_space<vmem>>, vector<1x256xf32>
    %c83 = arith.constant 83 : index
    %c0_76 = arith.constant 0 : index
    %193 = vector.load %arg4[%c83, %c0_76] : memref<128x256xf32, #tpu.memory_space<vmem>>, vector<1x256xf32>
    %194 = arith.mulf %192, %192 : vector<1x256xf32>
    %195 = arith.subf %178, %194 : vector<1x256xf32>
    %196 = arith.mulf %193, %193 : vector<1x256xf32>
    %197 = arith.addf %195, %196 : vector<1x256xf32>
    %c20 = arith.constant 20 : index
    %c0_77 = arith.constant 0 : index
    %198 = vector.load %arg4[%c20, %c0_77] : memref<128x256xf32, #tpu.memory_space<vmem>>, vector<64x256xf32>
    %199 = arith.mulf %4, %198 : vector<64x256xf32>
    %cst_78 = arith.constant dense<0.000000e+00> : vector<256xf32>
    %200 = vector.multi_reduction <add>, %199, %cst_78 [0] : vector<64x256xf32> to vector<256xf32>
    %201 = vector.shape_cast %200 : vector<256xf32> to vector<1x256xf32>
    %202 = arith.mulf %7, %197 : vector<1x256xf32>
    %cst_79 = arith.constant 9.99999996E-13 : f32
    %203 = vector.broadcast %cst_79 : f32 to vector<1x256xf32>
    %204 = arith.addf %202, %203 : vector<1x256xf32>
    %205 = math.rsqrt %204 : vector<1x256xf32>
    %206 = arith.mulf %201, %205 : vector<1x256xf32>
    %207 = arith.cmpf ogt, %206, %189 : vector<1x256xf32>
    %208 = arith.select %207, %206, %189 : vector<1x256xi1>, vector<1x256xf32>
    %cst_80 = arith.constant 2.000000e+01 : f32
    %209 = vector.broadcast %cst_80 : f32 to vector<1x256xf32>
    %210 = arith.select %207, %209, %191 : vector<1x256xi1>, vector<1x256xf32>
    %c20_81 = arith.constant 20 : index
    %c0_82 = arith.constant 0 : index
    %211 = vector.load %arg4[%c20_81, %c0_82] : memref<128x256xf32, #tpu.memory_space<vmem>>, vector<1x256xf32>
    %c84 = arith.constant 84 : index
    %c0_83 = arith.constant 0 : index
    %212 = vector.load %arg4[%c84, %c0_83] : memref<128x256xf32, #tpu.memory_space<vmem>>, vector<1x256xf32>
    %213 = arith.mulf %211, %211 : vector<1x256xf32>
    %214 = arith.subf %197, %213 : vector<1x256xf32>
    %215 = arith.mulf %212, %212 : vector<1x256xf32>
    %216 = arith.addf %214, %215 : vector<1x256xf32>
    %c21 = arith.constant 21 : index
    %c0_84 = arith.constant 0 : index
    %217 = vector.load %arg4[%c21, %c0_84] : memref<128x256xf32, #tpu.memory_space<vmem>>, vector<64x256xf32>
    %218 = arith.mulf %4, %217 : vector<64x256xf32>
    %cst_85 = arith.constant dense<0.000000e+00> : vector<256xf32>
    %219 = vector.multi_reduction <add>, %218, %cst_85 [0] : vector<64x256xf32> to vector<256xf32>
    %220 = vector.shape_cast %219 : vector<256xf32> to vector<1x256xf32>
    %221 = arith.mulf %7, %216 : vector<1x256xf32>
    %cst_86 = arith.constant 9.99999996E-13 : f32
    %222 = vector.broadcast %cst_86 : f32 to vector<1x256xf32>
    %223 = arith.addf %221, %222 : vector<1x256xf32>
    %224 = math.rsqrt %223 : vector<1x256xf32>
    %225 = arith.mulf %220, %224 : vector<1x256xf32>
    %226 = arith.cmpf ogt, %225, %208 : vector<1x256xf32>
    %227 = arith.select %226, %225, %208 : vector<1x256xi1>, vector<1x256xf32>
    %cst_87 = arith.constant 2.100000e+01 : f32
    %228 = vector.broadcast %cst_87 : f32 to vector<1x256xf32>
    %229 = arith.select %226, %228, %210 : vector<1x256xi1>, vector<1x256xf32>
    %c21_88 = arith.constant 21 : index
    %c0_89 = arith.constant 0 : index
    %230 = vector.load %arg4[%c21_88, %c0_89] : memref<128x256xf32, #tpu.memory_space<vmem>>, vector<1x256xf32>
    %c85 = arith.constant 85 : index
    %c0_90 = arith.constant 0 : index
    %231 = vector.load %arg4[%c85, %c0_90] : memref<128x256xf32, #tpu.memory_space<vmem>>, vector<1x256xf32>
    %232 = arith.mulf %230, %230 : vector<1x256xf32>
    %233 = arith.subf %216, %232 : vector<1x256xf32>
    %234 = arith.mulf %231, %231 : vector<1x256xf32>
    %235 = arith.addf %233, %234 : vector<1x256xf32>
    %c22 = arith.constant 22 : index
    %c0_91 = arith.constant 0 : index
    %236 = vector.load %arg4[%c22, %c0_91] : memref<128x256xf32, #tpu.memory_space<vmem>>, vector<64x256xf32>
    %237 = arith.mulf %4, %236 : vector<64x256xf32>
    %cst_92 = arith.constant dense<0.000000e+00> : vector<256xf32>
    %238 = vector.multi_reduction <add>, %237, %cst_92 [0] : vector<64x256xf32> to vector<256xf32>
    %239 = vector.shape_cast %238 : vector<256xf32> to vector<1x256xf32>
    %240 = arith.mulf %7, %235 : vector<1x256xf32>
    %cst_93 = arith.constant 9.99999996E-13 : f32
    %241 = vector.broadcast %cst_93 : f32 to vector<1x256xf32>
    %242 = arith.addf %240, %241 : vector<1x256xf32>
    %243 = math.rsqrt %242 : vector<1x256xf32>
    %244 = arith.mulf %239, %243 : vector<1x256xf32>
    %245 = arith.cmpf ogt, %244, %227 : vector<1x256xf32>
    %246 = arith.select %245, %244, %227 : vector<1x256xi1>, vector<1x256xf32>
    %cst_94 = arith.constant 2.200000e+01 : f32
    %247 = vector.broadcast %cst_94 : f32 to vector<1x256xf32>
    %248 = arith.select %245, %247, %229 : vector<1x256xi1>, vector<1x256xf32>
    %c22_95 = arith.constant 22 : index
    %c0_96 = arith.constant 0 : index
    %249 = vector.load %arg4[%c22_95, %c0_96] : memref<128x256xf32, #tpu.memory_space<vmem>>, vector<1x256xf32>
    %c86 = arith.constant 86 : index
    %c0_97 = arith.constant 0 : index
    %250 = vector.load %arg4[%c86, %c0_97] : memref<128x256xf32, #tpu.memory_space<vmem>>, vector<1x256xf32>
    %251 = arith.mulf %249, %249 : vector<1x256xf32>
    %252 = arith.subf %235, %251 : vector<1x256xf32>
    %253 = arith.mulf %250, %250 : vector<1x256xf32>
    %254 = arith.addf %252, %253 : vector<1x256xf32>
    %c23 = arith.constant 23 : index
    %c0_98 = arith.constant 0 : index
    %255 = vector.load %arg4[%c23, %c0_98] : memref<128x256xf32, #tpu.memory_space<vmem>>, vector<64x256xf32>
    %256 = arith.mulf %4, %255 : vector<64x256xf32>
    %cst_99 = arith.constant dense<0.000000e+00> : vector<256xf32>
    %257 = vector.multi_reduction <add>, %256, %cst_99 [0] : vector<64x256xf32> to vector<256xf32>
    %258 = vector.shape_cast %257 : vector<256xf32> to vector<1x256xf32>
    %259 = arith.mulf %7, %254 : vector<1x256xf32>
    %cst_100 = arith.constant 9.99999996E-13 : f32
    %260 = vector.broadcast %cst_100 : f32 to vector<1x256xf32>
    %261 = arith.addf %259, %260 : vector<1x256xf32>
    %262 = math.rsqrt %261 : vector<1x256xf32>
    %263 = arith.mulf %258, %262 : vector<1x256xf32>
    %264 = arith.cmpf ogt, %263, %246 : vector<1x256xf32>
    %265 = arith.select %264, %263, %246 : vector<1x256xi1>, vector<1x256xf32>
    %cst_101 = arith.constant 2.300000e+01 : f32
    %266 = vector.broadcast %cst_101 : f32 to vector<1x256xf32>
    %267 = arith.select %264, %266, %248 : vector<1x256xi1>, vector<1x256xf32>
    %c23_102 = arith.constant 23 : index
    %c0_103 = arith.constant 0 : index
    %268 = vector.load %arg4[%c23_102, %c0_103] : memref<128x256xf32, #tpu.memory_space<vmem>>, vector<1x256xf32>
    %c87 = arith.constant 87 : index
    %c0_104 = arith.constant 0 : index
    %269 = vector.load %arg4[%c87, %c0_104] : memref<128x256xf32, #tpu.memory_space<vmem>>, vector<1x256xf32>
    %270 = arith.mulf %268, %268 : vector<1x256xf32>
    %271 = arith.subf %254, %270 : vector<1x256xf32>
    %272 = arith.mulf %269, %269 : vector<1x256xf32>
    %273 = arith.addf %271, %272 : vector<1x256xf32>
    %c24 = arith.constant 24 : index
    %c0_105 = arith.constant 0 : index
    %274 = vector.load %arg4[%c24, %c0_105] : memref<128x256xf32, #tpu.memory_space<vmem>>, vector<64x256xf32>
    %275 = arith.mulf %4, %274 : vector<64x256xf32>
    %cst_106 = arith.constant dense<0.000000e+00> : vector<256xf32>
    %276 = vector.multi_reduction <add>, %275, %cst_106 [0] : vector<64x256xf32> to vector<256xf32>
    %277 = vector.shape_cast %276 : vector<256xf32> to vector<1x256xf32>
    %278 = arith.mulf %7, %273 : vector<1x256xf32>
    %cst_107 = arith.constant 9.99999996E-13 : f32
    %279 = vector.broadcast %cst_107 : f32 to vector<1x256xf32>
    %280 = arith.addf %278, %279 : vector<1x256xf32>
    %281 = math.rsqrt %280 : vector<1x256xf32>
    %282 = arith.mulf %277, %281 : vector<1x256xf32>
    %283 = arith.cmpf ogt, %282, %265 : vector<1x256xf32>
    %284 = arith.select %283, %282, %265 : vector<1x256xi1>, vector<1x256xf32>
    %cst_108 = arith.constant 2.400000e+01 : f32
    %285 = vector.broadcast %cst_108 : f32 to vector<1x256xf32>
    %286 = arith.select %283, %285, %267 : vector<1x256xi1>, vector<1x256xf32>
    %c24_109 = arith.constant 24 : index
    %c0_110 = arith.constant 0 : index
    %287 = vector.load %arg4[%c24_109, %c0_110] : memref<128x256xf32, #tpu.memory_space<vmem>>, vector<1x256xf32>
    %c88 = arith.constant 88 : index
    %c0_111 = arith.constant 0 : index
    %288 = vector.load %arg4[%c88, %c0_111] : memref<128x256xf32, #tpu.memory_space<vmem>>, vector<1x256xf32>
    %289 = arith.mulf %287, %287 : vector<1x256xf32>
    %290 = arith.subf %273, %289 : vector<1x256xf32>
    %291 = arith.mulf %288, %288 : vector<1x256xf32>
    %292 = arith.addf %290, %291 : vector<1x256xf32>
    %c25 = arith.constant 25 : index
    %c0_112 = arith.constant 0 : index
    %293 = vector.load %arg4[%c25, %c0_112] : memref<128x256xf32, #tpu.memory_space<vmem>>, vector<64x256xf32>
    %294 = arith.mulf %4, %293 : vector<64x256xf32>
    %cst_113 = arith.constant dense<0.000000e+00> : vector<256xf32>
    %295 = vector.multi_reduction <add>, %294, %cst_113 [0] : vector<64x256xf32> to vector<256xf32>
    %296 = vector.shape_cast %295 : vector<256xf32> to vector<1x256xf32>
    %297 = arith.mulf %7, %292 : vector<1x256xf32>
    %cst_114 = arith.constant 9.99999996E-13 : f32
    %298 = vector.broadcast %cst_114 : f32 to vector<1x256xf32>
    %299 = arith.addf %297, %298 : vector<1x256xf32>
    %300 = math.rsqrt %299 : vector<1x256xf32>
    %301 = arith.mulf %296, %300 : vector<1x256xf32>
    %302 = arith.cmpf ogt, %301, %284 : vector<1x256xf32>
    %303 = arith.select %302, %301, %284 : vector<1x256xi1>, vector<1x256xf32>
    %cst_115 = arith.constant 2.500000e+01 : f32
    %304 = vector.broadcast %cst_115 : f32 to vector<1x256xf32>
    %305 = arith.select %302, %304, %286 : vector<1x256xi1>, vector<1x256xf32>
    %c25_116 = arith.constant 25 : index
    %c0_117 = arith.constant 0 : index
    %306 = vector.load %arg4[%c25_116, %c0_117] : memref<128x256xf32, #tpu.memory_space<vmem>>, vector<1x256xf32>
    %c89 = arith.constant 89 : index
    %c0_118 = arith.constant 0 : index
    %307 = vector.load %arg4[%c89, %c0_118] : memref<128x256xf32, #tpu.memory_space<vmem>>, vector<1x256xf32>
    %308 = arith.mulf %306, %306 : vector<1x256xf32>
    %309 = arith.subf %292, %308 : vector<1x256xf32>
    %310 = arith.mulf %307, %307 : vector<1x256xf32>
    %311 = arith.addf %309, %310 : vector<1x256xf32>
    %c26 = arith.constant 26 : index
    %c0_119 = arith.constant 0 : index
    %312 = vector.load %arg4[%c26, %c0_119] : memref<128x256xf32, #tpu.memory_space<vmem>>, vector<64x256xf32>
    %313 = arith.mulf %4, %312 : vector<64x256xf32>
    %cst_120 = arith.constant dense<0.000000e+00> : vector<256xf32>
    %314 = vector.multi_reduction <add>, %313, %cst_120 [0] : vector<64x256xf32> to vector<256xf32>
    %315 = vector.shape_cast %314 : vector<256xf32> to vector<1x256xf32>
    %316 = arith.mulf %7, %311 : vector<1x256xf32>
    %cst_121 = arith.constant 9.99999996E-13 : f32
    %317 = vector.broadcast %cst_121 : f32 to vector<1x256xf32>
    %318 = arith.addf %316, %317 : vector<1x256xf32>
    %319 = math.rsqrt %318 : vector<1x256xf32>
    %320 = arith.mulf %315, %319 : vector<1x256xf32>
    %321 = arith.cmpf ogt, %320, %303 : vector<1x256xf32>
    %322 = arith.select %321, %320, %303 : vector<1x256xi1>, vector<1x256xf32>
    %cst_122 = arith.constant 2.600000e+01 : f32
    %323 = vector.broadcast %cst_122 : f32 to vector<1x256xf32>
    %324 = arith.select %321, %323, %305 : vector<1x256xi1>, vector<1x256xf32>
    %c26_123 = arith.constant 26 : index
    %c0_124 = arith.constant 0 : index
    %325 = vector.load %arg4[%c26_123, %c0_124] : memref<128x256xf32, #tpu.memory_space<vmem>>, vector<1x256xf32>
    %c90 = arith.constant 90 : index
    %c0_125 = arith.constant 0 : index
    %326 = vector.load %arg4[%c90, %c0_125] : memref<128x256xf32, #tpu.memory_space<vmem>>, vector<1x256xf32>
    %327 = arith.mulf %325, %325 : vector<1x256xf32>
    %328 = arith.subf %311, %327 : vector<1x256xf32>
    %329 = arith.mulf %326, %326 : vector<1x256xf32>
    %330 = arith.addf %328, %329 : vector<1x256xf32>
    %c27 = arith.constant 27 : index
    %c0_126 = arith.constant 0 : index
    %331 = vector.load %arg4[%c27, %c0_126] : memref<128x256xf32, #tpu.memory_space<vmem>>, vector<64x256xf32>
    %332 = arith.mulf %4, %331 : vector<64x256xf32>
    %cst_127 = arith.constant dense<0.000000e+00> : vector<256xf32>
    %333 = vector.multi_reduction <add>, %332, %cst_127 [0] : vector<64x256xf32> to vector<256xf32>
    %334 = vector.shape_cast %333 : vector<256xf32> to vector<1x256xf32>
    %335 = arith.mulf %7, %330 : vector<1x256xf32>
    %cst_128 = arith.constant 9.99999996E-13 : f32
    %336 = vector.broadcast %cst_128 : f32 to vector<1x256xf32>
    %337 = arith.addf %335, %336 : vector<1x256xf32>
    %338 = math.rsqrt %337 : vector<1x256xf32>
    %339 = arith.mulf %334, %338 : vector<1x256xf32>
    %340 = arith.cmpf ogt, %339, %322 : vector<1x256xf32>
    %341 = arith.select %340, %339, %322 : vector<1x256xi1>, vector<1x256xf32>
    %cst_129 = arith.constant 2.700000e+01 : f32
    %342 = vector.broadcast %cst_129 : f32 to vector<1x256xf32>
    %343 = arith.select %340, %342, %324 : vector<1x256xi1>, vector<1x256xf32>
    %c27_130 = arith.constant 27 : index
    %c0_131 = arith.constant 0 : index
    %344 = vector.load %arg4[%c27_130, %c0_131] : memref<128x256xf32, #tpu.memory_space<vmem>>, vector<1x256xf32>
    %c91 = arith.constant 91 : index
    %c0_132 = arith.constant 0 : index
    %345 = vector.load %arg4[%c91, %c0_132] : memref<128x256xf32, #tpu.memory_space<vmem>>, vector<1x256xf32>
    %346 = arith.mulf %344, %344 : vector<1x256xf32>
    %347 = arith.subf %330, %346 : vector<1x256xf32>
    %348 = arith.mulf %345, %345 : vector<1x256xf32>
    %349 = arith.addf %347, %348 : vector<1x256xf32>
    %c28 = arith.constant 28 : index
    %c0_133 = arith.constant 0 : index
    %350 = vector.load %arg4[%c28, %c0_133] : memref<128x256xf32, #tpu.memory_space<vmem>>, vector<64x256xf32>
    %351 = arith.mulf %4, %350 : vector<64x256xf32>
    %cst_134 = arith.constant dense<0.000000e+00> : vector<256xf32>
    %352 = vector.multi_reduction <add>, %351, %cst_134 [0] : vector<64x256xf32> to vector<256xf32>
    %353 = vector.shape_cast %352 : vector<256xf32> to vector<1x256xf32>
    %354 = arith.mulf %7, %349 : vector<1x256xf32>
    %cst_135 = arith.constant 9.99999996E-13 : f32
    %355 = vector.broadcast %cst_135 : f32 to vector<1x256xf32>
    %356 = arith.addf %354, %355 : vector<1x256xf32>
    %357 = math.rsqrt %356 : vector<1x256xf32>
    %358 = arith.mulf %353, %357 : vector<1x256xf32>
    %359 = arith.cmpf ogt, %358, %341 : vector<1x256xf32>
    %360 = arith.select %359, %358, %341 : vector<1x256xi1>, vector<1x256xf32>
    %cst_136 = arith.constant 2.800000e+01 : f32
    %361 = vector.broadcast %cst_136 : f32 to vector<1x256xf32>
    %362 = arith.select %359, %361, %343 : vector<1x256xi1>, vector<1x256xf32>
    %c28_137 = arith.constant 28 : index
    %c0_138 = arith.constant 0 : index
    %363 = vector.load %arg4[%c28_137, %c0_138] : memref<128x256xf32, #tpu.memory_space<vmem>>, vector<1x256xf32>
    %c92 = arith.constant 92 : index
    %c0_139 = arith.constant 0 : index
    %364 = vector.load %arg4[%c92, %c0_139] : memref<128x256xf32, #tpu.memory_space<vmem>>, vector<1x256xf32>
    %365 = arith.mulf %363, %363 : vector<1x256xf32>
    %366 = arith.subf %349, %365 : vector<1x256xf32>
    %367 = arith.mulf %364, %364 : vector<1x256xf32>
    %368 = arith.addf %366, %367 : vector<1x256xf32>
    %c29 = arith.constant 29 : index
    %c0_140 = arith.constant 0 : index
    %369 = vector.load %arg4[%c29, %c0_140] : memref<128x256xf32, #tpu.memory_space<vmem>>, vector<64x256xf32>
    %370 = arith.mulf %4, %369 : vector<64x256xf32>
    %cst_141 = arith.constant dense<0.000000e+00> : vector<256xf32>
    %371 = vector.multi_reduction <add>, %370, %cst_141 [0] : vector<64x256xf32> to vector<256xf32>
    %372 = vector.shape_cast %371 : vector<256xf32> to vector<1x256xf32>
    %373 = arith.mulf %7, %368 : vector<1x256xf32>
    %cst_142 = arith.constant 9.99999996E-13 : f32
    %374 = vector.broadcast %cst_142 : f32 to vector<1x256xf32>
    %375 = arith.addf %373, %374 : vector<1x256xf32>
    %376 = math.rsqrt %375 : vector<1x256xf32>
    %377 = arith.mulf %372, %376 : vector<1x256xf32>
    %378 = arith.cmpf ogt, %377, %360 : vector<1x256xf32>
    %379 = arith.select %378, %377, %360 : vector<1x256xi1>, vector<1x256xf32>
    %cst_143 = arith.constant 2.900000e+01 : f32
    %380 = vector.broadcast %cst_143 : f32 to vector<1x256xf32>
    %381 = arith.select %378, %380, %362 : vector<1x256xi1>, vector<1x256xf32>
    %c29_144 = arith.constant 29 : index
    %c0_145 = arith.constant 0 : index
    %382 = vector.load %arg4[%c29_144, %c0_145] : memref<128x256xf32, #tpu.memory_space<vmem>>, vector<1x256xf32>
    %c93 = arith.constant 93 : index
    %c0_146 = arith.constant 0 : index
    %383 = vector.load %arg4[%c93, %c0_146] : memref<128x256xf32, #tpu.memory_space<vmem>>, vector<1x256xf32>
    %384 = arith.mulf %382, %382 : vector<1x256xf32>
    %385 = arith.subf %368, %384 : vector<1x256xf32>
    %386 = arith.mulf %383, %383 : vector<1x256xf32>
    %387 = arith.addf %385, %386 : vector<1x256xf32>
    %c30 = arith.constant 30 : index
    %c0_147 = arith.constant 0 : index
    %388 = vector.load %arg4[%c30, %c0_147] : memref<128x256xf32, #tpu.memory_space<vmem>>, vector<64x256xf32>
    %389 = arith.mulf %4, %388 : vector<64x256xf32>
    %cst_148 = arith.constant dense<0.000000e+00> : vector<256xf32>
    %390 = vector.multi_reduction <add>, %389, %cst_148 [0] : vector<64x256xf32> to vector<256xf32>
    %391 = vector.shape_cast %390 : vector<256xf32> to vector<1x256xf32>
    %392 = arith.mulf %7, %387 : vector<1x256xf32>
    %cst_149 = arith.constant 9.99999996E-13 : f32
    %393 = vector.broadcast %cst_149 : f32 to vector<1x256xf32>
    %394 = arith.addf %392, %393 : vector<1x256xf32>
    %395 = math.rsqrt %394 : vector<1x256xf32>
    %396 = arith.mulf %391, %395 : vector<1x256xf32>
    %397 = arith.cmpf ogt, %396, %379 : vector<1x256xf32>
    %398 = arith.select %397, %396, %379 : vector<1x256xi1>, vector<1x256xf32>
    %cst_150 = arith.constant 3.000000e+01 : f32
    %399 = vector.broadcast %cst_150 : f32 to vector<1x256xf32>
    %400 = arith.select %397, %399, %381 : vector<1x256xi1>, vector<1x256xf32>
    %c30_151 = arith.constant 30 : index
    %c0_152 = arith.constant 0 : index
    %401 = vector.load %arg4[%c30_151, %c0_152] : memref<128x256xf32, #tpu.memory_space<vmem>>, vector<1x256xf32>
    %c94 = arith.constant 94 : index
    %c0_153 = arith.constant 0 : index
    %402 = vector.load %arg4[%c94, %c0_153] : memref<128x256xf32, #tpu.memory_space<vmem>>, vector<1x256xf32>
    %403 = arith.mulf %401, %401 : vector<1x256xf32>
    %404 = arith.subf %387, %403 : vector<1x256xf32>
    %405 = arith.mulf %402, %402 : vector<1x256xf32>
    %406 = arith.addf %404, %405 : vector<1x256xf32>
    %c31 = arith.constant 31 : index
    %c0_154 = arith.constant 0 : index
    %407 = vector.load %arg4[%c31, %c0_154] : memref<128x256xf32, #tpu.memory_space<vmem>>, vector<64x256xf32>
    %408 = arith.mulf %4, %407 : vector<64x256xf32>
    %cst_155 = arith.constant dense<0.000000e+00> : vector<256xf32>
    %409 = vector.multi_reduction <add>, %408, %cst_155 [0] : vector<64x256xf32> to vector<256xf32>
    %410 = vector.shape_cast %409 : vector<256xf32> to vector<1x256xf32>
    %411 = arith.mulf %7, %406 : vector<1x256xf32>
    %cst_156 = arith.constant 9.99999996E-13 : f32
    %412 = vector.broadcast %cst_156 : f32 to vector<1x256xf32>
    %413 = arith.addf %411, %412 : vector<1x256xf32>
    %414 = math.rsqrt %413 : vector<1x256xf32>
    %415 = arith.mulf %410, %414 : vector<1x256xf32>
    %416 = arith.cmpf ogt, %415, %398 : vector<1x256xf32>
    %417 = arith.select %416, %415, %398 : vector<1x256xi1>, vector<1x256xf32>
    %cst_157 = arith.constant 3.100000e+01 : f32
    %418 = vector.broadcast %cst_157 : f32 to vector<1x256xf32>
    %419 = arith.select %416, %418, %400 : vector<1x256xi1>, vector<1x256xf32>
    %c31_158 = arith.constant 31 : index
    %c0_159 = arith.constant 0 : index
    %420 = vector.load %arg4[%c31_158, %c0_159] : memref<128x256xf32, #tpu.memory_space<vmem>>, vector<1x256xf32>
    %c95 = arith.constant 95 : index
    %c0_160 = arith.constant 0 : index
    %421 = vector.load %arg4[%c95, %c0_160] : memref<128x256xf32, #tpu.memory_space<vmem>>, vector<1x256xf32>
    %422 = arith.mulf %420, %420 : vector<1x256xf32>
    %423 = arith.subf %406, %422 : vector<1x256xf32>
    %424 = arith.mulf %421, %421 : vector<1x256xf32>
    %425 = arith.addf %423, %424 : vector<1x256xf32>
    %c32 = arith.constant 32 : index
    %c0_161 = arith.constant 0 : index
    %426 = vector.load %arg4[%c32, %c0_161] : memref<128x256xf32, #tpu.memory_space<vmem>>, vector<64x256xf32>
    %427 = arith.mulf %4, %426 : vector<64x256xf32>
    %cst_162 = arith.constant dense<0.000000e+00> : vector<256xf32>
    %428 = vector.multi_reduction <add>, %427, %cst_162 [0] : vector<64x256xf32> to vector<256xf32>
    %429 = vector.shape_cast %428 : vector<256xf32> to vector<1x256xf32>
    %430 = arith.mulf %7, %425 : vector<1x256xf32>
    %cst_163 = arith.constant 9.99999996E-13 : f32
    %431 = vector.broadcast %cst_163 : f32 to vector<1x256xf32>
    %432 = arith.addf %430, %431 : vector<1x256xf32>
    %433 = math.rsqrt %432 : vector<1x256xf32>
    %434 = arith.mulf %429, %433 : vector<1x256xf32>
    %435 = arith.cmpf ogt, %434, %417 : vector<1x256xf32>
    %436 = arith.select %435, %434, %417 : vector<1x256xi1>, vector<1x256xf32>
    %cst_164 = arith.constant 3.200000e+01 : f32
    %437 = vector.broadcast %cst_164 : f32 to vector<1x256xf32>
    %438 = arith.select %435, %437, %419 : vector<1x256xi1>, vector<1x256xf32>
    %c32_165 = arith.constant 32 : index
    %c0_166 = arith.constant 0 : index
    %439 = vector.load %arg4[%c32_165, %c0_166] : memref<128x256xf32, #tpu.memory_space<vmem>>, vector<1x256xf32>
    %c96 = arith.constant 96 : index
    %c0_167 = arith.constant 0 : index
    %440 = vector.load %arg4[%c96, %c0_167] : memref<128x256xf32, #tpu.memory_space<vmem>>, vector<1x256xf32>
    %441 = arith.mulf %439, %439 : vector<1x256xf32>
    %442 = arith.subf %425, %441 : vector<1x256xf32>
    %443 = arith.mulf %440, %440 : vector<1x256xf32>
    %444 = arith.addf %442, %443 : vector<1x256xf32>
    %c33 = arith.constant 33 : index
    %c0_168 = arith.constant 0 : index
    %445 = vector.load %arg4[%c33, %c0_168] : memref<128x256xf32, #tpu.memory_space<vmem>>, vector<64x256xf32>
    %446 = arith.mulf %4, %445 : vector<64x256xf32>
    %cst_169 = arith.constant dense<0.000000e+00> : vector<256xf32>
    %447 = vector.multi_reduction <add>, %446, %cst_169 [0] : vector<64x256xf32> to vector<256xf32>
    %448 = vector.shape_cast %447 : vector<256xf32> to vector<1x256xf32>
    %449 = arith.mulf %7, %444 : vector<1x256xf32>
    %cst_170 = arith.constant 9.99999996E-13 : f32
    %450 = vector.broadcast %cst_170 : f32 to vector<1x256xf32>
    %451 = arith.addf %449, %450 : vector<1x256xf32>
    %452 = math.rsqrt %451 : vector<1x256xf32>
    %453 = arith.mulf %448, %452 : vector<1x256xf32>
    %454 = arith.cmpf ogt, %453, %436 : vector<1x256xf32>
    %455 = arith.select %454, %453, %436 : vector<1x256xi1>, vector<1x256xf32>
    %cst_171 = arith.constant 3.300000e+01 : f32
    %456 = vector.broadcast %cst_171 : f32 to vector<1x256xf32>
    %457 = arith.select %454, %456, %438 : vector<1x256xi1>, vector<1x256xf32>
    %c33_172 = arith.constant 33 : index
    %c0_173 = arith.constant 0 : index
    %458 = vector.load %arg4[%c33_172, %c0_173] : memref<128x256xf32, #tpu.memory_space<vmem>>, vector<1x256xf32>
    %c97 = arith.constant 97 : index
    %c0_174 = arith.constant 0 : index
    %459 = vector.load %arg4[%c97, %c0_174] : memref<128x256xf32, #tpu.memory_space<vmem>>, vector<1x256xf32>
    %460 = arith.mulf %458, %458 : vector<1x256xf32>
    %461 = arith.subf %444, %460 : vector<1x256xf32>
    %462 = arith.mulf %459, %459 : vector<1x256xf32>
    %463 = arith.addf %461, %462 : vector<1x256xf32>
    %c34 = arith.constant 34 : index
    %c0_175 = arith.constant 0 : index
    %464 = vector.load %arg4[%c34, %c0_175] : memref<128x256xf32, #tpu.memory_space<vmem>>, vector<64x256xf32>
    %465 = arith.mulf %4, %464 : vector<64x256xf32>
    %cst_176 = arith.constant dense<0.000000e+00> : vector<256xf32>
    %466 = vector.multi_reduction <add>, %465, %cst_176 [0] : vector<64x256xf32> to vector<256xf32>
    %467 = vector.shape_cast %466 : vector<256xf32> to vector<1x256xf32>
    %468 = arith.mulf %7, %463 : vector<1x256xf32>
    %cst_177 = arith.constant 9.99999996E-13 : f32
    %469 = vector.broadcast %cst_177 : f32 to vector<1x256xf32>
    %470 = arith.addf %468, %469 : vector<1x256xf32>
    %471 = math.rsqrt %470 : vector<1x256xf32>
    %472 = arith.mulf %467, %471 : vector<1x256xf32>
    %473 = arith.cmpf ogt, %472, %455 : vector<1x256xf32>
    %474 = arith.select %473, %472, %455 : vector<1x256xi1>, vector<1x256xf32>
    %cst_178 = arith.constant 3.400000e+01 : f32
    %475 = vector.broadcast %cst_178 : f32 to vector<1x256xf32>
    %476 = arith.select %473, %475, %457 : vector<1x256xi1>, vector<1x256xf32>
    %c34_179 = arith.constant 34 : index
    %c0_180 = arith.constant 0 : index
    %477 = vector.load %arg4[%c34_179, %c0_180] : memref<128x256xf32, #tpu.memory_space<vmem>>, vector<1x256xf32>
    %c98 = arith.constant 98 : index
    %c0_181 = arith.constant 0 : index
    %478 = vector.load %arg4[%c98, %c0_181] : memref<128x256xf32, #tpu.memory_space<vmem>>, vector<1x256xf32>
    %479 = arith.mulf %477, %477 : vector<1x256xf32>
    %480 = arith.subf %463, %479 : vector<1x256xf32>
    %481 = arith.mulf %478, %478 : vector<1x256xf32>
    %482 = arith.addf %480, %481 : vector<1x256xf32>
    %c35 = arith.constant 35 : index
    %c0_182 = arith.constant 0 : index
    %483 = vector.load %arg4[%c35, %c0_182] : memref<128x256xf32, #tpu.memory_space<vmem>>, vector<64x256xf32>
    %484 = arith.mulf %4, %483 : vector<64x256xf32>
    %cst_183 = arith.constant dense<0.000000e+00> : vector<256xf32>
    %485 = vector.multi_reduction <add>, %484, %cst_183 [0] : vector<64x256xf32> to vector<256xf32>
    %486 = vector.shape_cast %485 : vector<256xf32> to vector<1x256xf32>
    %487 = arith.mulf %7, %482 : vector<1x256xf32>
    %cst_184 = arith.constant 9.99999996E-13 : f32
    %488 = vector.broadcast %cst_184 : f32 to vector<1x256xf32>
    %489 = arith.addf %487, %488 : vector<1x256xf32>
    %490 = math.rsqrt %489 : vector<1x256xf32>
    %491 = arith.mulf %486, %490 : vector<1x256xf32>
    %492 = arith.cmpf ogt, %491, %474 : vector<1x256xf32>
    %493 = arith.select %492, %491, %474 : vector<1x256xi1>, vector<1x256xf32>
    %cst_185 = arith.constant 3.500000e+01 : f32
    %494 = vector.broadcast %cst_185 : f32 to vector<1x256xf32>
    %495 = arith.select %492, %494, %476 : vector<1x256xi1>, vector<1x256xf32>
    %c35_186 = arith.constant 35 : index
    %c0_187 = arith.constant 0 : index
    %496 = vector.load %arg4[%c35_186, %c0_187] : memref<128x256xf32, #tpu.memory_space<vmem>>, vector<1x256xf32>
    %c99 = arith.constant 99 : index
    %c0_188 = arith.constant 0 : index
    %497 = vector.load %arg4[%c99, %c0_188] : memref<128x256xf32, #tpu.memory_space<vmem>>, vector<1x256xf32>
    %498 = arith.mulf %496, %496 : vector<1x256xf32>
    %499 = arith.subf %482, %498 : vector<1x256xf32>
    %500 = arith.mulf %497, %497 : vector<1x256xf32>
    %501 = arith.addf %499, %500 : vector<1x256xf32>
    %c36 = arith.constant 36 : index
    %c0_189 = arith.constant 0 : index
    %502 = vector.load %arg4[%c36, %c0_189] : memref<128x256xf32, #tpu.memory_space<vmem>>, vector<64x256xf32>
    %503 = arith.mulf %4, %502 : vector<64x256xf32>
    %cst_190 = arith.constant dense<0.000000e+00> : vector<256xf32>
    %504 = vector.multi_reduction <add>, %503, %cst_190 [0] : vector<64x256xf32> to vector<256xf32>
    %505 = vector.shape_cast %504 : vector<256xf32> to vector<1x256xf32>
    %506 = arith.mulf %7, %501 : vector<1x256xf32>
    %cst_191 = arith.constant 9.99999996E-13 : f32
    %507 = vector.broadcast %cst_191 : f32 to vector<1x256xf32>
    %508 = arith.addf %506, %507 : vector<1x256xf32>
    %509 = math.rsqrt %508 : vector<1x256xf32>
    %510 = arith.mulf %505, %509 : vector<1x256xf32>
    %511 = arith.cmpf ogt, %510, %493 : vector<1x256xf32>
    %512 = arith.select %511, %510, %493 : vector<1x256xi1>, vector<1x256xf32>
    %cst_192 = arith.constant 3.600000e+01 : f32
    %513 = vector.broadcast %cst_192 : f32 to vector<1x256xf32>
    %514 = arith.select %511, %513, %495 : vector<1x256xi1>, vector<1x256xf32>
    %c36_193 = arith.constant 36 : index
    %c0_194 = arith.constant 0 : index
    %515 = vector.load %arg4[%c36_193, %c0_194] : memref<128x256xf32, #tpu.memory_space<vmem>>, vector<1x256xf32>
    %c100 = arith.constant 100 : index
    %c0_195 = arith.constant 0 : index
    %516 = vector.load %arg4[%c100, %c0_195] : memref<128x256xf32, #tpu.memory_space<vmem>>, vector<1x256xf32>
    %517 = arith.mulf %515, %515 : vector<1x256xf32>
    %518 = arith.subf %501, %517 : vector<1x256xf32>
    %519 = arith.mulf %516, %516 : vector<1x256xf32>
    %520 = arith.addf %518, %519 : vector<1x256xf32>
    %c37 = arith.constant 37 : index
    %c0_196 = arith.constant 0 : index
    %521 = vector.load %arg4[%c37, %c0_196] : memref<128x256xf32, #tpu.memory_space<vmem>>, vector<64x256xf32>
    %522 = arith.mulf %4, %521 : vector<64x256xf32>
    %cst_197 = arith.constant dense<0.000000e+00> : vector<256xf32>
    %523 = vector.multi_reduction <add>, %522, %cst_197 [0] : vector<64x256xf32> to vector<256xf32>
    %524 = vector.shape_cast %523 : vector<256xf32> to vector<1x256xf32>
    %525 = arith.mulf %7, %520 : vector<1x256xf32>
    %cst_198 = arith.constant 9.99999996E-13 : f32
    %526 = vector.broadcast %cst_198 : f32 to vector<1x256xf32>
    %527 = arith.addf %525, %526 : vector<1x256xf32>
    %528 = math.rsqrt %527 : vector<1x256xf32>
    %529 = arith.mulf %524, %528 : vector<1x256xf32>
    %530 = arith.cmpf ogt, %529, %512 : vector<1x256xf32>
    %531 = arith.select %530, %529, %512 : vector<1x256xi1>, vector<1x256xf32>
    %cst_199 = arith.constant 3.700000e+01 : f32
    %532 = vector.broadcast %cst_199 : f32 to vector<1x256xf32>
    %533 = arith.select %530, %532, %514 : vector<1x256xi1>, vector<1x256xf32>
    %c37_200 = arith.constant 37 : index
    %c0_201 = arith.constant 0 : index
    %534 = vector.load %arg4[%c37_200, %c0_201] : memref<128x256xf32, #tpu.memory_space<vmem>>, vector<1x256xf32>
    %c101 = arith.constant 101 : index
    %c0_202 = arith.constant 0 : index
    %535 = vector.load %arg4[%c101, %c0_202] : memref<128x256xf32, #tpu.memory_space<vmem>>, vector<1x256xf32>
    %536 = arith.mulf %534, %534 : vector<1x256xf32>
    %537 = arith.subf %520, %536 : vector<1x256xf32>
    %538 = arith.mulf %535, %535 : vector<1x256xf32>
    %539 = arith.addf %537, %538 : vector<1x256xf32>
    %c38 = arith.constant 38 : index
    %c0_203 = arith.constant 0 : index
    %540 = vector.load %arg4[%c38, %c0_203] : memref<128x256xf32, #tpu.memory_space<vmem>>, vector<64x256xf32>
    %541 = arith.mulf %4, %540 : vector<64x256xf32>
    %cst_204 = arith.constant dense<0.000000e+00> : vector<256xf32>
    %542 = vector.multi_reduction <add>, %541, %cst_204 [0] : vector<64x256xf32> to vector<256xf32>
    %543 = vector.shape_cast %542 : vector<256xf32> to vector<1x256xf32>
    %544 = arith.mulf %7, %539 : vector<1x256xf32>
    %cst_205 = arith.constant 9.99999996E-13 : f32
    %545 = vector.broadcast %cst_205 : f32 to vector<1x256xf32>
    %546 = arith.addf %544, %545 : vector<1x256xf32>
    %547 = math.rsqrt %546 : vector<1x256xf32>
    %548 = arith.mulf %543, %547 : vector<1x256xf32>
    %549 = arith.cmpf ogt, %548, %531 : vector<1x256xf32>
    %550 = arith.select %549, %548, %531 : vector<1x256xi1>, vector<1x256xf32>
    %cst_206 = arith.constant 3.800000e+01 : f32
    %551 = vector.broadcast %cst_206 : f32 to vector<1x256xf32>
    %552 = arith.select %549, %551, %533 : vector<1x256xi1>, vector<1x256xf32>
    %c38_207 = arith.constant 38 : index
    %c0_208 = arith.constant 0 : index
    %553 = vector.load %arg4[%c38_207, %c0_208] : memref<128x256xf32, #tpu.memory_space<vmem>>, vector<1x256xf32>
    %c102 = arith.constant 102 : index
    %c0_209 = arith.constant 0 : index
    %554 = vector.load %arg4[%c102, %c0_209] : memref<128x256xf32, #tpu.memory_space<vmem>>, vector<1x256xf32>
    %555 = arith.mulf %553, %553 : vector<1x256xf32>
    %556 = arith.subf %539, %555 : vector<1x256xf32>
    %557 = arith.mulf %554, %554 : vector<1x256xf32>
    %558 = arith.addf %556, %557 : vector<1x256xf32>
    %c39 = arith.constant 39 : index
    %c0_210 = arith.constant 0 : index
    %559 = vector.load %arg4[%c39, %c0_210] : memref<128x256xf32, #tpu.memory_space<vmem>>, vector<64x256xf32>
    %560 = arith.mulf %4, %559 : vector<64x256xf32>
    %cst_211 = arith.constant dense<0.000000e+00> : vector<256xf32>
    %561 = vector.multi_reduction <add>, %560, %cst_211 [0] : vector<64x256xf32> to vector<256xf32>
    %562 = vector.shape_cast %561 : vector<256xf32> to vector<1x256xf32>
    %563 = arith.mulf %7, %558 : vector<1x256xf32>
    %cst_212 = arith.constant 9.99999996E-13 : f32
    %564 = vector.broadcast %cst_212 : f32 to vector<1x256xf32>
    %565 = arith.addf %563, %564 : vector<1x256xf32>
    %566 = math.rsqrt %565 : vector<1x256xf32>
    %567 = arith.mulf %562, %566 : vector<1x256xf32>
    %568 = arith.cmpf ogt, %567, %550 : vector<1x256xf32>
    %569 = arith.select %568, %567, %550 : vector<1x256xi1>, vector<1x256xf32>
    %cst_213 = arith.constant 3.900000e+01 : f32
    %570 = vector.broadcast %cst_213 : f32 to vector<1x256xf32>
    %571 = arith.select %568, %570, %552 : vector<1x256xi1>, vector<1x256xf32>
    %c39_214 = arith.constant 39 : index
    %c0_215 = arith.constant 0 : index
    %572 = vector.load %arg4[%c39_214, %c0_215] : memref<128x256xf32, #tpu.memory_space<vmem>>, vector<1x256xf32>
    %c103 = arith.constant 103 : index
    %c0_216 = arith.constant 0 : index
    %573 = vector.load %arg4[%c103, %c0_216] : memref<128x256xf32, #tpu.memory_space<vmem>>, vector<1x256xf32>
    %574 = arith.mulf %572, %572 : vector<1x256xf32>
    %575 = arith.subf %558, %574 : vector<1x256xf32>
    %576 = arith.mulf %573, %573 : vector<1x256xf32>
    %577 = arith.addf %575, %576 : vector<1x256xf32>
    %c40 = arith.constant 40 : index
    %c0_217 = arith.constant 0 : index
    %578 = vector.load %arg4[%c40, %c0_217] : memref<128x256xf32, #tpu.memory_space<vmem>>, vector<64x256xf32>
    %579 = arith.mulf %4, %578 : vector<64x256xf32>
    %cst_218 = arith.constant dense<0.000000e+00> : vector<256xf32>
    %580 = vector.multi_reduction <add>, %579, %cst_218 [0] : vector<64x256xf32> to vector<256xf32>
    %581 = vector.shape_cast %580 : vector<256xf32> to vector<1x256xf32>
    %582 = arith.mulf %7, %577 : vector<1x256xf32>
    %cst_219 = arith.constant 9.99999996E-13 : f32
    %583 = vector.broadcast %cst_219 : f32 to vector<1x256xf32>
    %584 = arith.addf %582, %583 : vector<1x256xf32>
    %585 = math.rsqrt %584 : vector<1x256xf32>
    %586 = arith.mulf %581, %585 : vector<1x256xf32>
    %587 = arith.cmpf ogt, %586, %569 : vector<1x256xf32>
    %588 = arith.select %587, %586, %569 : vector<1x256xi1>, vector<1x256xf32>
    %cst_220 = arith.constant 4.000000e+01 : f32
    %589 = vector.broadcast %cst_220 : f32 to vector<1x256xf32>
    %590 = arith.select %587, %589, %571 : vector<1x256xi1>, vector<1x256xf32>
    %cst_221 = arith.constant 3.000000e-01 : f32
    %591 = vector.broadcast %cst_221 : f32 to vector<1x256xf32>
    %592 = arith.cmpf ogt, %588, %591 : vector<1x256xf32>
    %cst_222 = arith.constant 8.000000e+03 : f32
    %593 = vector.broadcast %cst_222 : f32 to vector<1x256xf32>
    %594 = arith.divf %593, %590 : vector<1x256xf32>
    %cst_223 = arith.constant 0.000000e+00 : f32
    %595 = vector.broadcast %cst_223 : f32 to vector<1x256xf32>
    %596 = arith.select %592, %594, %595 : vector<1x256xi1>, vector<1x256xf32>
    %c0_224 = arith.constant 0 : index
    %c0_225 = arith.constant 0 : index
    %c0_226 = arith.constant 0 : index
    %597 = vector.load %arg3[%c0_224, %c0_225, %c0_226] : memref<1x1x256xf32, #tpu.memory_space<vmem>>, vector<1x1x256xf32>
    %598 = vector.shape_cast %597 : vector<1x1x256xf32> to vector<1x256xf32>
    %599 = vector.shape_cast %596 : vector<1x256xf32> to vector<1x1x256xf32>
    tpu.vector_store %arg3[%c0_224, %c0_225, %c0_226], %599 {strides = array<i32>} : memref<1x1x256xf32, #tpu.memory_space<vmem>>, vector<1x1x256xf32>,
    return
  }
  func.func @transform_0(%arg0: i32, %arg1: i32) -> (i32, i32, i32) {
    %c0_i32 = arith.constant 0 : i32
    %c0_i32_0 = arith.constant 0 : i32
    return %arg0, %arg1, %c0_i32 : i32, i32, i32
  }
  func.func @transform_1(%arg0: i32, %arg1: i32) -> (i32, i32, i32) {
    %c0_i32 = arith.constant 0 : i32
    %c0_i32_0 = arith.constant 0 : i32
    return %arg0, %c0_i32, %arg1 : i32, i32, i32
  }
}

</mosaic_0001>

<llo_original>
// kernel: tpu_custom_call.1
$region0: #{tpu_custom_call.1}
  #allocation0 [shape = 'u32[]', space=smem, size = 0x4, offset = 0x4, fixed_abs, tag = 'smem constant byte address 0x4 - core index']
  #allocation1 [shape = 'u32[72,128]{1,0:T(1,128)}', space=vmem, size = 0x9000, scoped, tag = 'internal scratch']
  #allocation2 [shape = 'f32[128,256]{1,0:T(8,128)}', space=vmem, size = 0x20000, scoped, tag = 'scratch operand']
  %s0 = inlined_call_operand.hbm [shape: f32[2,256,128], index: 0, kind: input, shape index: {}]
  %s1 = inlined_call_operand.hbm [shape: f32[2,1,256], index: 1, kind: output, shape index: {}]
  %s2 = sld [smem:[#allocation0]]
  $region41: #{tpu_custom_call.1} parent=0
    _
  %s4 = ssub.s32 1, %s2
  %s5 = scalar_select 0, %s4, %s2
  $region1: #{tpu_custom_call.1} parent=0
    #allocation3 [shape = 'u8[262144]{0}', space=vmem, size = 0x40000, scoped, tag = 'input window, operand 0']
    #allocation4 [shape = 's32[2]{0}', space=sflag, size = 0x8, scoped, tag = 'scoped memory for tpu_custom_call.1']
    #allocation5 [shape = 's32[2]{0}', space=sflag, size = 0x8, scoped, tag = 'scoped memory for tpu_custom_call.1']
    #allocation6 [shape = 'u8[2048]{0}', space=vmem, size = 0x800, scoped, tag = 'output window, operand 0']
    %6 = vsyncpa [#allocation4], 0
    %s7 = scalar_lea.sflag [#allocation4], 1
    %8 = vsyncpa %s7, 0
    %9 = vsyncpa [#allocation5], 0
    %s10 = scalar_lea.sflag [#allocation5], 1
    %11 = vsyncpa %s10, 0
    loop: start=0, step=1, limit=4
    $region2: #{tpu_custom_call.1} parent=1 // loop_pre_header
      _
    $region3: #{tpu_custom_call.1} parent=1 // loop_header
      %s13 = sphi 0, %s17
      %p14 = scmp.ge.s32.totalorder %s13, 4
      %s20 = sphi 0, %s32
      %s21 = sphi 0, %s28
      %s22 = sphi 0, %s20
      %s23 = sphi 0, %s21
      %s24 = sphi 0, %s22
      %s25 = sphi 0, %s23
      %s37 = sphi 0, %s39
      %s40 = sphi 0, %s37
      %s41 = sphi 0, %s40
      %s57 = sphi 0, %s41
      %s65 = sphi 0, %s67
      %s68 = sphi 0, %s65
      %s69 = sphi 0, %s68
      %s85 = sphi 0, %s69
    $region4: #{tpu_custom_call.1} parent=1 // loop_header_branch
      %16 = sbr.rel (%p14) target = $region8
    $region5: #{tpu_custom_call.1} parent=1 // loop_body
      %s18 = ssub.s32 %s13, 1
      %s19 = ssub.s32 %s13, 2
      %s26 = sadd.s32 1, %s21
      %p27 = scmp.ge.s32.totalorder %s26, 1
      %s28 = scalar_select %p27, 0, %s26
      %s29 = sadd.s32 1, %s20
      %s30 = scalar_select %p27, %s29, %s20
      %p31 = scmp.ge.s32.totalorder %s30, 2
      %s32 = scalar_select %p31, 0, %s30
      %s33 = ssub.s32 %s20, %s32
      %s34 = ssub.s32 %s21, %s28
      %s35 = sor.u32 %s33, %s34
      %p36 = scmp.eq.s32.totalorder %s35, 0
      %s38 = sadd.s32 %s37, 1
      %s39 = scalar_select %p36, %s37, %s38
      %p42 = pneg %p36
      %p43 = scmp.eq.s32.totalorder %s13, 1
      %p44 = por %p42, %p43
      %p45 = scmp.ne.s32.totalorder %s37, %s40
      %p46 = scmp.eq.s32.totalorder %s13, 0
      %p47 = por %p45, %p46
      %p48 = scmp.ne.s32.totalorder %s37, %s40
      %p49 = scmp.eq.s32.totalorder %s18, 1
      %p50 = por %p48, %p49
      %p51 = scmp.ne.s32.totalorder %s40, %s41
      %p52 = scmp.eq.s32.totalorder %s18, 0
      %p53 = por %p51, %p52
      %p54 = scmp.ne.s32.totalorder %s40, %s41
      %p55 = scmp.eq.s32.totalorder %s19, 1
      %p56 = por %p54, %p55
      %p58 = scmp.ne.s32.totalorder %s41, %s57
      %p59 = scmp.eq.s32.totalorder %s19, 0
      %p60 = por %p58, %p59
      %s61 = ssub.s32 %s20, %s32
      %s62 = ssub.s32 %s21, %s28
      %s63 = sor.u32 %s61, %s62
      %p64 = scmp.eq.s32.totalorder %s63, 0
      %s66 = sadd.s32 %s65, 1
      %s67 = scalar_select %p64, %s65, %s66
      %p70 = pneg %p64
      %p71 = scmp.eq.s32.totalorder %s13, 1
      %p72 = por %p70, %p71
      %p73 = scmp.ne.s32.totalorder %s65, %s68
      %p74 = scmp.eq.s32.totalorder %s13, 0
      %p75 = por %p73, %p74
      %p76 = scmp.ne.s32.totalorder %s65, %s68
      %p77 = scmp.eq.s32.totalorder %s18, 1
      %p78 = por %p76, %p77
      %p79 = scmp.ne.s32.totalorder %s68, %s69
      %p80 = scmp.eq.s32.totalorder %s18, 0
      %p81 = por %p79, %p80
      %p82 = scmp.ne.s32.totalorder %s68, %s69
      %p83 = scmp.eq.s32.totalorder %s19, 1
      %p84 = por %p82, %p83
      %p86 = scmp.ne.s32.totalorder %s69, %s85
      %p87 = scmp.eq.s32.totalorder %s19, 0
      %p88 = por %p86, %p87
      %p89 = scmp.le.s32.totalorder 1, %s13
      %p90 = scmp.lt.s32.totalorder %s13, 3
      %p91 = pnand %p89, %p90
      %p92 = pneg %p91
      // Predicated region
      $region9: #{tpu_custom_call.1} parent=5 // pred_check
        _
      $region10: #{tpu_custom_call.1} parent=5 // pred_check_branch
        %94 = sbr.rel (%p91) target = $region12
      $region11: #{tpu_custom_call.1} parent=5 // pred_region
        %s95 = ssub.s32 %s13, 1
      $region12: #{tpu_custom_call.1} parent=5 // pred_fallthru
        _
      %p96 = scmp.lt.s32.totalorder %s13, 2
      // Predicated region
      $region13: #{tpu_custom_call.1} parent=5 // pred_check
        %p97 = pneg %p96
      $region14: #{tpu_custom_call.1} parent=5 // pred_check_branch
        %99 = sbr.rel (%p97) target = $region16
      $region15: #{tpu_custom_call.1} parent=5 // pred_region
        // Predicated region
        $region17: #{tpu_custom_call.1} parent=15 // pred_check
          %p100 = pneg %p47
        $region18: #{tpu_custom_call.1} parent=15 // pred_check_branch
          %102 = sbr.rel (%p100) target = $region20
        $region19: #{tpu_custom_call.1} parent=15 // pred_region
          %s103 = sand.u32 %s37, 1
          %s104 = scalar_lea.sflag [#allocation4], %s103
          %s105 = sand.u32 %s37, 1
          %s106 = smul.addr %s105, 256
          %s107 = scalar_lea.vmem [#allocation3], %s106
          %s108 = smul.u32 32, %s21
          %110 = vsyncadd %s104, 0
          %s111 = smul.addr %s20, 32
          %s112 = sadd.s32 %s108, %s111
          %s113 = smul.addr %s112, 8
          %s114 = scalar_lea.hbm %s0, %s113
          %s115 = sshll.u32 %s114, 4
          %s116 = int_to_ptr.hbm [resolvable:$true] %s115
          %s117 = sshll.u32 %s107, 4
          %s118 = int_to_ptr.vmem [resolvable:$true] %s117
          %123 = dma.hbm_to_vmem [thread:$0]  %s116, 4096, %s118, %s104, 128, 128, 8
        $region20: #{tpu_custom_call.1} parent=15 // pred_fallthru
          _
      $region16: #{tpu_custom_call.1} parent=5 // pred_fallthru
        _
      %p124 = scmp.le.s32.totalorder 1, %s13
      %p125 = scmp.lt.s32.totalorder %s13, 3
      %p126 = pnand %p124, %p125
      %p127 = pneg %p126
      // Predicated region
      $region21: #{tpu_custom_call.1} parent=5 // pred_check
        _
      $region22: #{tpu_custom_call.1} parent=5 // pred_check_branch
        %129 = sbr.rel (%p126) target = $region24
      $region23: #{tpu_custom_call.1} parent=5 // pred_region
        %s130 = ssub.s32 %s13, 1
        %s131 = sand.u32 %s40, 1
        %s132 = scalar_lea.sflag [#allocation4], %s131
        %s133 = sand.u32 %s40, 1
        %s134 = smul.addr %s133, 256
        %s135 = scalar_lea.vmem [#allocation3], %s134
        // Predicated region
        $region25: #{tpu_custom_call.1} parent=23 // pred_check
          %p136 = pneg %p53
        $region26: #{tpu_custom_call.1} parent=23 // pred_check_branch
          %138 = sbr.rel (%p136) target = $region28
        $region27: #{tpu_custom_call.1} parent=23 // pred_region
          %140 = dma.done %s132, 4096
        $region28: #{tpu_custom_call.1} parent=23 // pred_fallthru
          _
        %s141 = sand.u32 %s40, 1
        %s142 = scalar_lea.sflag [#allocation4], %s141
        %s143 = sand.u32 %s40, 1
        %s144 = smul.addr %s143, 256
        %s145 = scalar_lea.vmem [#allocation3], %s144
        %p146 = pneg %p53
        %p147 = pneg %p50
        %p148 = pneg %p81
        %p149 = pneg %p78
        %s150 = sand.u32 %s68, 1
        %s151 = scalar_lea.sflag [#allocation5], %s150
        %s152 = sand.u32 %s68, 1
        %s153 = smul.addr %s152, 2
        %s154 = scalar_lea.vmem [#allocation6], %s153
        %s155 = smul.u32 32, %s23
        %s156 = smul.u32 2, %s23
        %v157 = vld [vmem:[%s135] sm:$0xff]
        %v158 = vld [vmem:[%s135 + $0x8] sm:$0xff]
        %v159 = vld [vmem:[%s135 + $0x10] sm:$0xff]
        %v160 = vld [vmem:[%s135 + $0x18] sm:$0xff]
        %v161 = vld [vmem:[%s135 + $0x20] sm:$0xff]
        %v162 = vld [vmem:[%s135 + $0x28] sm:$0xff]
        %v163 = vld [vmem:[%s135 + $0x30] sm:$0xff]
        %v164 = vld [vmem:[%s135 + $0x38] sm:$0xff]
        %v165 = vld [vmem:[%s135 + $0x40] sm:$0xff]
        %v166 = vld [vmem:[%s135 + $0x48] sm:$0xff]
        %v167 = vld [vmem:[%s135 + $0x50] sm:$0xff]
        %v168 = vld [vmem:[%s135 + $0x58] sm:$0xff]
        %v169 = vld [vmem:[%s135 + $0x60] sm:$0xff]
        %v170 = vld [vmem:[%s135 + $0x68] sm:$0xff]
        %v171 = vld [vmem:[%s135 + $0x70] sm:$0xff]
        %v172 = vld [vmem:[%s135 + $0x78] sm:$0xff]
        %v173 = vld [vmem:[%s135 + $0x80] sm:$0xff]
        %v174 = vld [vmem:[%s135 + $0x88] sm:$0xff]
        %v175 = vld [vmem:[%s135 + $0x90] sm:$0xff]
        %v176 = vld [vmem:[%s135 + $0x98] sm:$0xff]
        %v177 = vld [vmem:[%s135 + $0xa0] sm:$0xff]
        %v178 = vld [vmem:[%s135 + $0xa8] sm:$0xff]
        %v179 = vld [vmem:[%s135 + $0xb0] sm:$0xff]
        %v180 = vld [vmem:[%s135 + $0xb8] sm:$0xff]
        %v181 = vld [vmem:[%s135 + $0xc0] sm:$0xff]
        %v182 = vld [vmem:[%s135 + $0xc8] sm:$0xff]
        %v183 = vld [vmem:[%s135 + $0xd0] sm:$0xff]
        %v184 = vld [vmem:[%s135 + $0xd8] sm:$0xff]
        %v185 = vld [vmem:[%s135 + $0xe0] sm:$0xff]
        %v186 = vld [vmem:[%s135 + $0xe8] sm:$0xff]
        %v187 = vld [vmem:[%s135 + $0xf0] sm:$0xff]
        %v188 = vld [vmem:[%s135 + $0xf8] sm:$0xff]
        %189 = vxpose.xlu0.b32.start [1/16] %v157, 128
        %190 = vxpose.xlu0.b32.cont [2/16] %v158, 128
        %191 = vxpose.xlu0.b32.cont [3/16] %v159, 128
        %192 = vxpose.xlu0.b32.cont [4/16] %v160, 128
        %193 = vxpose.xlu0.b32.cont [5/16] %v161, 128
        %194 = vxpose.xlu0.b32.cont [6/16] %v162, 128
        %195 = vxpose.xlu0.b32.cont [7/16] %v163, 128
        %196 = vxpose.xlu0.b32.cont [8/16] %v164, 128
        %197 = vxpose.xlu0.b32.cont [9/16] %v165, 128
        %198 = vxpose.xlu0.b32.cont [10/16] %v166, 128
        %199 = vxpose.xlu0.b32.cont [11/16] %v167, 128
        %200 = vxpose.xlu0.b32.cont [12/16] %v168, 128
        %201 = vxpose.xlu0.b32.cont [13/16] %v169, 128
        %202 = vxpose.xlu0.b32.cont [14/16] %v170, 128
        %203 = vxpose.xlu0.b32.cont [15/16] %v171, 128
        %204 = vxpose.xlu0.b32.end [16/16] %v172, 128
        %v205 = vpop.trf.xlu0
        %v206 = vpop.trf.xlu0
        %v207 = vpop.trf.xlu0
        %v208 = vpop.trf.xlu0
        %v209 = vpop.trf.xlu0
        %v210 = vpop.trf.xlu0
        %v211 = vpop.trf.xlu0
        %v212 = vpop.trf.xlu0
        %v213 = vpop.trf.xlu0
        %v214 = vpop.trf.xlu0
        %v215 = vpop.trf.xlu0
        %v216 = vpop.trf.xlu0
        %v217 = vpop.trf.xlu0
        %v218 = vpop.trf.xlu0
        %v219 = vpop.trf.xlu0
        %v220 = vpop.trf.xlu0
        %221 = vxpose.xlu0.b32.start [1/16] %v173, 128
        %222 = vxpose.xlu0.b32.cont [2/16] %v174, 128
        %223 = vxpose.xlu0.b32.cont [3/16] %v175, 128
        %224 = vxpose.xlu0.b32.cont [4/16] %v176, 128
        %225 = vxpose.xlu0.b32.cont [5/16] %v177, 128
        %226 = vxpose.xlu0.b32.cont [6/16] %v178, 128
        %227 = vxpose.xlu0.b32.cont [7/16] %v179, 128
        %228 = vxpose.xlu0.b32.cont [8/16] %v180, 128
        %229 = vxpose.xlu0.b32.cont [9/16] %v181, 128
        %230 = vxpose.xlu0.b32.cont [10/16] %v182, 128
        %231 = vxpose.xlu0.b32.cont [11/16] %v183, 128
        %232 = vxpose.xlu0.b32.cont [12/16] %v184, 128
        %233 = vxpose.xlu0.b32.cont [13/16] %v185, 128
        %234 = vxpose.xlu0.b32.cont [14/16] %v186, 128
        %235 = vxpose.xlu0.b32.cont [15/16] %v187, 128
        %236 = vxpose.xlu0.b32.end [16/16] %v188, 128
        %v237 = vpop.trf.xlu0
        %v238 = vpop.trf.xlu0
        %v239 = vpop.trf.xlu0
        %v240 = vpop.trf.xlu0
        %v241 = vpop.trf.xlu0
        %v242 = vpop.trf.xlu0
        %v243 = vpop.trf.xlu0
        %v244 = vpop.trf.xlu0
        %v245 = vpop.trf.xlu0
        %v246 = vpop.trf.xlu0
        %v247 = vpop.trf.xlu0
        %v248 = vpop.trf.xlu0
        %v249 = vpop.trf.xlu0
        %v250 = vpop.trf.xlu0
        %v251 = vpop.trf.xlu0
        %v252 = vpop.trf.xlu0
        %253 = vst [vmem:[#allocation2] sm:$0xff] %v205
        %254 = vst [vmem:[#allocation2 + $0x8] sm:$0xff] %v237
        %255 = vst [vmem:[#allocation2 + $0x10] sm:$0xff] %v206
        %256 = vst [vmem:[#allocation2 + $0x18] sm:$0xff] %v238
        %257 = vst [vmem:[#allocation2 + $0x20] sm:$0xff] %v207
        %258 = vst [vmem:[#allocation2 + $0x28] sm:$0xff] %v239
        %259 = vst [vmem:[#allocation2 + $0x30] sm:$0xff] %v208
        %260 = vst [vmem:[#allocation2 + $0x38] sm:$0xff] %v240
        %261 = vst [vmem:[#allocation2 + $0x40] sm:$0xff] %v209
        %262 = vst [vmem:[#allocation2 + $0x48] sm:$0xff] %v241
        %263 = vst [vmem:[#allocation2 + $0x50] sm:$0xff] %v210
        %264 = vst [vmem:[#allocation2 + $0x58] sm:$0xff] %v242
        %265 = vst [vmem:[#allocation2 + $0x60] sm:$0xff] %v211
        %266 = vst [vmem:[#allocation2 + $0x68] sm:$0xff] %v243
        %267 = vst [vmem:[#allocation2 + $0x70] sm:$0xff] %v212
        %268 = vst [vmem:[#allocation2 + $0x78] sm:$0xff] %v244
        %269 = vst [vmem:[#allocation2 + $0x80] sm:$0xff] %v213
        %270 = vst [vmem:[#allocation2 + $0x88] sm:$0xff] %v245
        %271 = vst [vmem:[#allocation2 + $0x90] sm:$0xff] %v214
        %272 = vst [vmem:[#allocation2 + $0x98] sm:$0xff] %v246
        %273 = vst [vmem:[#allocation2 + $0xa0] sm:$0xff] %v215
        %274 = vst [vmem:[#allocation2 + $0xa8] sm:$0xff] %v247
        %275 = vst [vmem:[#allocation2 + $0xb0] sm:$0xff] %v216
        %276 = vst [vmem:[#allocation2 + $0xb8] sm:$0xff] %v248
        %277 = vst [vmem:[#allocation2 + $0xc0] sm:$0xff] %v217
        %278 = vst [vmem:[#allocation2 + $0xc8] sm:$0xff] %v249
        %279 = vst [vmem:[#allocation2 + $0xd0] sm:$0xff] %v218
        %280 = vst [vmem:[#allocation2 + $0xd8] sm:$0xff] %v250
        %281 = vst [vmem:[#allocation2 + $0xe0] sm:$0xff] %v219
        %282 = vst [vmem:[#allocation2 + $0xe8] sm:$0xff] %v251
        %283 = vst [vmem:[#allocation2 + $0xf0] sm:$0xff] %v220
        %284 = vst [vmem:[#allocation2 + $0xf8] sm:$0xff] %v252
        %v285 = vld [vmem:[#allocation2] sm:$0xff]
        %v286 = vld [vmem:[#allocation2 + $0x8] sm:$0xff]
        %v287 = vld [vmem:[#allocation2 + $0x10] sm:$0xff]
        %v288 = vld [vmem:[#allocation2 + $0x18] sm:$0xff]
        %v289 = vld [vmem:[#allocation2 + $0x20] sm:$0xff]
        %v290 = vld [vmem:[#allocation2 + $0x28] sm:$0xff]
        %v291 = vld [vmem:[#allocation2 + $0x30] sm:$0xff]
        %v292 = vld [vmem:[#allocation2 + $0x38] sm:$0xff]
        %v293 = vld [vmem:[#allocation2 + $0x40] sm:$0xff]
        %v294 = vld [vmem:[#allocation2 + $0x48] sm:$0xff]
        %v295 = vld [vmem:[#allocation2 + $0x50] sm:$0xff]
        %v296 = vld [vmem:[#allocation2 + $0x58] sm:$0xff]
        %v297 = vld [vmem:[#allocation2 + $0x60] sm:$0xff]
        %v298 = vld [vmem:[#allocation2 + $0x68] sm:$0xff]
        %v299 = vld [vmem:[#allocation2 + $0x70] sm:$0xff]
        %v300 = vld [vmem:[#allocation2 + $0x78] sm:$0xff]
        %v301 = vmul.f32 %v285, %v285
        %v302 = vmul.f32 %v286, %v286
        %v303 = vmul.f32 %v287, %v287
        %v304 = vmul.f32 %v288, %v288
        %v305 = vmul.f32 %v289, %v289
        %v306 = vmul.f32 %v290, %v290
        %v307 = vmul.f32 %v291, %v291
        %v308 = vmul.f32 %v292, %v292
        %v309 = vmul.f32 %v293, %v293
        %v310 = vmul.f32 %v294, %v294
        %v311 = vmul.f32 %v295, %v295
        %v312 = vmul.f32 %v296, %v296
        %v313 = vmul.f32 %v297, %v297
        %v314 = vmul.f32 %v298, %v298
        %v315 = vmul.f32 %v299, %v299
        %v316 = vmul.f32 %v300, %v300
        %v317 = vadd.f32 %v301, %v303
        %v318 = vadd.f32 %v317, %v305
        %v319 = vadd.f32 %v318, %v307
        %v320 = vadd.f32 %v319, %v309
        %v321 = vadd.f32 %v320, %v311
        %v322 = vadd.f32 %v321, %v313
        %v323 = vadd.f32 %v322, %v315
        %v324 = vrot.slane %v323, 4
        %v325 = vadd.f32 %v323, %v324
        %v326 = vrot.slane %v325, 2
        %v327 = vadd.f32 %v325, %v326
        %v328 = vrot.slane %v327, 1
        %v329 = vadd.f32 %v327, %v328
        %v330 = vadd.f32 %v302, %v304
        %v331 = vadd.f32 %v330, %v306
        %v332 = vadd.f32 %v331, %v308
        %v333 = vadd.f32 %v332, %v310
        %v334 = vadd.f32 %v333, %v312
        %v335 = vadd.f32 %v334, %v314
        %v336 = vadd.f32 %v335, %v316
        %v337 = vrot.slane %v336, 4
        %v338 = vadd.f32 %v336, %v337
        %v339 = vrot.slane %v338, 2
        %v340 = vadd.f32 %v338, %v339
        %v341 = vrot.slane %v340, 1
        %v342 = vadd.f32 %v340, %v341
        %v343 = vld [vmem:[#allocation2 + $0x10] sm:$0xfc]
        %v344 = vld [vmem:[#allocation2 + $0x18] sm:$0xfc]
        %v345 = vld [vmem:[#allocation2 + $0x80] sm:$0xff]
        %v346 = vld [vmem:[#allocation2 + $0x88] sm:$0xff]
        %v347 = vld [vmem:[#allocation2 + $0x90] sm:$0x3]
        %v348 = vld [vmem:[#allocation2 + $0x98] sm:$0x3]
        %v349 = vmul.f32 %v343, %v343
        %v350 = vmul.f32 %v344, %v344
        %v351 = vmul.f32 %v345, %v345
        %v352 = vmul.f32 %v346, %v346
        %v353 = vmul.f32 %v347, %v347
        %v354 = vmul.f32 %v348, %v348
        %vm373 = vcmask 1045504
        %v374 = vrot.slane %v349, 2
        %v375 = vrot.slane %v305, 2
        %v376 = vsel %vm373, %v374, %v375
        %v377 = vrot.slane %v350, 2
        %v378 = vrot.slane %v306, 2
        %v379 = vsel %vm373, %v377, %v378
        %v380 = vrot.slane %v307, 2
        %v381 = vsel %vm373, %v375, %v380
        %v382 = vrot.slane %v308, 2
        %v383 = vsel %vm373, %v378, %v382
        %v384 = vrot.slane %v309, 2
        %v385 = vsel %vm373, %v380, %v384
        %v386 = vrot.slane %v310, 2
        %v387 = vsel %vm373, %v382, %v386
        %v388 = vrot.slane %v311, 2
        %v389 = vsel %vm373, %v384, %v388
        %v390 = vrot.slane %v312, 2
        %v391 = vsel %vm373, %v386, %v390
        %v392 = vrot.slane %v313, 2
        %v393 = vsel %vm373, %v388, %v392
        %v394 = vrot.slane %v314, 2
        %v395 = vsel %vm373, %v390, %v394
        %v396 = vrot.slane %v315, 2
        %v397 = vsel %vm373, %v392, %v396
        %v398 = vrot.slane %v316, 2
        %v399 = vsel %vm373, %v394, %v398
        %v400 = vrot.slane %v351, 2
        %v401 = vsel %vm373, %v396, %v400
        %v402 = vrot.slane %v352, 2
        %v403 = vsel %vm373, %v398, %v402
        %v404 = vrot.slane %v353, 2
        %v405 = vsel %vm373, %v400, %v404
        %v406 = vrot.slane %v354, 2
        %v407 = vsel %vm373, %v402, %v406
        %v424 = vadd.f32 %v376, %v381
        %v425 = vadd.f32 %v424, %v385
        %v426 = vadd.f32 %v425, %v389
        %v427 = vadd.f32 %v426, %v393
        %v428 = vadd.f32 %v427, %v397
        %v429 = vadd.f32 %v428, %v401
        %v430 = vadd.f32 %v429, %v405
        %v431 = vrot.slane %v430, 4
        %v432 = vadd.f32 %v430, %v431
        %v433 = vrot.slane %v432, 2
        %v434 = vadd.f32 %v432, %v433
        %v435 = vrot.slane %v434, 1
        %v436 = vadd.f32 %v434, %v435
        %v437 = vadd.f32 %v379, %v383
        %v438 = vadd.f32 %v437, %v387
        %v439 = vadd.f32 %v438, %v391
        %v440 = vadd.f32 %v439, %v395
        %v441 = vadd.f32 %v440, %v399
        %v442 = vadd.f32 %v441, %v403
        %v443 = vadd.f32 %v442, %v407
        %v444 = vrot.slane %v443, 4
        %v445 = vadd.f32 %v443, %v444
        %v446 = vrot.slane %v445, 2
        %v447 = vadd.f32 %v445, %v446
        %v448 = vrot.slane %v447, 1
        %v449 = vadd.f32 %v447, %v448
        %v468 = vrot.slane %v343, 2
        %v469 = vrot.slane %v289, 2
        %v470 = vsel %vm373, %v468, %v469
        %v471 = vrot.slane %v344, 2
        %v472 = vrot.slane %v290, 2
        %v473 = vsel %vm373, %v471, %v472
        %v474 = vrot.slane %v291, 2
        %v475 = vsel %vm373, %v469, %v474
        %v476 = vrot.slane %v292, 2
        %v477 = vsel %vm373, %v472, %v476
        %v478 = vrot.slane %v293, 2
        %v479 = vsel %vm373, %v474, %v478
        %v480 = vrot.slane %v294, 2
        %v481 = vsel %vm373, %v476, %v480
        %v482 = vrot.slane %v295, 2
        %v483 = vsel %vm373, %v478, %v482
        %v484 = vrot.slane %v296, 2
        %v485 = vsel %vm373, %v480, %v484
        %v486 = vrot.slane %v297, 2
        %v487 = vsel %vm373, %v482, %v486
        %v488 = vrot.slane %v298, 2
        %v489 = vsel %vm373, %v484, %v488
        %v490 = vrot.slane %v299, 2
        %v491 = vsel %vm373, %v486, %v490
        %v492 = vrot.slane %v300, 2
        %v493 = vsel %vm373, %v488, %v492
        %v494 = vrot.slane %v345, 2
        %v495 = vsel %vm373, %v490, %v494
        %v496 = vrot.slane %v346, 2
        %v497 = vsel %vm373, %v492, %v496
        %v498 = vrot.slane %v347, 2
        %v499 = vsel %vm373, %v494, %v498
        %v500 = vrot.slane %v348, 2
        %v501 = vsel %vm373, %v496, %v500
        %v518 = vmul.f32 %v285, %v470
        %v519 = vmul.f32 %v286, %v473
        %v520 = vmul.f32 %v287, %v475
        %v521 = vmul.f32 %v288, %v477
        %v522 = vmul.f32 %v289, %v479
        %v523 = vmul.f32 %v290, %v481
        %v524 = vmul.f32 %v291, %v483
        %v525 = vmul.f32 %v292, %v485
        %v526 = vmul.f32 %v293, %v487
        %v527 = vmul.f32 %v294, %v489
        %v528 = vmul.f32 %v295, %v491
        %v529 = vmul.f32 %v296, %v493
        %v530 = vmul.f32 %v297, %v495
        %v531 = vmul.f32 %v298, %v497
        %v532 = vmul.f32 %v299, %v499
        %v533 = vmul.f32 %v300, %v501
        %v534 = vadd.f32 %v518, %v520
        %v535 = vadd.f32 %v534, %v522
        %v536 = vadd.f32 %v535, %v524
        %v537 = vadd.f32 %v536, %v526
        %v538 = vadd.f32 %v537, %v528
        %v539 = vadd.f32 %v538, %v530
        %v540 = vadd.f32 %v539, %v532
        %v541 = vrot.slane %v540, 4
        %v542 = vadd.f32 %v540, %v541
        %v543 = vrot.slane %v542, 2
        %v544 = vadd.f32 %v542, %v543
        %v545 = vrot.slane %v544, 1
        %v546 = vadd.f32 %v544, %v545
        %v547 = vadd.f32 %v519, %v521
        %v548 = vadd.f32 %v547, %v523
        %v549 = vadd.f32 %v548, %v525
        %v550 = vadd.f32 %v549, %v527
        %v551 = vadd.f32 %v550, %v529
        %v552 = vadd.f32 %v551, %v531
        %v553 = vadd.f32 %v552, %v533
        %v554 = vrot.slane %v553, 4
        %v555 = vadd.f32 %v553, %v554
        %v556 = vrot.slane %v555, 2
        %v557 = vadd.f32 %v555, %v556
        %v558 = vrot.slane %v557, 1
        %v559 = vadd.f32 %v557, %v558
        %v560 = vmul.f32 %v329, %v436
        %v561 = vmul.f32 %v342, %v449
        %v562 = vadd.f32 %v560, 1e-12
        %v563 = vadd.f32 %v561, 1e-12
        %v564 = vrsqrt.pop %v562
        %v565 = vmul.f32 %v564, %v562
        %v566 = vmul.f32 %v565, %v564
        %v567 = vmul.f32 0.5, %v566
        %v568 = vsub.f32 1.5, %v567
        %v569 = vmul.f32 %v564, %v568
        %vm570 = vweird.f32 %v562
        %vm571 = vweird.f32 %v564
        %vm572 = vmor %vm570, %vm571
        %v573 = vsel %vm572, %v564, %v569
        %v574 = vrsqrt.pop %v563
        %v575 = vmul.f32 %v574, %v563
        %v576 = vmul.f32 %v575, %v574
        %v577 = vmul.f32 0.5, %v576
        %v578 = vsub.f32 1.5, %v577
        %v579 = vmul.f32 %v574, %v578
        %vm580 = vweird.f32 %v563
        %vm581 = vweird.f32 %v574
        %vm582 = vmor %vm580, %vm581
        %v583 = vsel %vm582, %v574, %v579
        %v584 = vmul.f32 %v546, %v573
        %v585 = vmul.f32 %v559, %v583
        %s586 = scalar_lea.vmem [#allocation2], 18
        %v587 = vld [vmem:[%s586] ss:$8 sm:$0x3]
        %s588 = scalar_lea.vmem [#allocation2], 146
        %v589 = vld [vmem:[%s588] ss:$8 sm:$0x3]
        %v590 = vmul.f32 %v587, %v587
        %v592 = vperm.slane %v590, 0
        %v593 = vperm.slane %v590, 1
        %v596 = vsub.f32 %v436, %v592
        %v597 = vsub.f32 %v449, %v593
        %v598 = vmul.f32 %v589, %v589
        %v600 = vperm.slane %v598, 0
        %v601 = vperm.slane %v598, 1
        %v604 = vadd.f32 %v596, %v600
        %v605 = vadd.f32 %v597, %v601
        %v606 = vld [vmem:[#allocation2 + $0x10] sm:$0xf8]
        %v607 = vld [vmem:[#allocation2 + $0x18] sm:$0xf8]
        %v608 = vld [vmem:[#allocation2 + $0x90] sm:$0x7]
        %v609 = vld [vmem:[#allocation2 + $0x98] sm:$0x7]
        %vm614 = vcmask 1044480
        %v615 = vrot.slane %v606, 3
        %v616 = vrot.slane %v289, 3
        %v617 = vsel %vm614, %v615, %v616
        %v618 = vrot.slane %v607, 3
        %v619 = vrot.slane %v290, 3
        %v620 = vsel %vm614, %v618, %v619
        %v621 = vrot.slane %v291, 3
        %v622 = vsel %vm614, %v616, %v621
        %v623 = vrot.slane %v292, 3
        %v624 = vsel %vm614, %v619, %v623
        %v625 = vrot.slane %v293, 3
        %v626 = vsel %vm614, %v621, %v625
        %v627 = vrot.slane %v294, 3
        %v628 = vsel %vm614, %v623, %v627
        %v629 = vrot.slane %v295, 3
        %v630 = vsel %vm614, %v625, %v629
        %v631 = vrot.slane %v296, 3
        %v632 = vsel %vm614, %v627, %v631
        %v633 = vrot.slane %v297, 3
        %v634 = vsel %vm614, %v629, %v633
        %v635 = vrot.slane %v298, 3
        %v636 = vsel %vm614, %v631, %v635
        %v637 = vrot.slane %v299, 3
        %v638 = vsel %vm614, %v633, %v637
        %v639 = vrot.slane %v300, 3
        %v640 = vsel %vm614, %v635, %v639
        %v641 = vrot.slane %v345, 3
        %v642 = vsel %vm614, %v637, %v641
        %v643 = vrot.slane %v346, 3
        %v644 = vsel %vm614, %v639, %v643
        %v645 = vrot.slane %v608, 3
        %v646 = vsel %vm614, %v641, %v645
        %v647 = vrot.slane %v609, 3
        %v648 = vsel %vm614, %v643, %v647
        %v665 = vmul.f32 %v285, %v617
        %v666 = vmul.f32 %v286, %v620
        %v667 = vmul.f32 %v287, %v622
        %v668 = vmul.f32 %v288, %v624
        %v669 = vmul.f32 %v289, %v626
        %v670 = vmul.f32 %v290, %v628
        %v671 = vmul.f32 %v291, %v630
        %v672 = vmul.f32 %v292, %v632
        %v673 = vmul.f32 %v293, %v634
        %v674 = vmul.f32 %v294, %v636
        %v675 = vmul.f32 %v295, %v638
        %v676 = vmul.f32 %v296, %v640
        %v677 = vmul.f32 %v297, %v642
        %v678 = vmul.f32 %v298, %v644
        %v679 = vmul.f32 %v299, %v646
        %v680 = vmul.f32 %v300, %v648
        %v681 = vadd.f32 %v665, %v667
        %v682 = vadd.f32 %v681, %v669
        %v683 = vadd.f32 %v682, %v671
        %v684 = vadd.f32 %v683, %v673
        %v685 = vadd.f32 %v684, %v675
        %v686 = vadd.f32 %v685, %v677
        %v687 = vadd.f32 %v686, %v679
        %v688 = vrot.slane %v687, 4
        %v689 = vadd.f32 %v687, %v688
        %v690 = vrot.slane %v689, 2
        %v691 = vadd.f32 %v689, %v690
        %v692 = vrot.slane %v691, 1
        %v693 = vadd.f32 %v691, %v692
        %v694 = vadd.f32 %v666, %v668
        %v695 = vadd.f32 %v694, %v670
        %v696 = vadd.f32 %v695, %v672
        %v697 = vadd.f32 %v696, %v674
        %v698 = vadd.f32 %v697, %v676
        %v699 = vadd.f32 %v698, %v678
        %v700 = vadd.f32 %v699, %v680
        %v701 = vrot.slane %v700, 4
        %v702 = vadd.f32 %v700, %v701
        %v703 = vrot.slane %v702, 2
        %v704 = vadd.f32 %v702, %v703
        %v705 = vrot.slane %v704, 1
        %v706 = vadd.f32 %v704, %v705
        %v707 = vmul.f32 %v329, %v604
        %v708 = vmul.f32 %v342, %v605
        %v709 = vadd.f32 %v707, 1e-12
        %v710 = vadd.f32 %v708, 1e-12
        %v711 = vrsqrt.pop %v709
        %v712 = vmul.f32 %v711, %v709
        %v713 = vmul.f32 %v712, %v711
        %v714 = vmul.f32 0.5, %v713
        %v715 = vsub.f32 1.5, %v714
        %v716 = vmul.f32 %v711, %v715
        %vm717 = vweird.f32 %v709
        %vm718 = vweird.f32 %v711
        %vm719 = vmor %vm717, %vm718
        %v720 = vsel %vm719, %v711, %v716
        %v721 = vrsqrt.pop %v710
        %v722 = vmul.f32 %v721, %v710
        %v723 = vmul.f32 %v722, %v721
        %v724 = vmul.f32 0.5, %v723
        %v725 = vsub.f32 1.5, %v724
        %v726 = vmul.f32 %v721, %v725
        %vm727 = vweird.f32 %v710
        %vm728 = vweird.f32 %v721
        %vm729 = vmor %vm727, %vm728
        %v730 = vsel %vm729, %v721, %v726
        %v731 = vmul.f32 %v693, %v720
        %v732 = vmul.f32 %v706, %v730
        %vm733 = vcmp.gt.f32.partialorder %v731, %v584
        %vm734 = vcmp.gt.f32.partialorder %v732, %v585
        %v735 = vsel %vm733, %v731, %v584
        %v736 = vsel %vm734, %v732, %v585
        %v737 = vsel %vm733, 11.0, 10.0
        %v738 = vsel %vm734, 11.0, 10.0
        %s739 = scalar_lea.vmem [#allocation2], 19
        %v740 = vld [vmem:[%s739] ss:$8 sm:$0x3]
        %s741 = scalar_lea.vmem [#allocation2], 147
        %v742 = vld [vmem:[%s741] ss:$8 sm:$0x3]
        %v743 = vmul.f32 %v740, %v740
        %v745 = vperm.slane %v743, 0
        %v746 = vperm.slane %v743, 1
        %v749 = vsub.f32 %v604, %v745
        %v750 = vsub.f32 %v605, %v746
        %v751 = vmul.f32 %v742, %v742
        %v753 = vperm.slane %v751, 0
        %v754 = vperm.slane %v751, 1
        %v757 = vadd.f32 %v749, %v753
        %v758 = vadd.f32 %v750, %v754
        %v759 = vld [vmem:[#allocation2 + $0x10] sm:$0xf0]
        %v760 = vld [vmem:[#allocation2 + $0x18] sm:$0xf0]
        %v761 = vld [vmem:[#allocation2 + $0x90] sm:$0xf]
        %v762 = vld [vmem:[#allocation2 + $0x98] sm:$0xf]
        %vm767 = vcmask 1043456
        %v768 = vrot.slane %v759, 4
        %v769 = vrot.slane %v289, 4
        %v770 = vsel %vm767, %v768, %v769
        %v771 = vrot.slane %v760, 4
        %v772 = vrot.slane %v290, 4
        %v773 = vsel %vm767, %v771, %v772
        %v774 = vrot.slane %v291, 4
        %v775 = vsel %vm767, %v769, %v774
        %v776 = vrot.slane %v292, 4
        %v777 = vsel %vm767, %v772, %v776
        %v778 = vrot.slane %v293, 4
        %v779 = vsel %vm767, %v774, %v778
        %v780 = vrot.slane %v294, 4
        %v781 = vsel %vm767, %v776, %v780
        %v782 = vrot.slane %v295, 4
        %v783 = vsel %vm767, %v778, %v782
        %v784 = vrot.slane %v296, 4
        %v785 = vsel %vm767, %v780, %v784
        %v786 = vrot.slane %v297, 4
        %v787 = vsel %vm767, %v782, %v786
        %v788 = vrot.slane %v298, 4
        %v789 = vsel %vm767, %v784, %v788
        %v790 = vrot.slane %v299, 4
        %v791 = vsel %vm767, %v786, %v790
        %v792 = vrot.slane %v300, 4
        %v793 = vsel %vm767, %v788, %v792
        %v794 = vrot.slane %v345, 4
        %v795 = vsel %vm767, %v790, %v794
        %v796 = vrot.slane %v346, 4
        %v797 = vsel %vm767, %v792, %v796
        %v798 = vrot.slane %v761, 4
        %v799 = vsel %vm767, %v794, %v798
        %v800 = vrot.slane %v762, 4
        %v801 = vsel %vm767, %v796, %v800
        %v818 = vmul.f32 %v285, %v770
        %v819 = vmul.f32 %v286, %v773
        %v820 = vmul.f32 %v287, %v775
        %v821 = vmul.f32 %v288, %v777
        %v822 = vmul.f32 %v289, %v779
        %v823 = vmul.f32 %v290, %v781
        %v824 = vmul.f32 %v291, %v783
        %v825 = vmul.f32 %v292, %v785
        %v826 = vmul.f32 %v293, %v787
        %v827 = vmul.f32 %v294, %v789
        %v828 = vmul.f32 %v295, %v791
        %v829 = vmul.f32 %v296, %v793
        %v830 = vmul.f32 %v297, %v795
        %v831 = vmul.f32 %v298, %v797
        %v832 = vmul.f32 %v299, %v799
        %v833 = vmul.f32 %v300, %v801
        %v834 = vadd.f32 %v818, %v820
        %v835 = vadd.f32 %v834, %v822
        %v836 = vadd.f32 %v835, %v824
        %v837 = vadd.f32 %v836, %v826
        %v838 = vadd.f32 %v837, %v828
        %v839 = vadd.f32 %v838, %v830
        %v840 = vadd.f32 %v839, %v832
        %v841 = vrot.slane %v840, 4
        %v842 = vadd.f32 %v840, %v841
        %v843 = vrot.slane %v842, 2
        %v844 = vadd.f32 %v842, %v843
        %v845 = vrot.slane %v844, 1
        %v846 = vadd.f32 %v844, %v845
        %v847 = vadd.f32 %v819, %v821
        %v848 = vadd.f32 %v847, %v823
        %v849 = vadd.f32 %v848, %v825
        %v850 = vadd.f32 %v849, %v827
        %v851 = vadd.f32 %v850, %v829
        %v852 = vadd.f32 %v851, %v831
        %v853 = vadd.f32 %v852, %v833
        %v854 = vrot.slane %v853, 4
        %v855 = vadd.f32 %v853, %v854
        %v856 = vrot.slane %v855, 2
        %v857 = vadd.f32 %v855, %v856
        %v858 = vrot.slane %v857, 1
        %v859 = vadd.f32 %v857, %v858
        %v860 = vmul.f32 %v329, %v757
        %v861 = vmul.f32 %v342, %v758
        %v862 = vadd.f32 %v860, 1e-12
        %v863 = vadd.f32 %v861, 1e-12
        %v864 = vrsqrt.pop %v862
        %v865 = vmul.f32 %v864, %v862
        %v866 = vmul.f32 %v865, %v864
        %v867 = vmul.f32 0.5, %v866
        %v868 = vsub.f32 1.5, %v867
        %v869 = vmul.f32 %v864, %v868
        %vm870 = vweird.f32 %v862
        %vm871 = vweird.f32 %v864
        %vm872 = vmor %vm870, %vm871
        %v873 = vsel %vm872, %v864, %v869
        %v874 = vrsqrt.pop %v863
        %v875 = vmul.f32 %v874, %v863
        %v876 = vmul.f32 %v875, %v874
        %v877 = vmul.f32 0.5, %v876
        %v878 = vsub.f32 1.5, %v877
        %v879 = vmul.f32 %v874, %v878
        %vm880 = vweird.f32 %v863
        %vm881 = vweird.f32 %v874
        %vm882 = vmor %vm880, %vm881
        %v883 = vsel %vm882, %v874, %v879
        %v884 = vmul.f32 %v846, %v873
        %v885 = vmul.f32 %v859, %v883
        %vm886 = vcmp.gt.f32.partialorder %v884, %v735
        %vm887 = vcmp.gt.f32.partialorder %v885, %v736
        %v888 = vsel %vm886, %v884, %v735
        %v889 = vsel %vm887, %v885, %v736
        %v890 = vsel %vm886, 12.0, %v737
        %v891 = vsel %vm887, 12.0, %v738
        %s892 = scalar_lea.vmem [#allocation2], 20
        %v893 = vld [vmem:[%s892] ss:$8 sm:$0x3]
        %s894 = scalar_lea.vmem [#allocation2], 148
        %v895 = vld [vmem:[%s894] ss:$8 sm:$0x3]
        %v896 = vmul.f32 %v893, %v893
        %v898 = vperm.slane %v896, 0
        %v899 = vperm.slane %v896, 1
        %v902 = vsub.f32 %v757, %v898
        %v903 = vsub.f32 %v758, %v899
        %v904 = vmul.f32 %v895, %v895
        %v906 = vperm.slane %v904, 0
        %v907 = vperm.slane %v904, 1
        %v910 = vadd.f32 %v902, %v906
        %v911 = vadd.f32 %v903, %v907
        %v912 = vld [vmem:[#allocation2 + $0x10] sm:$0xe0]
        %v913 = vld [vmem:[#allocation2 + $0x18] sm:$0xe0]
        %v914 = vld [vmem:[#allocation2 + $0x90] sm:$0x1f]
        %v915 = vld [vmem:[#allocation2 + $0x98] sm:$0x1f]
        %vm920 = vcmask 1042432
        %v921 = vrot.slane %v912, 5
        %v922 = vrot.slane %v289, 5
        %v923 = vsel %vm920, %v921, %v922
        %v924 = vrot.slane %v913, 5
        %v925 = vrot.slane %v290, 5
        %v926 = vsel %vm920, %v924, %v925
        %v927 = vrot.slane %v291, 5
        %v928 = vsel %vm920, %v922, %v927
        %v929 = vrot.slane %v292, 5
        %v930 = vsel %vm920, %v925, %v929
        %v931 = vrot.slane %v293, 5
        %v932 = vsel %vm920, %v927, %v931
        %v933 = vrot.slane %v294, 5
        %v934 = vsel %vm920, %v929, %v933
        %v935 = vrot.slane %v295, 5
        %v936 = vsel %vm920, %v931, %v935
        %v937 = vrot.slane %v296, 5
        %v938 = vsel %vm920, %v933, %v937
        %v939 = vrot.slane %v297, 5
        %v940 = vsel %vm920, %v935, %v939
        %v941 = vrot.slane %v298, 5
        %v942 = vsel %vm920, %v937, %v941
        %v943 = vrot.slane %v299, 5
        %v944 = vsel %vm920, %v939, %v943
        %v945 = vrot.slane %v300, 5
        %v946 = vsel %vm920, %v941, %v945
        %v947 = vrot.slane %v345, 5
        %v948 = vsel %vm920, %v943, %v947
        %v949 = vrot.slane %v346, 5
        %v950 = vsel %vm920, %v945, %v949
        %v951 = vrot.slane %v914, 5
        %v952 = vsel %vm920, %v947, %v951
        %v953 = vrot.slane %v915, 5
        %v954 = vsel %vm920, %v949, %v953
        %v971 = vmul.f32 %v285, %v923
        %v972 = vmul.f32 %v286, %v926
        %v973 = vmul.f32 %v287, %v928
        %v974 = vmul.f32 %v288, %v930
        %v975 = vmul.f32 %v289, %v932
        %v976 = vmul.f32 %v290, %v934
        %v977 = vmul.f32 %v291, %v936
        %v978 = vmul.f32 %v292, %v938
        %v979 = vmul.f32 %v293, %v940
        %v980 = vmul.f32 %v294, %v942
        %v981 = vmul.f32 %v295, %v944
        %v982 = vmul.f32 %v296, %v946
        %v983 = vmul.f32 %v297, %v948
        %v984 = vmul.f32 %v298, %v950
        %v985 = vmul.f32 %v299, %v952
        %v986 = vmul.f32 %v300, %v954
        %v987 = vadd.f32 %v971, %v973
        %v988 = vadd.f32 %v987, %v975
        %v989 = vadd.f32 %v988, %v977
        %v990 = vadd.f32 %v989, %v979
        %v991 = vadd.f32 %v990, %v981
        %v992 = vadd.f32 %v991, %v983
        %v993 = vadd.f32 %v992, %v985
        %v994 = vrot.slane %v993, 4
        %v995 = vadd.f32 %v993, %v994
        %v996 = vrot.slane %v995, 2
        %v997 = vadd.f32 %v995, %v996
        %v998 = vrot.slane %v997, 1
        %v999 = vadd.f32 %v997, %v998
        %v1000 = vadd.f32 %v972, %v974
        %v1001 = vadd.f32 %v1000, %v976
        %v1002 = vadd.f32 %v1001, %v978
        %v1003 = vadd.f32 %v1002, %v980
        %v1004 = vadd.f32 %v1003, %v982
        %v1005 = vadd.f32 %v1004, %v984
        %v1006 = vadd.f32 %v1005, %v986
        %v1007 = vrot.slane %v1006, 4
        %v1008 = vadd.f32 %v1006, %v1007
        %v1009 = vrot.slane %v1008, 2
        %v1010 = vadd.f32 %v1008, %v1009
        %v1011 = vrot.slane %v1010, 1
        %v1012 = vadd.f32 %v1010, %v1011
        %v1013 = vmul.f32 %v329, %v910
        %v1014 = vmul.f32 %v342, %v911
        %v1015 = vadd.f32 %v1013, 1e-12
        %v1016 = vadd.f32 %v1014, 1e-12
        %v1017 = vrsqrt.pop %v1015
        %v1018 = vmul.f32 %v1017, %v1015
        %v1019 = vmul.f32 %v1018, %v1017
        %v1020 = vmul.f32 0.5, %v1019
        %v1021 = vsub.f32 1.5, %v1020
        %v1022 = vmul.f32 %v1017, %v1021
        %vm1023 = vweird.f32 %v1015
        %vm1024 = vweird.f32 %v1017
        %vm1025 = vmor %vm1023, %vm1024
        %v1026 = vsel %vm1025, %v1017, %v1022
        %v1027 = vrsqrt.pop %v1016
        %v1028 = vmul.f32 %v1027, %v1016
        %v1029 = vmul.f32 %v1028, %v1027
        %v1030 = vmul.f32 0.5, %v1029
        %v1031 = vsub.f32 1.5, %v1030
        %v1032 = vmul.f32 %v1027, %v1031
        %vm1033 = vweird.f32 %v1016
        %vm1034 = vweird.f32 %v1027
        %vm1035 = vmor %vm1033, %vm1034
        %v1036 = vsel %vm1035, %v1027, %v1032
        %v1037 = vmul.f32 %v999, %v1026
        %v1038 = vmul.f32 %v1012, %v1036
        %vm1039 = vcmp.gt.f32.partialorder %v1037, %v888
        %vm1040 = vcmp.gt.f32.partialorder %v1038, %v889
        %v1041 = vsel %vm1039, %v1037, %v888
        %v1042 = vsel %vm1040, %v1038, %v889
        %v1043 = vsel %vm1039, 13.0, %v890
        %v1044 = vsel %vm1040, 13.0, %v891
        %s1045 = scalar_lea.vmem [#allocation2], 21
        %v1046 = vld [vmem:[%s1045] ss:$8 sm:$0x3]
        %s1047 = scalar_lea.vmem [#allocation2], 149
        %v1048 = vld [vmem:[%s1047] ss:$8 sm:$0x3]
        %v1049 = vmul.f32 %v1046, %v1046
        %v1051 = vperm.slane %v1049, 0
        %v1052 = vperm.slane %v1049, 1
        %v1055 = vsub.f32 %v910, %v1051
        %v1056 = vsub.f32 %v911, %v1052
        %v1057 = vmul.f32 %v1048, %v1048
        %v1059 = vperm.slane %v1057, 0
        %v1060 = vperm.slane %v1057, 1
        %v1063 = vadd.f32 %v1055, %v1059
        %v1064 = vadd.f32 %v1056, %v1060
        %v1065 = vld [vmem:[#allocation2 + $0x10] sm:$0xc0]
        %v1066 = vld [vmem:[#allocation2 + $0x18] sm:$0xc0]
        %v1067 = vld [vmem:[#allocation2 + $0x90] sm:$0x3f]
        %v1068 = vld [vmem:[#allocation2 + $0x98] sm:$0x3f]
        %vm1073 = vcmask 1041408
        %v1074 = vrot.slane %v1065, 6
        %v1075 = vrot.slane %v289, 6
        %v1076 = vsel %vm1073, %v1074, %v1075
        %v1077 = vrot.slane %v1066, 6
        %v1078 = vrot.slane %v290, 6
        %v1079 = vsel %vm1073, %v1077, %v1078
        %v1080 = vrot.slane %v291, 6
        %v1081 = vsel %vm1073, %v1075, %v1080
        %v1082 = vrot.slane %v292, 6
        %v1083 = vsel %vm1073, %v1078, %v1082
        %v1084 = vrot.slane %v293, 6
        %v1085 = vsel %vm1073, %v1080, %v1084
        %v1086 = vrot.slane %v294, 6
        %v1087 = vsel %vm1073, %v1082, %v1086
        %v1088 = vrot.slane %v295, 6
        %v1089 = vsel %vm1073, %v1084, %v1088
        %v1090 = vrot.slane %v296, 6
        %v1091 = vsel %vm1073, %v1086, %v1090
        %v1092 = vrot.slane %v297, 6
        %v1093 = vsel %vm1073, %v1088, %v1092
        %v1094 = vrot.slane %v298, 6
        %v1095 = vsel %vm1073, %v1090, %v1094
        %v1096 = vrot.slane %v299, 6
        %v1097 = vsel %vm1073, %v1092, %v1096
        %v1098 = vrot.slane %v300, 6
        %v1099 = vsel %vm1073, %v1094, %v1098
        %v1100 = vrot.slane %v345, 6
        %v1101 = vsel %vm1073, %v1096, %v1100
        %v1102 = vrot.slane %v346, 6
        %v1103 = vsel %vm1073, %v1098, %v1102
        %v1104 = vrot.slane %v1067, 6
        %v1105 = vsel %vm1073, %v1100, %v1104
        %v1106 = vrot.slane %v1068, 6
        %v1107 = vsel %vm1073, %v1102, %v1106
        %v1124 = vmul.f32 %v285, %v1076
        %v1125 = vmul.f32 %v286, %v1079
        %v1126 = vmul.f32 %v287, %v1081
        %v1127 = vmul.f32 %v288, %v1083
        %v1128 = vmul.f32 %v289, %v1085
        %v1129 = vmul.f32 %v290, %v1087
        %v1130 = vmul.f32 %v291, %v1089
        %v1131 = vmul.f32 %v292, %v1091
        %v1132 = vmul.f32 %v293, %v1093
        %v1133 = vmul.f32 %v294, %v1095
        %v1134 = vmul.f32 %v295, %v1097
        %v1135 = vmul.f32 %v296, %v1099
        %v1136 = vmul.f32 %v297, %v1101
        %v1137 = vmul.f32 %v298, %v1103
        %v1138 = vmul.f32 %v299, %v1105
        %v1139 = vmul.f32 %v300, %v1107
        %v1140 = vadd.f32 %v1124, %v1126
        %v1141 = vadd.f32 %v1140, %v1128
        %v1142 = vadd.f32 %v1141, %v1130
        %v1143 = vadd.f32 %v1142, %v1132
        %v1144 = vadd.f32 %v1143, %v1134
        %v1145 = vadd.f32 %v1144, %v1136
        %v1146 = vadd.f32 %v1145, %v1138
        %v1147 = vrot.slane %v1146, 4
        %v1148 = vadd.f32 %v1146, %v1147
        %v1149 = vrot.slane %v1148, 2
        %v1150 = vadd.f32 %v1148, %v1149
        %v1151 = vrot.slane %v1150, 1
        %v1152 = vadd.f32 %v1150, %v1151
        %v1153 = vadd.f32 %v1125, %v1127
        %v1154 = vadd.f32 %v1153, %v1129
        %v1155 = vadd.f32 %v1154, %v1131
        %v1156 = vadd.f32 %v1155, %v1133
        %v1157 = vadd.f32 %v1156, %v1135
        %v1158 = vadd.f32 %v1157, %v1137
        %v1159 = vadd.f32 %v1158, %v1139
        %v1160 = vrot.slane %v1159, 4
        %v1161 = vadd.f32 %v1159, %v1160
        %v1162 = vrot.slane %v1161, 2
        %v1163 = vadd.f32 %v1161, %v1162
        %v1164 = vrot.slane %v1163, 1
        %v1165 = vadd.f32 %v1163, %v1164
        %v1166 = vmul.f32 %v329, %v1063
        %v1167 = vmul.f32 %v342, %v1064
        %v1168 = vadd.f32 %v1166, 1e-12
        %v1169 = vadd.f32 %v1167, 1e-12
        %v1170 = vrsqrt.pop %v1168
        %v1171 = vmul.f32 %v1170, %v1168
        %v1172 = vmul.f32 %v1171, %v1170
        %v1173 = vmul.f32 0.5, %v1172
        %v1174 = vsub.f32 1.5, %v1173
        %v1175 = vmul.f32 %v1170, %v1174
        %vm1176 = vweird.f32 %v1168
        %vm1177 = vweird.f32 %v1170
        %vm1178 = vmor %vm1176, %vm1177
        %v1179 = vsel %vm1178, %v1170, %v1175
        %v1180 = vrsqrt.pop %v1169
        %v1181 = vmul.f32 %v1180, %v1169
        %v1182 = vmul.f32 %v1181, %v1180
        %v1183 = vmul.f32 0.5, %v1182
        %v1184 = vsub.f32 1.5, %v1183
        %v1185 = vmul.f32 %v1180, %v1184
        %vm1186 = vweird.f32 %v1169
        %vm1187 = vweird.f32 %v1180
        %vm1188 = vmor %vm1186, %vm1187
        %v1189 = vsel %vm1188, %v1180, %v1185
        %v1190 = vmul.f32 %v1152, %v1179
        %v1191 = vmul.f32 %v1165, %v1189
        %vm1192 = vcmp.gt.f32.partialorder %v1190, %v1041
        %vm1193 = vcmp.gt.f32.partialorder %v1191, %v1042
        %v1194 = vsel %vm1192, %v1190, %v1041
        %v1195 = vsel %vm1193, %v1191, %v1042
        %v1196 = vsel %vm1192, 14.0, %v1043
        %v1197 = vsel %vm1193, 14.0, %v1044
        %s1198 = scalar_lea.vmem [#allocation2], 22
        %v1199 = vld [vmem:[%s1198] ss:$8 sm:$0x3]
        %s1200 = scalar_lea.vmem [#allocation2], 150
        %v1201 = vld [vmem:[%s1200] ss:$8 sm:$0x3]
        %v1202 = vmul.f32 %v1199, %v1199
        %v1204 = vperm.slane %v1202, 0
        %v1205 = vperm.slane %v1202, 1
        %v1208 = vsub.f32 %v1063, %v1204
        %v1209 = vsub.f32 %v1064, %v1205
        %v1210 = vmul.f32 %v1201, %v1201
        %v1212 = vperm.slane %v1210, 0
        %v1213 = vperm.slane %v1210, 1
        %v1216 = vadd.f32 %v1208, %v1212
        %v1217 = vadd.f32 %v1209, %v1213
        %v1218 = vld [vmem:[#allocation2 + $0x10] sm:$0x80]
        %v1219 = vld [vmem:[#allocation2 + $0x18] sm:$0x80]
        %v1220 = vld [vmem:[#allocation2 + $0x90] sm:$0x7f]
        %v1221 = vld [vmem:[#allocation2 + $0x98] sm:$0x7f]
        %vm1226 = vcmask 1040384
        %v1227 = vrot.slane %v1218, 7
        %v1228 = vrot.slane %v289, 7
        %v1229 = vsel %vm1226, %v1227, %v1228
        %v1230 = vrot.slane %v1219, 7
        %v1231 = vrot.slane %v290, 7
        %v1232 = vsel %vm1226, %v1230, %v1231
        %v1233 = vrot.slane %v291, 7
        %v1234 = vsel %vm1226, %v1228, %v1233
        %v1235 = vrot.slane %v292, 7
        %v1236 = vsel %vm1226, %v1231, %v1235
        %v1237 = vrot.slane %v293, 7
        %v1238 = vsel %vm1226, %v1233, %v1237
        %v1239 = vrot.slane %v294, 7
        %v1240 = vsel %vm1226, %v1235, %v1239
        %v1241 = vrot.slane %v295, 7
        %v1242 = vsel %vm1226, %v1237, %v1241
        %v1243 = vrot.slane %v296, 7
        %v1244 = vsel %vm1226, %v1239, %v1243
        %v1245 = vrot.slane %v297, 7
        %v1246 = vsel %vm1226, %v1241, %v1245
        %v1247 = vrot.slane %v298, 7
        %v1248 = vsel %vm1226, %v1243, %v1247
        %v1249 = vrot.slane %v299, 7
        %v1250 = vsel %vm1226, %v1245, %v1249
        %v1251 = vrot.slane %v300, 7
        %v1252 = vsel %vm1226, %v1247, %v1251
        %v1253 = vrot.slane %v345, 7
        %v1254 = vsel %vm1226, %v1249, %v1253
        %v1255 = vrot.slane %v346, 7
        %v1256 = vsel %vm1226, %v1251, %v1255
        %v1257 = vrot.slane %v1220, 7
        %v1258 = vsel %vm1226, %v1253, %v1257
        %v1259 = vrot.slane %v1221, 7
        %v1260 = vsel %vm1226, %v1255, %v1259
        %v1277 = vmul.f32 %v285, %v1229
        %v1278 = vmul.f32 %v286, %v1232
        %v1279 = vmul.f32 %v287, %v1234
        %v1280 = vmul.f32 %v288, %v1236
        %v1281 = vmul.f32 %v289, %v1238
        %v1282 = vmul.f32 %v290, %v1240
        %v1283 = vmul.f32 %v291, %v1242
        %v1284 = vmul.f32 %v292, %v1244
        %v1285 = vmul.f32 %v293, %v1246
        %v1286 = vmul.f32 %v294, %v1248
        %v1287 = vmul.f32 %v295, %v1250
        %v1288 = vmul.f32 %v296, %v1252
        %v1289 = vmul.f32 %v297, %v1254
        %v1290 = vmul.f32 %v298, %v1256
        %v1291 = vmul.f32 %v299, %v1258
        %v1292 = vmul.f32 %v300, %v1260
        %v1293 = vadd.f32 %v1277, %v1279
        %v1294 = vadd.f32 %v1293, %v1281
        %v1295 = vadd.f32 %v1294, %v1283
        %v1296 = vadd.f32 %v1295, %v1285
        %v1297 = vadd.f32 %v1296, %v1287
        %v1298 = vadd.f32 %v1297, %v1289
        %v1299 = vadd.f32 %v1298, %v1291
        %v1300 = vrot.slane %v1299, 4
        %v1301 = vadd.f32 %v1299, %v1300
        %v1302 = vrot.slane %v1301, 2
        %v1303 = vadd.f32 %v1301, %v1302
        %v1304 = vrot.slane %v1303, 1
        %v1305 = vadd.f32 %v1303, %v1304
        %v1306 = vadd.f32 %v1278, %v1280
        %v1307 = vadd.f32 %v1306, %v1282
        %v1308 = vadd.f32 %v1307, %v1284
        %v1309 = vadd.f32 %v1308, %v1286
        %v1310 = vadd.f32 %v1309, %v1288
        %v1311 = vadd.f32 %v1310, %v1290
        %v1312 = vadd.f32 %v1311, %v1292
        %v1313 = vrot.slane %v1312, 4
        %v1314 = vadd.f32 %v1312, %v1313
        %v1315 = vrot.slane %v1314, 2
        %v1316 = vadd.f32 %v1314, %v1315
        %v1317 = vrot.slane %v1316, 1
        %v1318 = vadd.f32 %v1316, %v1317
        %v1319 = vmul.f32 %v329, %v1216
        %v1320 = vmul.f32 %v342, %v1217
        %v1321 = vadd.f32 %v1319, 1e-12
        %v1322 = vadd.f32 %v1320, 1e-12
        %v1323 = vrsqrt.pop %v1321
        %v1324 = vmul.f32 %v1323, %v1321
        %v1325 = vmul.f32 %v1324, %v1323
        %v1326 = vmul.f32 0.5, %v1325
        %v1327 = vsub.f32 1.5, %v1326
        %v1328 = vmul.f32 %v1323, %v1327
        %vm1329 = vweird.f32 %v1321
        %vm1330 = vweird.f32 %v1323
        %vm1331 = vmor %vm1329, %vm1330
        %v1332 = vsel %vm1331, %v1323, %v1328
        %v1333 = vrsqrt.pop %v1322
        %v1334 = vmul.f32 %v1333, %v1322
        %v1335 = vmul.f32 %v1334, %v1333
        %v1336 = vmul.f32 0.5, %v1335
        %v1337 = vsub.f32 1.5, %v1336
        %v1338 = vmul.f32 %v1333, %v1337
        %vm1339 = vweird.f32 %v1322
        %vm1340 = vweird.f32 %v1333
        %vm1341 = vmor %vm1339, %vm1340
        %v1342 = vsel %vm1341, %v1333, %v1338
        %v1343 = vmul.f32 %v1305, %v1332
        %v1344 = vmul.f32 %v1318, %v1342
        %vm1345 = vcmp.gt.f32.partialorder %v1343, %v1194
        %vm1346 = vcmp.gt.f32.partialorder %v1344, %v1195
        %v1347 = vsel %vm1345, %v1343, %v1194
        %v1348 = vsel %vm1346, %v1344, %v1195
        %v1349 = vsel %vm1345, 15.0, %v1196
        %v1350 = vsel %vm1346, 15.0, %v1197
        %s1351 = scalar_lea.vmem [#allocation2], 23
        %v1352 = vld [vmem:[%s1351] ss:$8 sm:$0x3]
        %s1353 = scalar_lea.vmem [#allocation2], 151
        %v1354 = vld [vmem:[%s1353] ss:$8 sm:$0x3]
        %v1355 = vmul.f32 %v1352, %v1352
        %v1357 = vperm.slane %v1355, 0
        %v1358 = vperm.slane %v1355, 1
        %v1361 = vsub.f32 %v1216, %v1357
        %v1362 = vsub.f32 %v1217, %v1358
        %v1363 = vmul.f32 %v1354, %v1354
        %v1365 = vperm.slane %v1363, 0
        %v1366 = vperm.slane %v1363, 1
        %v1369 = vadd.f32 %v1361, %v1365
        %v1370 = vadd.f32 %v1362, %v1366
        %v1371 = vld [vmem:[#allocation2 + $0x90] sm:$0xff]
        %v1372 = vld [vmem:[#allocation2 + $0x98] sm:$0xff]
        %v1373 = vmul.f32 %v285, %v289
        %v1374 = vmul.f32 %v286, %v290
        %v1375 = vmul.f32 %v287, %v291
        %v1376 = vmul.f32 %v288, %v292
        %v1377 = vmul.f32 %v289, %v293
        %v1378 = vmul.f32 %v290, %v294
        %v1379 = vmul.f32 %v291, %v295
        %v1380 = vmul.f32 %v292, %v296
        %v1381 = vmul.f32 %v293, %v297
        %v1382 = vmul.f32 %v294, %v298
        %v1383 = vmul.f32 %v295, %v299
        %v1384 = vmul.f32 %v296, %v300
        %v1385 = vmul.f32 %v297, %v345
        %v1386 = vmul.f32 %v298, %v346
        %v1387 = vmul.f32 %v299, %v1371
        %v1388 = vmul.f32 %v300, %v1372
        %v1389 = vadd.f32 %v1373, %v1375
        %v1390 = vadd.f32 %v1389, %v1377
        %v1391 = vadd.f32 %v1390, %v1379
        %v1392 = vadd.f32 %v1391, %v1381
        %v1393 = vadd.f32 %v1392, %v1383
        %v1394 = vadd.f32 %v1393, %v1385
        %v1395 = vadd.f32 %v1394, %v1387
        %v1396 = vrot.slane %v1395, 4
        %v1397 = vadd.f32 %v1395, %v1396
        %v1398 = vrot.slane %v1397, 2
        %v1399 = vadd.f32 %v1397, %v1398
        %v1400 = vrot.slane %v1399, 1
        %v1401 = vadd.f32 %v1399, %v1400
        %v1402 = vadd.f32 %v1374, %v1376
        %v1403 = vadd.f32 %v1402, %v1378
        %v1404 = vadd.f32 %v1403, %v1380
        %v1405 = vadd.f32 %v1404, %v1382
        %v1406 = vadd.f32 %v1405, %v1384
        %v1407 = vadd.f32 %v1406, %v1386
        %v1408 = vadd.f32 %v1407, %v1388
        %v1409 = vrot.slane %v1408, 4
        %v1410 = vadd.f32 %v1408, %v1409
        %v1411 = vrot.slane %v1410, 2
        %v1412 = vadd.f32 %v1410, %v1411
        %v1413 = vrot.slane %v1412, 1
        %v1414 = vadd.f32 %v1412, %v1413
        %v1415 = vmul.f32 %v329, %v1369
        %v1416 = vmul.f32 %v342, %v1370
        %v1417 = vadd.f32 %v1415, 1e-12
        %v1418 = vadd.f32 %v1416, 1e-12
        %v1419 = vrsqrt.pop %v1417
        %v1420 = vmul.f32 %v1419, %v1417
        %v1421 = vmul.f32 %v1420, %v1419
        %v1422 = vmul.f32 0.5, %v1421
        %v1423 = vsub.f32 1.5, %v1422
        %v1424 = vmul.f32 %v1419, %v1423
        %vm1425 = vweird.f32 %v1417
        %vm1426 = vweird.f32 %v1419
        %vm1427 = vmor %vm1425, %vm1426
        %v1428 = vsel %vm1427, %v1419, %v1424
        %v1429 = vrsqrt.pop %v1418
        %v1430 = vmul.f32 %v1429, %v1418
        %v1431 = vmul.f32 %v1430, %v1429
        %v1432 = vmul.f32 0.5, %v1431
        %v1433 = vsub.f32 1.5, %v1432
        %v1434 = vmul.f32 %v1429, %v1433
        %vm1435 = vweird.f32 %v1418
        %vm1436 = vweird.f32 %v1429
        %vm1437 = vmor %vm1435, %vm1436
        %v1438 = vsel %vm1437, %v1429, %v1434
        %v1439 = vmul.f32 %v1401, %v1428
        %v1440 = vmul.f32 %v1414, %v1438
        %vm1441 = vcmp.gt.f32.partialorder %v1439, %v1347
        %vm1442 = vcmp.gt.f32.partialorder %v1440, %v1348
        %v1443 = vsel %vm1441, %v1439, %v1347
        %v1444 = vsel %vm1442, %v1440, %v1348
        %v1445 = vsel %vm1441, 16.0, %v1349
        %v1446 = vsel %vm1442, 16.0, %v1350
        %s1447 = scalar_lea.vmem [#allocation2], 32
        %v1448 = vld [vmem:[%s1447] ss:$8 sm:$0x3]
        %s1449 = scalar_lea.vmem [#allocation2], 160
        %v1450 = vld [vmem:[%s1449] ss:$8 sm:$0x3]
        %v1451 = vmul.f32 %v1448, %v1448
        %v1453 = vperm.slane %v1451, 0
        %v1454 = vperm.slane %v1451, 1
        %v1457 = vsub.f32 %v1369, %v1453
        %v1458 = vsub.f32 %v1370, %v1454
        %v1459 = vmul.f32 %v1450, %v1450
        %v1461 = vperm.slane %v1459, 0
        %v1462 = vperm.slane %v1459, 1
        %v1465 = vadd.f32 %v1457, %v1461
        %v1466 = vadd.f32 %v1458, %v1462
        %v1467 = vld [vmem:[#allocation2 + $0x20] sm:$0xfe]
        %v1468 = vld [vmem:[#allocation2 + $0x28] sm:$0xfe]
        %v1469 = vld [vmem:[#allocation2 + $0xa0] sm:$0x1]
        %v1470 = vld [vmem:[#allocation2 + $0xa8] sm:$0x1]
        %vm1477 = vcmask 1046528
        %v1478 = vrot.slane %v1467, 1
        %v1479 = vrot.slane %v291, 1
        %v1480 = vsel %vm1477, %v1478, %v1479
        %v1481 = vrot.slane %v1468, 1
        %v1482 = vrot.slane %v292, 1
        %v1483 = vsel %vm1477, %v1481, %v1482
        %v1484 = vrot.slane %v293, 1
        %v1485 = vsel %vm1477, %v1479, %v1484
        %v1486 = vrot.slane %v294, 1
        %v1487 = vsel %vm1477, %v1482, %v1486
        %v1488 = vrot.slane %v295, 1
        %v1489 = vsel %vm1477, %v1484, %v1488
        %v1490 = vrot.slane %v296, 1
        %v1491 = vsel %vm1477, %v1486, %v1490
        %v1492 = vrot.slane %v297, 1
        %v1493 = vsel %vm1477, %v1488, %v1492
        %v1494 = vrot.slane %v298, 1
        %v1495 = vsel %vm1477, %v1490, %v1494
        %v1496 = vrot.slane %v299, 1
        %v1497 = vsel %vm1477, %v1492, %v1496
        %v1498 = vrot.slane %v300, 1
        %v1499 = vsel %vm1477, %v1494, %v1498
        %v1500 = vrot.slane %v345, 1
        %v1501 = vsel %vm1477, %v1496, %v1500
        %v1502 = vrot.slane %v346, 1
        %v1503 = vsel %vm1477, %v1498, %v1502
        %v1504 = vrot.slane %v1371, 1
        %v1505 = vsel %vm1477, %v1500, %v1504
        %v1506 = vrot.slane %v1372, 1
        %v1507 = vsel %vm1477, %v1502, %v1506
        %v1508 = vrot.slane %v1469, 1
        %v1509 = vsel %vm1477, %v1504, %v1508
        %v1510 = vrot.slane %v1470, 1
        %v1511 = vsel %vm1477, %v1506, %v1510
        %v1528 = vmul.f32 %v285, %v1480
        %v1529 = vmul.f32 %v286, %v1483
        %v1530 = vmul.f32 %v287, %v1485
        %v1531 = vmul.f32 %v288, %v1487
        %v1532 = vmul.f32 %v289, %v1489
        %v1533 = vmul.f32 %v290, %v1491
        %v1534 = vmul.f32 %v291, %v1493
        %v1535 = vmul.f32 %v292, %v1495
        %v1536 = vmul.f32 %v293, %v1497
        %v1537 = vmul.f32 %v294, %v1499
        %v1538 = vmul.f32 %v295, %v1501
        %v1539 = vmul.f32 %v296, %v1503
        %v1540 = vmul.f32 %v297, %v1505
        %v1541 = vmul.f32 %v298, %v1507
        %v1542 = vmul.f32 %v299, %v1509
        %v1543 = vmul.f32 %v300, %v1511
        %v1544 = vadd.f32 %v1528, %v1530
        %v1545 = vadd.f32 %v1544, %v1532
        %v1546 = vadd.f32 %v1545, %v1534
        %v1547 = vadd.f32 %v1546, %v1536
        %v1548 = vadd.f32 %v1547, %v1538
        %v1549 = vadd.f32 %v1548, %v1540
        %v1550 = vadd.f32 %v1549, %v1542
        %v1551 = vrot.slane %v1550, 4
        %v1552 = vadd.f32 %v1550, %v1551
        %v1553 = vrot.slane %v1552, 2
        %v1554 = vadd.f32 %v1552, %v1553
        %v1555 = vrot.slane %v1554, 1
        %v1556 = vadd.f32 %v1554, %v1555
        %v1557 = vadd.f32 %v1529, %v1531
        %v1558 = vadd.f32 %v1557, %v1533
        %v1559 = vadd.f32 %v1558, %v1535
        %v1560 = vadd.f32 %v1559, %v1537
        %v1561 = vadd.f32 %v1560, %v1539
        %v1562 = vadd.f32 %v1561, %v1541
        %v1563 = vadd.f32 %v1562, %v1543
        %v1564 = vrot.slane %v1563, 4
        %v1565 = vadd.f32 %v1563, %v1564
        %v1566 = vrot.slane %v1565, 2
        %v1567 = vadd.f32 %v1565, %v1566
        %v1568 = vrot.slane %v1567, 1
        %v1569 = vadd.f32 %v1567, %v1568
        %v1570 = vmul.f32 %v329, %v1465
        %v1571 = vmul.f32 %v342, %v1466
        %v1572 = vadd.f32 %v1570, 1e-12
        %v1573 = vadd.f32 %v1571, 1e-12
        %v1574 = vrsqrt.pop %v1572
        %v1575 = vmul.f32 %v1574, %v1572
        %v1576 = vmul.f32 %v1575, %v1574
        %v1577 = vmul.f32 0.5, %v1576
        %v1578 = vsub.f32 1.5, %v1577
        %v1579 = vmul.f32 %v1574, %v1578
        %vm1580 = vweird.f32 %v1572
        %vm1581 = vweird.f32 %v1574
        %vm1582 = vmor %vm1580, %vm1581
        %v1583 = vsel %vm1582, %v1574, %v1579
        %v1584 = vrsqrt.pop %v1573
        %v1585 = vmul.f32 %v1584, %v1573
        %v1586 = vmul.f32 %v1585, %v1584
        %v1587 = vmul.f32 0.5, %v1586
        %v1588 = vsub.f32 1.5, %v1587
        %v1589 = vmul.f32 %v1584, %v1588
        %vm1590 = vweird.f32 %v1573
        %vm1591 = vweird.f32 %v1584
        %vm1592 = vmor %vm1590, %vm1591
        %v1593 = vsel %vm1592, %v1584, %v1589
        %v1594 = vmul.f32 %v1556, %v1583
        %v1595 = vmul.f32 %v1569, %v1593
        %vm1596 = vcmp.gt.f32.partialorder %v1594, %v1443
        %vm1597 = vcmp.gt.f32.partialorder %v1595, %v1444
        %v1598 = vsel %vm1596, %v1594, %v1443
        %v1599 = vsel %vm1597, %v1595, %v1444
        %v1600 = vsel %vm1596, 17.0, %v1445
        %v1601 = vsel %vm1597, 17.0, %v1446
        %s1602 = scalar_lea.vmem [#allocation2], 33
        %v1603 = vld [vmem:[%s1602] ss:$8 sm:$0x3]
        %s1604 = scalar_lea.vmem [#allocation2], 161
        %v1605 = vld [vmem:[%s1604] ss:$8 sm:$0x3]
        %v1606 = vmul.f32 %v1603, %v1603
        %v1608 = vperm.slane %v1606, 0
        %v1609 = vperm.slane %v1606, 1
        %v1612 = vsub.f32 %v1465, %v1608
        %v1613 = vsub.f32 %v1466, %v1609
        %v1614 = vmul.f32 %v1605, %v1605
        %v1616 = vperm.slane %v1614, 0
        %v1617 = vperm.slane %v1614, 1
        %v1620 = vadd.f32 %v1612, %v1616
        %v1621 = vadd.f32 %v1613, %v1617
        %v1622 = vld [vmem:[#allocation2 + $0x20] sm:$0xfc]
        %v1623 = vld [vmem:[#allocation2 + $0x28] sm:$0xfc]
        %v1624 = vld [vmem:[#allocation2 + $0xa0] sm:$0x3]
        %v1625 = vld [vmem:[#allocation2 + $0xa8] sm:$0x3]
        %v1630 = vrot.slane %v1622, 2
        %v1631 = vsel %vm373, %v1630, %v474
        %v1632 = vrot.slane %v1623, 2
        %v1633 = vsel %vm373, %v1632, %v476
        %v1634 = vrot.slane %v1371, 2
        %v1635 = vsel %vm373, %v494, %v1634
        %v1636 = vrot.slane %v1372, 2
        %v1637 = vsel %vm373, %v496, %v1636
        %v1638 = vrot.slane %v1624, 2
        %v1639 = vsel %vm373, %v1634, %v1638
        %v1640 = vrot.slane %v1625, 2
        %v1641 = vsel %vm373, %v1636, %v1640
        %v1648 = vmul.f32 %v285, %v1631
        %v1649 = vmul.f32 %v286, %v1633
        %v1650 = vmul.f32 %v287, %v479
        %v1651 = vmul.f32 %v288, %v481
        %v1652 = vmul.f32 %v289, %v483
        %v1653 = vmul.f32 %v290, %v485
        %v1654 = vmul.f32 %v291, %v487
        %v1655 = vmul.f32 %v292, %v489
        %v1656 = vmul.f32 %v293, %v491
        %v1657 = vmul.f32 %v294, %v493
        %v1658 = vmul.f32 %v295, %v495
        %v1659 = vmul.f32 %v296, %v497
        %v1660 = vmul.f32 %v297, %v1635
        %v1661 = vmul.f32 %v298, %v1637
        %v1662 = vmul.f32 %v299, %v1639
        %v1663 = vmul.f32 %v300, %v1641
        %v1664 = vadd.f32 %v1648, %v1650
        %v1665 = vadd.f32 %v1664, %v1652
        %v1666 = vadd.f32 %v1665, %v1654
        %v1667 = vadd.f32 %v1666, %v1656
        %v1668 = vadd.f32 %v1667, %v1658
        %v1669 = vadd.f32 %v1668, %v1660
        %v1670 = vadd.f32 %v1669, %v1662
        %v1671 = vrot.slane %v1670, 4
        %v1672 = vadd.f32 %v1670, %v1671
        %v1673 = vrot.slane %v1672, 2
        %v1674 = vadd.f32 %v1672, %v1673
        %v1675 = vrot.slane %v1674, 1
        %v1676 = vadd.f32 %v1674, %v1675
        %v1677 = vadd.f32 %v1649, %v1651
        %v1678 = vadd.f32 %v1677, %v1653
        %v1679 = vadd.f32 %v1678, %v1655
        %v1680 = vadd.f32 %v1679, %v1657
        %v1681 = vadd.f32 %v1680, %v1659
        %v1682 = vadd.f32 %v1681, %v1661
        %v1683 = vadd.f32 %v1682, %v1663
        %v1684 = vrot.slane %v1683, 4
        %v1685 = vadd.f32 %v1683, %v1684
        %v1686 = vrot.slane %v1685, 2
        %v1687 = vadd.f32 %v1685, %v1686
        %v1688 = vrot.slane %v1687, 1
        %v1689 = vadd.f32 %v1687, %v1688
        %v1690 = vmul.f32 %v329, %v1620
        %v1691 = vmul.f32 %v342, %v1621
        %v1692 = vadd.f32 %v1690, 1e-12
        %v1693 = vadd.f32 %v1691, 1e-12
        %v1694 = vrsqrt.pop %v1692
        %v1695 = vmul.f32 %v1694, %v1692
        %v1696 = vmul.f32 %v1695, %v1694
        %v1697 = vmul.f32 0.5, %v1696
        %v1698 = vsub.f32 1.5, %v1697
        %v1699 = vmul.f32 %v1694, %v1698
        %vm1700 = vweird.f32 %v1692
        %vm1701 = vweird.f32 %v1694
        %vm1702 = vmor %vm1700, %vm1701
        %v1703 = vsel %vm1702, %v1694, %v1699
        %v1704 = vrsqrt.pop %v1693
        %v1705 = vmul.f32 %v1704, %v1693
        %v1706 = vmul.f32 %v1705, %v1704
        %v1707 = vmul.f32 0.5, %v1706
        %v1708 = vsub.f32 1.5, %v1707
        %v1709 = vmul.f32 %v1704, %v1708
        %vm1710 = vweird.f32 %v1693
        %vm1711 = vweird.f32 %v1704
        %vm1712 = vmor %vm1710, %vm1711
        %v1713 = vsel %vm1712, %v1704, %v1709
        %v1714 = vmul.f32 %v1676, %v1703
        %v1715 = vmul.f32 %v1689, %v1713
        %vm1716 = vcmp.gt.f32.partialorder %v1714, %v1598
        %vm1717 = vcmp.gt.f32.partialorder %v1715, %v1599
        %v1718 = vsel %vm1716, %v1714, %v1598
        %v1719 = vsel %vm1717, %v1715, %v1599
        %v1720 = vsel %vm1716, 18.0, %v1600
        %v1721 = vsel %vm1717, 18.0, %v1601
        %s1722 = scalar_lea.vmem [#allocation2], 34
        %v1723 = vld [vmem:[%s1722] ss:$8 sm:$0x3]
        %s1724 = scalar_lea.vmem [#allocation2], 162
        %v1725 = vld [vmem:[%s1724] ss:$8 sm:$0x3]
        %v1726 = vmul.f32 %v1723, %v1723
        %v1728 = vperm.slane %v1726, 0
        %v1729 = vperm.slane %v1726, 1
        %v1732 = vsub.f32 %v1620, %v1728
        %v1733 = vsub.f32 %v1621, %v1729
        %v1734 = vmul.f32 %v1725, %v1725
        %v1736 = vperm.slane %v1734, 0
        %v1737 = vperm.slane %v1734, 1
        %v1740 = vadd.f32 %v1732, %v1736
        %v1741 = vadd.f32 %v1733, %v1737
        %v1742 = vld [vmem:[#allocation2 + $0x20] sm:$0xf8]
        %v1743 = vld [vmem:[#allocation2 + $0x28] sm:$0xf8]
        %v1744 = vld [vmem:[#allocation2 + $0xa0] sm:$0x7]
        %v1745 = vld [vmem:[#allocation2 + $0xa8] sm:$0x7]
        %v1750 = vrot.slane %v1742, 3
        %v1751 = vsel %vm614, %v1750, %v621
        %v1752 = vrot.slane %v1743, 3
        %v1753 = vsel %vm614, %v1752, %v623
        %v1754 = vrot.slane %v1371, 3
        %v1755 = vsel %vm614, %v641, %v1754
        %v1756 = vrot.slane %v1372, 3
        %v1757 = vsel %vm614, %v643, %v1756
        %v1758 = vrot.slane %v1744, 3
        %v1759 = vsel %vm614, %v1754, %v1758
        %v1760 = vrot.slane %v1745, 3
        %v1761 = vsel %vm614, %v1756, %v1760
        %v1768 = vmul.f32 %v285, %v1751
        %v1769 = vmul.f32 %v286, %v1753
        %v1770 = vmul.f32 %v287, %v626
        %v1771 = vmul.f32 %v288, %v628
        %v1772 = vmul.f32 %v289, %v630
        %v1773 = vmul.f32 %v290, %v632
        %v1774 = vmul.f32 %v291, %v634
        %v1775 = vmul.f32 %v292, %v636
        %v1776 = vmul.f32 %v293, %v638
        %v1777 = vmul.f32 %v294, %v640
        %v1778 = vmul.f32 %v295, %v642
        %v1779 = vmul.f32 %v296, %v644
        %v1780 = vmul.f32 %v297, %v1755
        %v1781 = vmul.f32 %v298, %v1757
        %v1782 = vmul.f32 %v299, %v1759
        %v1783 = vmul.f32 %v300, %v1761
        %v1784 = vadd.f32 %v1768, %v1770
        %v1785 = vadd.f32 %v1784, %v1772
        %v1786 = vadd.f32 %v1785, %v1774
        %v1787 = vadd.f32 %v1786, %v1776
        %v1788 = vadd.f32 %v1787, %v1778
        %v1789 = vadd.f32 %v1788, %v1780
        %v1790 = vadd.f32 %v1789, %v1782
        %v1791 = vrot.slane %v1790, 4
        %v1792 = vadd.f32 %v1790, %v1791
        %v1793 = vrot.slane %v1792, 2
        %v1794 = vadd.f32 %v1792, %v1793
        %v1795 = vrot.slane %v1794, 1
        %v1796 = vadd.f32 %v1794, %v1795
        %v1797 = vadd.f32 %v1769, %v1771
        %v1798 = vadd.f32 %v1797, %v1773
        %v1799 = vadd.f32 %v1798, %v1775
        %v1800 = vadd.f32 %v1799, %v1777
        %v1801 = vadd.f32 %v1800, %v1779
        %v1802 = vadd.f32 %v1801, %v1781
        %v1803 = vadd.f32 %v1802, %v1783
        %v1804 = vrot.slane %v1803, 4
        %v1805 = vadd.f32 %v1803, %v1804
        %v1806 = vrot.slane %v1805, 2
        %v1807 = vadd.f32 %v1805, %v1806
        %v1808 = vrot.slane %v1807, 1
        %v1809 = vadd.f32 %v1807, %v1808
        %v1810 = vmul.f32 %v329, %v1740
        %v1811 = vmul.f32 %v342, %v1741
        %v1812 = vadd.f32 %v1810, 1e-12
        %v1813 = vadd.f32 %v1811, 1e-12
        %v1814 = vrsqrt.pop %v1812
        %v1815 = vmul.f32 %v1814, %v1812
        %v1816 = vmul.f32 %v1815, %v1814
        %v1817 = vmul.f32 0.5, %v1816
        %v1818 = vsub.f32 1.5, %v1817
        %v1819 = vmul.f32 %v1814, %v1818
        %vm1820 = vweird.f32 %v1812
        %vm1821 = vweird.f32 %v1814
        %vm1822 = vmor %vm1820, %vm1821
        %v1823 = vsel %vm1822, %v1814, %v1819
        %v1824 = vrsqrt.pop %v1813
        %v1825 = vmul.f32 %v1824, %v1813
        %v1826 = vmul.f32 %v1825, %v1824
        %v1827 = vmul.f32 0.5, %v1826
        %v1828 = vsub.f32 1.5, %v1827
        %v1829 = vmul.f32 %v1824, %v1828
        %vm1830 = vweird.f32 %v1813
        %vm1831 = vweird.f32 %v1824
        %vm1832 = vmor %vm1830, %vm1831
        %v1833 = vsel %vm1832, %v1824, %v1829
        %v1834 = vmul.f32 %v1796, %v1823
        %v1835 = vmul.f32 %v1809, %v1833
        %vm1836 = vcmp.gt.f32.partialorder %v1834, %v1718
        %vm1837 = vcmp.gt.f32.partialorder %v1835, %v1719
        %v1838 = vsel %vm1836, %v1834, %v1718
        %v1839 = vsel %vm1837, %v1835, %v1719
        %v1840 = vsel %vm1836, 19.0, %v1720
        %v1841 = vsel %vm1837, 19.0, %v1721
        %s1842 = scalar_lea.vmem [#allocation2], 35
        %v1843 = vld [vmem:[%s1842] ss:$8 sm:$0x3]
        %s1844 = scalar_lea.vmem [#allocation2], 163
        %v1845 = vld [vmem:[%s1844] ss:$8 sm:$0x3]
        %v1846 = vmul.f32 %v1843, %v1843
        %v1848 = vperm.slane %v1846, 0
        %v1849 = vperm.slane %v1846, 1
        %v1852 = vsub.f32 %v1740, %v1848
        %v1853 = vsub.f32 %v1741, %v1849
        %v1854 = vmul.f32 %v1845, %v1845
        %v1856 = vperm.slane %v1854, 0
        %v1857 = vperm.slane %v1854, 1
        %v1860 = vadd.f32 %v1852, %v1856
        %v1861 = vadd.f32 %v1853, %v1857
        %v1862 = vld [vmem:[#allocation2 + $0x20] sm:$0xf0]
        %v1863 = vld [vmem:[#allocation2 + $0x28] sm:$0xf0]
        %v1864 = vld [vmem:[#allocation2 + $0xa0] sm:$0xf]
        %v1865 = vld [vmem:[#allocation2 + $0xa8] sm:$0xf]
        %v1870 = vrot.slane %v1862, 4
        %v1871 = vsel %vm767, %v1870, %v774
        %v1872 = vrot.slane %v1863, 4
        %v1873 = vsel %vm767, %v1872, %v776
        %v1874 = vrot.slane %v1371, 4
        %v1875 = vsel %vm767, %v794, %v1874
        %v1876 = vrot.slane %v1372, 4
        %v1877 = vsel %vm767, %v796, %v1876
        %v1878 = vrot.slane %v1864, 4
        %v1879 = vsel %vm767, %v1874, %v1878
        %v1880 = vrot.slane %v1865, 4
        %v1881 = vsel %vm767, %v1876, %v1880
        %v1888 = vmul.f32 %v285, %v1871
        %v1889 = vmul.f32 %v286, %v1873
        %v1890 = vmul.f32 %v287, %v779
        %v1891 = vmul.f32 %v288, %v781
        %v1892 = vmul.f32 %v289, %v783
        %v1893 = vmul.f32 %v290, %v785
        %v1894 = vmul.f32 %v291, %v787
        %v1895 = vmul.f32 %v292, %v789
        %v1896 = vmul.f32 %v293, %v791
        %v1897 = vmul.f32 %v294, %v793
        %v1898 = vmul.f32 %v295, %v795
        %v1899 = vmul.f32 %v296, %v797
        %v1900 = vmul.f32 %v297, %v1875
        %v1901 = vmul.f32 %v298, %v1877
        %v1902 = vmul.f32 %v299, %v1879
        %v1903 = vmul.f32 %v300, %v1881
        %v1904 = vadd.f32 %v1888, %v1890
        %v1905 = vadd.f32 %v1904, %v1892
        %v1906 = vadd.f32 %v1905, %v1894
        %v1907 = vadd.f32 %v1906, %v1896
        %v1908 = vadd.f32 %v1907, %v1898
        %v1909 = vadd.f32 %v1908, %v1900
        %v1910 = vadd.f32 %v1909, %v1902
        %v1911 = vrot.slane %v1910, 4
        %v1912 = vadd.f32 %v1910, %v1911
        %v1913 = vrot.slane %v1912, 2
        %v1914 = vadd.f32 %v1912, %v1913
        %v1915 = vrot.slane %v1914, 1
        %v1916 = vadd.f32 %v1914, %v1915
        %v1917 = vadd.f32 %v1889, %v1891
        %v1918 = vadd.f32 %v1917, %v1893
        %v1919 = vadd.f32 %v1918, %v1895
        %v1920 = vadd.f32 %v1919, %v1897
        %v1921 = vadd.f32 %v1920, %v1899
        %v1922 = vadd.f32 %v1921, %v1901
        %v1923 = vadd.f32 %v1922, %v1903
        %v1924 = vrot.slane %v1923, 4
        %v1925 = vadd.f32 %v1923, %v1924
        %v1926 = vrot.slane %v1925, 2
        %v1927 = vadd.f32 %v1925, %v1926
        %v1928 = vrot.slane %v1927, 1
        %v1929 = vadd.f32 %v1927, %v1928
        %v1930 = vmul.f32 %v329, %v1860
        %v1931 = vmul.f32 %v342, %v1861
        %v1932 = vadd.f32 %v1930, 1e-12
        %v1933 = vadd.f32 %v1931, 1e-12
        %v1934 = vrsqrt.pop %v1932
        %v1935 = vmul.f32 %v1934, %v1932
        %v1936 = vmul.f32 %v1935, %v1934
        %v1937 = vmul.f32 0.5, %v1936
        %v1938 = vsub.f32 1.5, %v1937
        %v1939 = vmul.f32 %v1934, %v1938
        %vm1940 = vweird.f32 %v1932
        %vm1941 = vweird.f32 %v1934
        %vm1942 = vmor %vm1940, %vm1941
        %v1943 = vsel %vm1942, %v1934, %v1939
        %v1944 = vrsqrt.pop %v1933
        %v1945 = vmul.f32 %v1944, %v1933
        %v1946 = vmul.f32 %v1945, %v1944
        %v1947 = vmul.f32 0.5, %v1946
        %v1948 = vsub.f32 1.5, %v1947
        %v1949 = vmul.f32 %v1944, %v1948
        %vm1950 = vweird.f32 %v1933
        %vm1951 = vweird.f32 %v1944
        %vm1952 = vmor %vm1950, %vm1951
        %v1953 = vsel %vm1952, %v1944, %v1949
        %v1954 = vmul.f32 %v1916, %v1943
        %v1955 = vmul.f32 %v1929, %v1953
        %vm1956 = vcmp.gt.f32.partialorder %v1954, %v1838
        %vm1957 = vcmp.gt.f32.partialorder %v1955, %v1839
        %v1958 = vsel %vm1956, %v1954, %v1838
        %v1959 = vsel %vm1957, %v1955, %v1839
        %v1960 = vsel %vm1956, 20.0, %v1840
        %v1961 = vsel %vm1957, 20.0, %v1841
        %s1962 = scalar_lea.vmem [#allocation2], 36
        %v1963 = vld [vmem:[%s1962] ss:$8 sm:$0x3]
        %s1964 = scalar_lea.vmem [#allocation2], 164
        %v1965 = vld [vmem:[%s1964] ss:$8 sm:$0x3]
        %v1966 = vmul.f32 %v1963, %v1963
        %v1968 = vperm.slane %v1966, 0
        %v1969 = vperm.slane %v1966, 1
        %v1972 = vsub.f32 %v1860, %v1968
        %v1973 = vsub.f32 %v1861, %v1969
        %v1974 = vmul.f32 %v1965, %v1965
        %v1976 = vperm.slane %v1974, 0
        %v1977 = vperm.slane %v1974, 1
        %v1980 = vadd.f32 %v1972, %v1976
        %v1981 = vadd.f32 %v1973, %v1977
        %v1982 = vld [vmem:[#allocation2 + $0x20] sm:$0xe0]
        %v1983 = vld [vmem:[#allocation2 + $0x28] sm:$0xe0]
        %v1984 = vld [vmem:[#allocation2 + $0xa0] sm:$0x1f]
        %v1985 = vld [vmem:[#allocation2 + $0xa8] sm:$0x1f]
        %v1990 = vrot.slane %v1982, 5
        %v1991 = vsel %vm920, %v1990, %v927
        %v1992 = vrot.slane %v1983, 5
        %v1993 = vsel %vm920, %v1992, %v929
        %v1994 = vrot.slane %v1371, 5
        %v1995 = vsel %vm920, %v947, %v1994
        %v1996 = vrot.slane %v1372, 5
        %v1997 = vsel %vm920, %v949, %v1996
        %v1998 = vrot.slane %v1984, 5
        %v1999 = vsel %vm920, %v1994, %v1998
        %v2000 = vrot.slane %v1985, 5
        %v2001 = vsel %vm920, %v1996, %v2000
        %v2008 = vmul.f32 %v285, %v1991
        %v2009 = vmul.f32 %v286, %v1993
        %v2010 = vmul.f32 %v287, %v932
        %v2011 = vmul.f32 %v288, %v934
        %v2012 = vmul.f32 %v289, %v936
        %v2013 = vmul.f32 %v290, %v938
        %v2014 = vmul.f32 %v291, %v940
        %v2015 = vmul.f32 %v292, %v942
        %v2016 = vmul.f32 %v293, %v944
        %v2017 = vmul.f32 %v294, %v946
        %v2018 = vmul.f32 %v295, %v948
        %v2019 = vmul.f32 %v296, %v950
        %v2020 = vmul.f32 %v297, %v1995
        %v2021 = vmul.f32 %v298, %v1997
        %v2022 = vmul.f32 %v299, %v1999
        %v2023 = vmul.f32 %v300, %v2001
        %v2024 = vadd.f32 %v2008, %v2010
        %v2025 = vadd.f32 %v2024, %v2012
        %v2026 = vadd.f32 %v2025, %v2014
        %v2027 = vadd.f32 %v2026, %v2016
        %v2028 = vadd.f32 %v2027, %v2018
        %v2029 = vadd.f32 %v2028, %v2020
        %v2030 = vadd.f32 %v2029, %v2022
        %v2031 = vrot.slane %v2030, 4
        %v2032 = vadd.f32 %v2030, %v2031
        %v2033 = vrot.slane %v2032, 2
        %v2034 = vadd.f32 %v2032, %v2033
        %v2035 = vrot.slane %v2034, 1
        %v2036 = vadd.f32 %v2034, %v2035
        %v2037 = vadd.f32 %v2009, %v2011
        %v2038 = vadd.f32 %v2037, %v2013
        %v2039 = vadd.f32 %v2038, %v2015
        %v2040 = vadd.f32 %v2039, %v2017
        %v2041 = vadd.f32 %v2040, %v2019
        %v2042 = vadd.f32 %v2041, %v2021
        %v2043 = vadd.f32 %v2042, %v2023
        %v2044 = vrot.slane %v2043, 4
        %v2045 = vadd.f32 %v2043, %v2044
        %v2046 = vrot.slane %v2045, 2
        %v2047 = vadd.f32 %v2045, %v2046
        %v2048 = vrot.slane %v2047, 1
        %v2049 = vadd.f32 %v2047, %v2048
        %v2050 = vmul.f32 %v329, %v1980
        %v2051 = vmul.f32 %v342, %v1981
        %v2052 = vadd.f32 %v2050, 1e-12
        %v2053 = vadd.f32 %v2051, 1e-12
        %v2054 = vrsqrt.pop %v2052
        %v2055 = vmul.f32 %v2054, %v2052
        %v2056 = vmul.f32 %v2055, %v2054
        %v2057 = vmul.f32 0.5, %v2056
        %v2058 = vsub.f32 1.5, %v2057
        %v2059 = vmul.f32 %v2054, %v2058
        %vm2060 = vweird.f32 %v2052
        %vm2061 = vweird.f32 %v2054
        %vm2062 = vmor %vm2060, %vm2061
        %v2063 = vsel %vm2062, %v2054, %v2059
        %v2064 = vrsqrt.pop %v2053
        %v2065 = vmul.f32 %v2064, %v2053
        %v2066 = vmul.f32 %v2065, %v2064
        %v2067 = vmul.f32 0.5, %v2066
        %v2068 = vsub.f32 1.5, %v2067
        %v2069 = vmul.f32 %v2064, %v2068
        %vm2070 = vweird.f32 %v2053
        %vm2071 = vweird.f32 %v2064
        %vm2072 = vmor %vm2070, %vm2071
        %v2073 = vsel %vm2072, %v2064, %v2069
        %v2074 = vmul.f32 %v2036, %v2063
        %v2075 = vmul.f32 %v2049, %v2073
        %vm2076 = vcmp.gt.f32.partialorder %v2074, %v1958
        %vm2077 = vcmp.gt.f32.partialorder %v2075, %v1959
        %v2078 = vsel %vm2076, %v2074, %v1958
        %v2079 = vsel %vm2077, %v2075, %v1959
        %v2080 = vsel %vm2076, 21.0, %v1960
        %v2081 = vsel %vm2077, 21.0, %v1961
        %s2082 = scalar_lea.vmem [#allocation2], 37
        %v2083 = vld [vmem:[%s2082] ss:$8 sm:$0x3]
        %s2084 = scalar_lea.vmem [#allocation2], 165
        %v2085 = vld [vmem:[%s2084] ss:$8 sm:$0x3]
        %v2086 = vmul.f32 %v2083, %v2083
        %v2088 = vperm.slane %v2086, 0
        %v2089 = vperm.slane %v2086, 1
        %v2092 = vsub.f32 %v1980, %v2088
        %v2093 = vsub.f32 %v1981, %v2089
        %v2094 = vmul.f32 %v2085, %v2085
        %v2096 = vperm.slane %v2094, 0
        %v2097 = vperm.slane %v2094, 1
        %v2100 = vadd.f32 %v2092, %v2096
        %v2101 = vadd.f32 %v2093, %v2097
        %v2102 = vld [vmem:[#allocation2 + $0x20] sm:$0xc0]
        %v2103 = vld [vmem:[#allocation2 + $0x28] sm:$0xc0]
        %v2104 = vld [vmem:[#allocation2 + $0xa0] sm:$0x3f]
        %v2105 = vld [vmem:[#allocation2 + $0xa8] sm:$0x3f]
        %v2110 = vrot.slane %v2102, 6
        %v2111 = vsel %vm1073, %v2110, %v1080
        %v2112 = vrot.slane %v2103, 6
        %v2113 = vsel %vm1073, %v2112, %v1082
        %v2114 = vrot.slane %v1371, 6
        %v2115 = vsel %vm1073, %v1100, %v2114
        %v2116 = vrot.slane %v1372, 6
        %v2117 = vsel %vm1073, %v1102, %v2116
        %v2118 = vrot.slane %v2104, 6
        %v2119 = vsel %vm1073, %v2114, %v2118
        %v2120 = vrot.slane %v2105, 6
        %v2121 = vsel %vm1073, %v2116, %v2120
        %v2128 = vmul.f32 %v285, %v2111
        %v2129 = vmul.f32 %v286, %v2113
        %v2130 = vmul.f32 %v287, %v1085
        %v2131 = vmul.f32 %v288, %v1087
        %v2132 = vmul.f32 %v289, %v1089
        %v2133 = vmul.f32 %v290, %v1091
        %v2134 = vmul.f32 %v291, %v1093
        %v2135 = vmul.f32 %v292, %v1095
        %v2136 = vmul.f32 %v293, %v1097
        %v2137 = vmul.f32 %v294, %v1099
        %v2138 = vmul.f32 %v295, %v1101
        %v2139 = vmul.f32 %v296, %v1103
        %v2140 = vmul.f32 %v297, %v2115
        %v2141 = vmul.f32 %v298, %v2117
        %v2142 = vmul.f32 %v299, %v2119
        %v2143 = vmul.f32 %v300, %v2121
        %v2144 = vadd.f32 %v2128, %v2130
        %v2145 = vadd.f32 %v2144, %v2132
        %v2146 = vadd.f32 %v2145, %v2134
        %v2147 = vadd.f32 %v2146, %v2136
        %v2148 = vadd.f32 %v2147, %v2138
        %v2149 = vadd.f32 %v2148, %v2140
        %v2150 = vadd.f32 %v2149, %v2142
        %v2151 = vrot.slane %v2150, 4
        %v2152 = vadd.f32 %v2150, %v2151
        %v2153 = vrot.slane %v2152, 2
        %v2154 = vadd.f32 %v2152, %v2153
        %v2155 = vrot.slane %v2154, 1
        %v2156 = vadd.f32 %v2154, %v2155
        %v2157 = vadd.f32 %v2129, %v2131
        %v2158 = vadd.f32 %v2157, %v2133
        %v2159 = vadd.f32 %v2158, %v2135
        %v2160 = vadd.f32 %v2159, %v2137
        %v2161 = vadd.f32 %v2160, %v2139
        %v2162 = vadd.f32 %v2161, %v2141
        %v2163 = vadd.f32 %v2162, %v2143
        %v2164 = vrot.slane %v2163, 4
        %v2165 = vadd.f32 %v2163, %v2164
        %v2166 = vrot.slane %v2165, 2
        %v2167 = vadd.f32 %v2165, %v2166
        %v2168 = vrot.slane %v2167, 1
        %v2169 = vadd.f32 %v2167, %v2168
        %v2170 = vmul.f32 %v329, %v2100
        %v2171 = vmul.f32 %v342, %v2101
        %v2172 = vadd.f32 %v2170, 1e-12
        %v2173 = vadd.f32 %v2171, 1e-12
        %v2174 = vrsqrt.pop %v2172
        %v2175 = vmul.f32 %v2174, %v2172
        %v2176 = vmul.f32 %v2175, %v2174
        %v2177 = vmul.f32 0.5, %v2176
        %v2178 = vsub.f32 1.5, %v2177
        %v2179 = vmul.f32 %v2174, %v2178
        %vm2180 = vweird.f32 %v2172
        %vm2181 = vweird.f32 %v2174
        %vm2182 = vmor %vm2180, %vm2181
        %v2183 = vsel %vm2182, %v2174, %v2179
        %v2184 = vrsqrt.pop %v2173
        %v2185 = vmul.f32 %v2184, %v2173
        %v2186 = vmul.f32 %v2185, %v2184
        %v2187 = vmul.f32 0.5, %v2186
        %v2188 = vsub.f32 1.5, %v2187
        %v2189 = vmul.f32 %v2184, %v2188
        %vm2190 = vweird.f32 %v2173
        %vm2191 = vweird.f32 %v2184
        %vm2192 = vmor %vm2190, %vm2191
        %v2193 = vsel %vm2192, %v2184, %v2189
        %v2194 = vmul.f32 %v2156, %v2183
        %v2195 = vmul.f32 %v2169, %v2193
        %vm2196 = vcmp.gt.f32.partialorder %v2194, %v2078
        %vm2197 = vcmp.gt.f32.partialorder %v2195, %v2079
        %v2198 = vsel %vm2196, %v2194, %v2078
        %v2199 = vsel %vm2197, %v2195, %v2079
        %v2200 = vsel %vm2196, 22.0, %v2080
        %v2201 = vsel %vm2197, 22.0, %v2081
        %s2202 = scalar_lea.vmem [#allocation2], 38
        %v2203 = vld [vmem:[%s2202] ss:$8 sm:$0x3]
        %s2204 = scalar_lea.vmem [#allocation2], 166
        %v2205 = vld [vmem:[%s2204] ss:$8 sm:$0x3]
        %v2206 = vmul.f32 %v2203, %v2203
        %v2208 = vperm.slane %v2206, 0
        %v2209 = vperm.slane %v2206, 1
        %v2212 = vsub.f32 %v2100, %v2208
        %v2213 = vsub.f32 %v2101, %v2209
        %v2214 = vmul.f32 %v2205, %v2205
        %v2216 = vperm.slane %v2214, 0
        %v2217 = vperm.slane %v2214, 1
        %v2220 = vadd.f32 %v2212, %v2216
        %v2221 = vadd.f32 %v2213, %v2217
        %v2222 = vld [vmem:[#allocation2 + $0x20] sm:$0x80]
        %v2223 = vld [vmem:[#allocation2 + $0x28] sm:$0x80]
        %v2224 = vld [vmem:[#allocation2 + $0xa0] sm:$0x7f]
        %v2225 = vld [vmem:[#allocation2 + $0xa8] sm:$0x7f]
        %v2230 = vrot.slane %v2222, 7
        %v2231 = vsel %vm1226, %v2230, %v1233
        %v2232 = vrot.slane %v2223, 7
        %v2233 = vsel %vm1226, %v2232, %v1235
        %v2234 = vrot.slane %v1371, 7
        %v2235 = vsel %vm1226, %v1253, %v2234
        %v2236 = vrot.slane %v1372, 7
        %v2237 = vsel %vm1226, %v1255, %v2236
        %v2238 = vrot.slane %v2224, 7
        %v2239 = vsel %vm1226, %v2234, %v2238
        %v2240 = vrot.slane %v2225, 7
        %v2241 = vsel %vm1226, %v2236, %v2240
        %v2248 = vmul.f32 %v285, %v2231
        %v2249 = vmul.f32 %v286, %v2233
        %v2250 = vmul.f32 %v287, %v1238
        %v2251 = vmul.f32 %v288, %v1240
        %v2252 = vmul.f32 %v289, %v1242
        %v2253 = vmul.f32 %v290, %v1244
        %v2254 = vmul.f32 %v291, %v1246
        %v2255 = vmul.f32 %v292, %v1248
        %v2256 = vmul.f32 %v293, %v1250
        %v2257 = vmul.f32 %v294, %v1252
        %v2258 = vmul.f32 %v295, %v1254
        %v2259 = vmul.f32 %v296, %v1256
        %v2260 = vmul.f32 %v297, %v2235
        %v2261 = vmul.f32 %v298, %v2237
        %v2262 = vmul.f32 %v299, %v2239
        %v2263 = vmul.f32 %v300, %v2241
        %v2264 = vadd.f32 %v2248, %v2250
        %v2265 = vadd.f32 %v2264, %v2252
        %v2266 = vadd.f32 %v2265, %v2254
        %v2267 = vadd.f32 %v2266, %v2256
        %v2268 = vadd.f32 %v2267, %v2258
        %v2269 = vadd.f32 %v2268, %v2260
        %v2270 = vadd.f32 %v2269, %v2262
        %v2271 = vrot.slane %v2270, 4
        %v2272 = vadd.f32 %v2270, %v2271
        %v2273 = vrot.slane %v2272, 2
        %v2274 = vadd.f32 %v2272, %v2273
        %v2275 = vrot.slane %v2274, 1
        %v2276 = vadd.f32 %v2274, %v2275
        %v2277 = vadd.f32 %v2249, %v2251
        %v2278 = vadd.f32 %v2277, %v2253
        %v2279 = vadd.f32 %v2278, %v2255
        %v2280 = vadd.f32 %v2279, %v2257
        %v2281 = vadd.f32 %v2280, %v2259
        %v2282 = vadd.f32 %v2281, %v2261
        %v2283 = vadd.f32 %v2282, %v2263
        %v2284 = vrot.slane %v2283, 4
        %v2285 = vadd.f32 %v2283, %v2284
        %v2286 = vrot.slane %v2285, 2
        %v2287 = vadd.f32 %v2285, %v2286
        %v2288 = vrot.slane %v2287, 1
        %v2289 = vadd.f32 %v2287, %v2288
        %v2290 = vmul.f32 %v329, %v2220
        %v2291 = vmul.f32 %v342, %v2221
        %v2292 = vadd.f32 %v2290, 1e-12
        %v2293 = vadd.f32 %v2291, 1e-12
        %v2294 = vrsqrt.pop %v2292
        %v2295 = vmul.f32 %v2294, %v2292
        %v2296 = vmul.f32 %v2295, %v2294
        %v2297 = vmul.f32 0.5, %v2296
        %v2298 = vsub.f32 1.5, %v2297
        %v2299 = vmul.f32 %v2294, %v2298
        %vm2300 = vweird.f32 %v2292
        %vm2301 = vweird.f32 %v2294
        %vm2302 = vmor %vm2300, %vm2301
        %v2303 = vsel %vm2302, %v2294, %v2299
        %v2304 = vrsqrt.pop %v2293
        %v2305 = vmul.f32 %v2304, %v2293
        %v2306 = vmul.f32 %v2305, %v2304
        %v2307 = vmul.f32 0.5, %v2306
        %v2308 = vsub.f32 1.5, %v2307
        %v2309 = vmul.f32 %v2304, %v2308
        %vm2310 = vweird.f32 %v2293
        %vm2311 = vweird.f32 %v2304
        %vm2312 = vmor %vm2310, %vm2311
        %v2313 = vsel %vm2312, %v2304, %v2309
        %v2314 = vmul.f32 %v2276, %v2303
        %v2315 = vmul.f32 %v2289, %v2313
        %vm2316 = vcmp.gt.f32.partialorder %v2314, %v2198
        %vm2317 = vcmp.gt.f32.partialorder %v2315, %v2199
        %v2318 = vsel %vm2316, %v2314, %v2198
        %v2319 = vsel %vm2317, %v2315, %v2199
        %v2320 = vsel %vm2316, 23.0, %v2200
        %v2321 = vsel %vm2317, 23.0, %v2201
        %s2322 = scalar_lea.vmem [#allocation2], 39
        %v2323 = vld [vmem:[%s2322] ss:$8 sm:$0x3]
        %s2324 = scalar_lea.vmem [#allocation2], 167
        %v2325 = vld [vmem:[%s2324] ss:$8 sm:$0x3]
        %v2326 = vmul.f32 %v2323, %v2323
        %v2328 = vperm.slane %v2326, 0
        %v2329 = vperm.slane %v2326, 1
        %v2332 = vsub.f32 %v2220, %v2328
        %v2333 = vsub.f32 %v2221, %v2329
        %v2334 = vmul.f32 %v2325, %v2325
        %v2336 = vperm.slane %v2334, 0
        %v2337 = vperm.slane %v2334, 1
        %v2340 = vadd.f32 %v2332, %v2336
        %v2341 = vadd.f32 %v2333, %v2337
        %v2342 = vld [vmem:[#allocation2 + $0xa0] sm:$0xff]
        %v2343 = vld [vmem:[#allocation2 + $0xa8] sm:$0xff]
        %v2344 = vmul.f32 %v285, %v291
        %v2345 = vmul.f32 %v286, %v292
        %v2346 = vmul.f32 %v287, %v293
        %v2347 = vmul.f32 %v288, %v294
        %v2348 = vmul.f32 %v289, %v295
        %v2349 = vmul.f32 %v290, %v296
        %v2350 = vmul.f32 %v291, %v297
        %v2351 = vmul.f32 %v292, %v298
        %v2352 = vmul.f32 %v293, %v299
        %v2353 = vmul.f32 %v294, %v300
        %v2354 = vmul.f32 %v295, %v345
        %v2355 = vmul.f32 %v296, %v346
        %v2356 = vmul.f32 %v297, %v1371
        %v2357 = vmul.f32 %v298, %v1372
        %v2358 = vmul.f32 %v299, %v2342
        %v2359 = vmul.f32 %v300, %v2343
        %v2360 = vadd.f32 %v2344, %v2346
        %v2361 = vadd.f32 %v2360, %v2348
        %v2362 = vadd.f32 %v2361, %v2350
        %v2363 = vadd.f32 %v2362, %v2352
        %v2364 = vadd.f32 %v2363, %v2354
        %v2365 = vadd.f32 %v2364, %v2356
        %v2366 = vadd.f32 %v2365, %v2358
        %v2367 = vrot.slane %v2366, 4
        %v2368 = vadd.f32 %v2366, %v2367
        %v2369 = vrot.slane %v2368, 2
        %v2370 = vadd.f32 %v2368, %v2369
        %v2371 = vrot.slane %v2370, 1
        %v2372 = vadd.f32 %v2370, %v2371
        %v2373 = vadd.f32 %v2345, %v2347
        %v2374 = vadd.f32 %v2373, %v2349
        %v2375 = vadd.f32 %v2374, %v2351
        %v2376 = vadd.f32 %v2375, %v2353
        %v2377 = vadd.f32 %v2376, %v2355
        %v2378 = vadd.f32 %v2377, %v2357
        %v2379 = vadd.f32 %v2378, %v2359
        %v2380 = vrot.slane %v2379, 4
        %v2381 = vadd.f32 %v2379, %v2380
        %v2382 = vrot.slane %v2381, 2
        %v2383 = vadd.f32 %v2381, %v2382
        %v2384 = vrot.slane %v2383, 1
        %v2385 = vadd.f32 %v2383, %v2384
        %v2386 = vmul.f32 %v329, %v2340
        %v2387 = vmul.f32 %v342, %v2341
        %v2388 = vadd.f32 %v2386, 1e-12
        %v2389 = vadd.f32 %v2387, 1e-12
        %v2390 = vrsqrt.pop %v2388
        %v2391 = vmul.f32 %v2390, %v2388
        %v2392 = vmul.f32 %v2391, %v2390
        %v2393 = vmul.f32 0.5, %v2392
        %v2394 = vsub.f32 1.5, %v2393
        %v2395 = vmul.f32 %v2390, %v2394
        %vm2396 = vweird.f32 %v2388
        %vm2397 = vweird.f32 %v2390
        %vm2398 = vmor %vm2396, %vm2397
        %v2399 = vsel %vm2398, %v2390, %v2395
        %v2400 = vrsqrt.pop %v2389
        %v2401 = vmul.f32 %v2400, %v2389
        %v2402 = vmul.f32 %v2401, %v2400
        %v2403 = vmul.f32 0.5, %v2402
        %v2404 = vsub.f32 1.5, %v2403
        %v2405 = vmul.f32 %v2400, %v2404
        %vm2406 = vweird.f32 %v2389
        %vm2407 = vweird.f32 %v2400
        %vm2408 = vmor %vm2406, %vm2407
        %v2409 = vsel %vm2408, %v2400, %v2405
        %v2410 = vmul.f32 %v2372, %v2399
        %v2411 = vmul.f32 %v2385, %v2409
        %vm2412 = vcmp.gt.f32.partialorder %v2410, %v2318
        %vm2413 = vcmp.gt.f32.partialorder %v2411, %v2319
        %v2414 = vsel %vm2412, %v2410, %v2318
        %v2415 = vsel %vm2413, %v2411, %v2319
        %v2416 = vsel %vm2412, 24.0, %v2320
        %v2417 = vsel %vm2413, 24.0, %v2321
        %s2418 = scalar_lea.vmem [#allocation2], 48
        %v2419 = vld [vmem:[%s2418] ss:$8 sm:$0x3]
        %s2420 = scalar_lea.vmem [#allocation2], 176
        %v2421 = vld [vmem:[%s2420] ss:$8 sm:$0x3]
        %v2422 = vmul.f32 %v2419, %v2419
        %v2424 = vperm.slane %v2422, 0
        %v2425 = vperm.slane %v2422, 1
        %v2428 = vsub.f32 %v2340, %v2424
        %v2429 = vsub.f32 %v2341, %v2425
        %v2430 = vmul.f32 %v2421, %v2421
        %v2432 = vperm.slane %v2430, 0
        %v2433 = vperm.slane %v2430, 1
        %v2436 = vadd.f32 %v2428, %v2432
        %v2437 = vadd.f32 %v2429, %v2433
        %v2438 = vld [vmem:[#allocation2 + $0x30] sm:$0xfe]
        %v2439 = vld [vmem:[#allocation2 + $0x38] sm:$0xfe]
        %v2440 = vld [vmem:[#allocation2 + $0xb0] sm:$0x1]
        %v2441 = vld [vmem:[#allocation2 + $0xb8] sm:$0x1]
        %v2448 = vrot.slane %v2438, 1
        %v2449 = vsel %vm1477, %v2448, %v1484
        %v2450 = vrot.slane %v2439, 1
        %v2451 = vsel %vm1477, %v2450, %v1486
        %v2452 = vrot.slane %v2342, 1
        %v2453 = vsel %vm1477, %v1504, %v2452
        %v2454 = vrot.slane %v2343, 1
        %v2455 = vsel %vm1477, %v1506, %v2454
        %v2456 = vrot.slane %v2440, 1
        %v2457 = vsel %vm1477, %v2452, %v2456
        %v2458 = vrot.slane %v2441, 1
        %v2459 = vsel %vm1477, %v2454, %v2458
        %v2466 = vmul.f32 %v285, %v2449
        %v2467 = vmul.f32 %v286, %v2451
        %v2468 = vmul.f32 %v287, %v1489
        %v2469 = vmul.f32 %v288, %v1491
        %v2470 = vmul.f32 %v289, %v1493
        %v2471 = vmul.f32 %v290, %v1495
        %v2472 = vmul.f32 %v291, %v1497
        %v2473 = vmul.f32 %v292, %v1499
        %v2474 = vmul.f32 %v293, %v1501
        %v2475 = vmul.f32 %v294, %v1503
        %v2476 = vmul.f32 %v295, %v1505
        %v2477 = vmul.f32 %v296, %v1507
        %v2478 = vmul.f32 %v297, %v2453
        %v2479 = vmul.f32 %v298, %v2455
        %v2480 = vmul.f32 %v299, %v2457
        %v2481 = vmul.f32 %v300, %v2459
        %v2482 = vadd.f32 %v2466, %v2468
        %v2483 = vadd.f32 %v2482, %v2470
        %v2484 = vadd.f32 %v2483, %v2472
        %v2485 = vadd.f32 %v2484, %v2474
        %v2486 = vadd.f32 %v2485, %v2476
        %v2487 = vadd.f32 %v2486, %v2478
        %v2488 = vadd.f32 %v2487, %v2480
        %v2489 = vrot.slane %v2488, 4
        %v2490 = vadd.f32 %v2488, %v2489
        %v2491 = vrot.slane %v2490, 2
        %v2492 = vadd.f32 %v2490, %v2491
        %v2493 = vrot.slane %v2492, 1
        %v2494 = vadd.f32 %v2492, %v2493
        %v2495 = vadd.f32 %v2467, %v2469
        %v2496 = vadd.f32 %v2495, %v2471
        %v2497 = vadd.f32 %v2496, %v2473
        %v2498 = vadd.f32 %v2497, %v2475
        %v2499 = vadd.f32 %v2498, %v2477
        %v2500 = vadd.f32 %v2499, %v2479
        %v2501 = vadd.f32 %v2500, %v2481
        %v2502 = vrot.slane %v2501, 4
        %v2503 = vadd.f32 %v2501, %v2502
        %v2504 = vrot.slane %v2503, 2
        %v2505 = vadd.f32 %v2503, %v2504
        %v2506 = vrot.slane %v2505, 1
        %v2507 = vadd.f32 %v2505, %v2506
        %v2508 = vmul.f32 %v329, %v2436
        %v2509 = vmul.f32 %v342, %v2437
        %v2510 = vadd.f32 %v2508, 1e-12
        %v2511 = vadd.f32 %v2509, 1e-12
        %v2512 = vrsqrt.pop %v2510
        %v2513 = vmul.f32 %v2512, %v2510
        %v2514 = vmul.f32 %v2513, %v2512
        %v2515 = vmul.f32 0.5, %v2514
        %v2516 = vsub.f32 1.5, %v2515
        %v2517 = vmul.f32 %v2512, %v2516
        %vm2518 = vweird.f32 %v2510
        %vm2519 = vweird.f32 %v2512
        %vm2520 = vmor %vm2518, %vm2519
        %v2521 = vsel %vm2520, %v2512, %v2517
        %v2522 = vrsqrt.pop %v2511
        %v2523 = vmul.f32 %v2522, %v2511
        %v2524 = vmul.f32 %v2523, %v2522
        %v2525 = vmul.f32 0.5, %v2524
        %v2526 = vsub.f32 1.5, %v2525
        %v2527 = vmul.f32 %v2522, %v2526
        %vm2528 = vweird.f32 %v2511
        %vm2529 = vweird.f32 %v2522
        %vm2530 = vmor %vm2528, %vm2529
        %v2531 = vsel %vm2530, %v2522, %v2527
        %v2532 = vmul.f32 %v2494, %v2521
        %v2533 = vmul.f32 %v2507, %v2531
        %vm2534 = vcmp.gt.f32.partialorder %v2532, %v2414
        %vm2535 = vcmp.gt.f32.partialorder %v2533, %v2415
        %v2536 = vsel %vm2534, %v2532, %v2414
        %v2537 = vsel %vm2535, %v2533, %v2415
        %v2538 = vsel %vm2534, 25.0, %v2416
        %v2539 = vsel %vm2535, 25.0, %v2417
        %s2540 = scalar_lea.vmem [#allocation2], 49
        %v2541 = vld [vmem:[%s2540] ss:$8 sm:$0x3]
        %s2542 = scalar_lea.vmem [#allocation2], 177
        %v2543 = vld [vmem:[%s2542] ss:$8 sm:$0x3]
        %v2544 = vmul.f32 %v2541, %v2541
        %v2546 = vperm.slane %v2544, 0
        %v2547 = vperm.slane %v2544, 1
        %v2550 = vsub.f32 %v2436, %v2546
        %v2551 = vsub.f32 %v2437, %v2547
        %v2552 = vmul.f32 %v2543, %v2543
        %v2554 = vperm.slane %v2552, 0
        %v2555 = vperm.slane %v2552, 1
        %v2558 = vadd.f32 %v2550, %v2554
        %v2559 = vadd.f32 %v2551, %v2555
        %v2560 = vld [vmem:[#allocation2 + $0x30] sm:$0xfc]
        %v2561 = vld [vmem:[#allocation2 + $0x38] sm:$0xfc]
        %v2562 = vld [vmem:[#allocation2 + $0xb0] sm:$0x3]
        %v2563 = vld [vmem:[#allocation2 + $0xb8] sm:$0x3]
        %v2568 = vrot.slane %v2560, 2
        %v2569 = vsel %vm373, %v2568, %v478
        %v2570 = vrot.slane %v2561, 2
        %v2571 = vsel %vm373, %v2570, %v480
        %v2572 = vrot.slane %v2342, 2
        %v2573 = vsel %vm373, %v1634, %v2572
        %v2574 = vrot.slane %v2343, 2
        %v2575 = vsel %vm373, %v1636, %v2574
        %v2576 = vrot.slane %v2562, 2
        %v2577 = vsel %vm373, %v2572, %v2576
        %v2578 = vrot.slane %v2563, 2
        %v2579 = vsel %vm373, %v2574, %v2578
        %v2586 = vmul.f32 %v285, %v2569
        %v2587 = vmul.f32 %v286, %v2571
        %v2588 = vmul.f32 %v287, %v483
        %v2589 = vmul.f32 %v288, %v485
        %v2590 = vmul.f32 %v289, %v487
        %v2591 = vmul.f32 %v290, %v489
        %v2592 = vmul.f32 %v291, %v491
        %v2593 = vmul.f32 %v292, %v493
        %v2594 = vmul.f32 %v293, %v495
        %v2595 = vmul.f32 %v294, %v497
        %v2596 = vmul.f32 %v295, %v1635
        %v2597 = vmul.f32 %v296, %v1637
        %v2598 = vmul.f32 %v297, %v2573
        %v2599 = vmul.f32 %v298, %v2575
        %v2600 = vmul.f32 %v299, %v2577
        %v2601 = vmul.f32 %v300, %v2579
        %v2602 = vadd.f32 %v2586, %v2588
        %v2603 = vadd.f32 %v2602, %v2590
        %v2604 = vadd.f32 %v2603, %v2592
        %v2605 = vadd.f32 %v2604, %v2594
        %v2606 = vadd.f32 %v2605, %v2596
        %v2607 = vadd.f32 %v2606, %v2598
        %v2608 = vadd.f32 %v2607, %v2600
        %v2609 = vrot.slane %v2608, 4
        %v2610 = vadd.f32 %v2608, %v2609
        %v2611 = vrot.slane %v2610, 2
        %v2612 = vadd.f32 %v2610, %v2611
        %v2613 = vrot.slane %v2612, 1
        %v2614 = vadd.f32 %v2612, %v2613
        %v2615 = vadd.f32 %v2587, %v2589
        %v2616 = vadd.f32 %v2615, %v2591
        %v2617 = vadd.f32 %v2616, %v2593
        %v2618 = vadd.f32 %v2617, %v2595
        %v2619 = vadd.f32 %v2618, %v2597
        %v2620 = vadd.f32 %v2619, %v2599
        %v2621 = vadd.f32 %v2620, %v2601
        %v2622 = vrot.slane %v2621, 4
        %v2623 = vadd.f32 %v2621, %v2622
        %v2624 = vrot.slane %v2623, 2
        %v2625 = vadd.f32 %v2623, %v2624
        %v2626 = vrot.slane %v2625, 1
        %v2627 = vadd.f32 %v2625, %v2626
        %v2628 = vmul.f32 %v329, %v2558
        %v2629 = vmul.f32 %v342, %v2559
        %v2630 = vadd.f32 %v2628, 1e-12
        %v2631 = vadd.f32 %v2629, 1e-12
        %v2632 = vrsqrt.pop %v2630
        %v2633 = vmul.f32 %v2632, %v2630
        %v2634 = vmul.f32 %v2633, %v2632
        %v2635 = vmul.f32 0.5, %v2634
        %v2636 = vsub.f32 1.5, %v2635
        %v2637 = vmul.f32 %v2632, %v2636
        %vm2638 = vweird.f32 %v2630
        %vm2639 = vweird.f32 %v2632
        %vm2640 = vmor %vm2638, %vm2639
        %v2641 = vsel %vm2640, %v2632, %v2637
        %v2642 = vrsqrt.pop %v2631
        %v2643 = vmul.f32 %v2642, %v2631
        %v2644 = vmul.f32 %v2643, %v2642
        %v2645 = vmul.f32 0.5, %v2644
        %v2646 = vsub.f32 1.5, %v2645
        %v2647 = vmul.f32 %v2642, %v2646
        %vm2648 = vweird.f32 %v2631
        %vm2649 = vweird.f32 %v2642
        %vm2650 = vmor %vm2648, %vm2649
        %v2651 = vsel %vm2650, %v2642, %v2647
        %v2652 = vmul.f32 %v2614, %v2641
        %v2653 = vmul.f32 %v2627, %v2651
        %vm2654 = vcmp.gt.f32.partialorder %v2652, %v2536
        %vm2655 = vcmp.gt.f32.partialorder %v2653, %v2537
        %v2656 = vsel %vm2654, %v2652, %v2536
        %v2657 = vsel %vm2655, %v2653, %v2537
        %v2658 = vsel %vm2654, 26.0, %v2538
        %v2659 = vsel %vm2655, 26.0, %v2539
        %s2660 = scalar_lea.vmem [#allocation2], 50
        %v2661 = vld [vmem:[%s2660] ss:$8 sm:$0x3]
        %s2662 = scalar_lea.vmem [#allocation2], 178
        %v2663 = vld [vmem:[%s2662] ss:$8 sm:$0x3]
        %v2664 = vmul.f32 %v2661, %v2661
        %v2666 = vperm.slane %v2664, 0
        %v2667 = vperm.slane %v2664, 1
        %v2670 = vsub.f32 %v2558, %v2666
        %v2671 = vsub.f32 %v2559, %v2667
        %v2672 = vmul.f32 %v2663, %v2663
        %v2674 = vperm.slane %v2672, 0
        %v2675 = vperm.slane %v2672, 1
        %v2678 = vadd.f32 %v2670, %v2674
        %v2679 = vadd.f32 %v2671, %v2675
        %v2680 = vld [vmem:[#allocation2 + $0x30] sm:$0xf8]
        %v2681 = vld [vmem:[#allocation2 + $0x38] sm:$0xf8]
        %v2682 = vld [vmem:[#allocation2 + $0xb0] sm:$0x7]
        %v2683 = vld [vmem:[#allocation2 + $0xb8] sm:$0x7]
        %v2688 = vrot.slane %v2680, 3
        %v2689 = vsel %vm614, %v2688, %v625
        %v2690 = vrot.slane %v2681, 3
        %v2691 = vsel %vm614, %v2690, %v627
        %v2692 = vrot.slane %v2342, 3
        %v2693 = vsel %vm614, %v1754, %v2692
        %v2694 = vrot.slane %v2343, 3
        %v2695 = vsel %vm614, %v1756, %v2694
        %v2696 = vrot.slane %v2682, 3
        %v2697 = vsel %vm614, %v2692, %v2696
        %v2698 = vrot.slane %v2683, 3
        %v2699 = vsel %vm614, %v2694, %v2698
        %v2706 = vmul.f32 %v285, %v2689
        %v2707 = vmul.f32 %v286, %v2691
        %v2708 = vmul.f32 %v287, %v630
        %v2709 = vmul.f32 %v288, %v632
        %v2710 = vmul.f32 %v289, %v634
        %v2711 = vmul.f32 %v290, %v636
        %v2712 = vmul.f32 %v291, %v638
        %v2713 = vmul.f32 %v292, %v640
        %v2714 = vmul.f32 %v293, %v642
        %v2715 = vmul.f32 %v294, %v644
        %v2716 = vmul.f32 %v295, %v1755
        %v2717 = vmul.f32 %v296, %v1757
        %v2718 = vmul.f32 %v297, %v2693
        %v2719 = vmul.f32 %v298, %v2695
        %v2720 = vmul.f32 %v299, %v2697
        %v2721 = vmul.f32 %v300, %v2699
        %v2722 = vadd.f32 %v2706, %v2708
        %v2723 = vadd.f32 %v2722, %v2710
        %v2724 = vadd.f32 %v2723, %v2712
        %v2725 = vadd.f32 %v2724, %v2714
        %v2726 = vadd.f32 %v2725, %v2716
        %v2727 = vadd.f32 %v2726, %v2718
        %v2728 = vadd.f32 %v2727, %v2720
        %v2729 = vrot.slane %v2728, 4
        %v2730 = vadd.f32 %v2728, %v2729
        %v2731 = vrot.slane %v2730, 2
        %v2732 = vadd.f32 %v2730, %v2731
        %v2733 = vrot.slane %v2732, 1
        %v2734 = vadd.f32 %v2732, %v2733
        %v2735 = vadd.f32 %v2707, %v2709
        %v2736 = vadd.f32 %v2735, %v2711
        %v2737 = vadd.f32 %v2736, %v2713
        %v2738 = vadd.f32 %v2737, %v2715
        %v2739 = vadd.f32 %v2738, %v2717
        %v2740 = vadd.f32 %v2739, %v2719
        %v2741 = vadd.f32 %v2740, %v2721
        %v2742 = vrot.slane %v2741, 4
        %v2743 = vadd.f32 %v2741, %v2742
        %v2744 = vrot.slane %v2743, 2
        %v2745 = vadd.f32 %v2743, %v2744
        %v2746 = vrot.slane %v2745, 1
        %v2747 = vadd.f32 %v2745, %v2746
        %v2748 = vmul.f32 %v329, %v2678
        %v2749 = vmul.f32 %v342, %v2679
        %v2750 = vadd.f32 %v2748, 1e-12
        %v2751 = vadd.f32 %v2749, 1e-12
        %v2752 = vrsqrt.pop %v2750
        %v2753 = vmul.f32 %v2752, %v2750
        %v2754 = vmul.f32 %v2753, %v2752
        %v2755 = vmul.f32 0.5, %v2754
        %v2756 = vsub.f32 1.5, %v2755
        %v2757 = vmul.f32 %v2752, %v2756
        %vm2758 = vweird.f32 %v2750
        %vm2759 = vweird.f32 %v2752
        %vm2760 = vmor %vm2758, %vm2759
        %v2761 = vsel %vm2760, %v2752, %v2757
        %v2762 = vrsqrt.pop %v2751
        %v2763 = vmul.f32 %v2762, %v2751
        %v2764 = vmul.f32 %v2763, %v2762
        %v2765 = vmul.f32 0.5, %v2764
        %v2766 = vsub.f32 1.5, %v2765
        %v2767 = vmul.f32 %v2762, %v2766
        %vm2768 = vweird.f32 %v2751
        %vm2769 = vweird.f32 %v2762
        %vm2770 = vmor %vm2768, %vm2769
        %v2771 = vsel %vm2770, %v2762, %v2767
        %v2772 = vmul.f32 %v2734, %v2761
        %v2773 = vmul.f32 %v2747, %v2771
        %vm2774 = vcmp.gt.f32.partialorder %v2772, %v2656
        %vm2775 = vcmp.gt.f32.partialorder %v2773, %v2657
        %v2776 = vsel %vm2774, %v2772, %v2656
        %v2777 = vsel %vm2775, %v2773, %v2657
        %v2778 = vsel %vm2774, 27.0, %v2658
        %v2779 = vsel %vm2775, 27.0, %v2659
        %s2780 = scalar_lea.vmem [#allocation2], 51
        %v2781 = vld [vmem:[%s2780] ss:$8 sm:$0x3]
        %s2782 = scalar_lea.vmem [#allocation2], 179
        %v2783 = vld [vmem:[%s2782] ss:$8 sm:$0x3]
        %v2784 = vmul.f32 %v2781, %v2781
        %v2786 = vperm.slane %v2784, 0
        %v2787 = vperm.slane %v2784, 1
        %v2790 = vsub.f32 %v2678, %v2786
        %v2791 = vsub.f32 %v2679, %v2787
        %v2792 = vmul.f32 %v2783, %v2783
        %v2794 = vperm.slane %v2792, 0
        %v2795 = vperm.slane %v2792, 1
        %v2798 = vadd.f32 %v2790, %v2794
        %v2799 = vadd.f32 %v2791, %v2795
        %v2800 = vld [vmem:[#allocation2 + $0x30] sm:$0xf0]
        %v2801 = vld [vmem:[#allocation2 + $0x38] sm:$0xf0]
        %v2802 = vld [vmem:[#allocation2 + $0xb0] sm:$0xf]
        %v2803 = vld [vmem:[#allocation2 + $0xb8] sm:$0xf]
        %v2808 = vrot.slane %v2800, 4
        %v2809 = vsel %vm767, %v2808, %v778
        %v2810 = vrot.slane %v2801, 4
        %v2811 = vsel %vm767, %v2810, %v780
        %v2812 = vrot.slane %v2342, 4
        %v2813 = vsel %vm767, %v1874, %v2812
        %v2814 = vrot.slane %v2343, 4
        %v2815 = vsel %vm767, %v1876, %v2814
        %v2816 = vrot.slane %v2802, 4
        %v2817 = vsel %vm767, %v2812, %v2816
        %v2818 = vrot.slane %v2803, 4
        %v2819 = vsel %vm767, %v2814, %v2818
        %v2826 = vmul.f32 %v285, %v2809
        %v2827 = vmul.f32 %v286, %v2811
        %v2828 = vmul.f32 %v287, %v783
        %v2829 = vmul.f32 %v288, %v785
        %v2830 = vmul.f32 %v289, %v787
        %v2831 = vmul.f32 %v290, %v789
        %v2832 = vmul.f32 %v291, %v791
        %v2833 = vmul.f32 %v292, %v793
        %v2834 = vmul.f32 %v293, %v795
        %v2835 = vmul.f32 %v294, %v797
        %v2836 = vmul.f32 %v295, %v1875
        %v2837 = vmul.f32 %v296, %v1877
        %v2838 = vmul.f32 %v297, %v2813
        %v2839 = vmul.f32 %v298, %v2815
        %v2840 = vmul.f32 %v299, %v2817
        %v2841 = vmul.f32 %v300, %v2819
        %v2842 = vadd.f32 %v2826, %v2828
        %v2843 = vadd.f32 %v2842, %v2830
        %v2844 = vadd.f32 %v2843, %v2832
        %v2845 = vadd.f32 %v2844, %v2834
        %v2846 = vadd.f32 %v2845, %v2836
        %v2847 = vadd.f32 %v2846, %v2838
        %v2848 = vadd.f32 %v2847, %v2840
        %v2849 = vrot.slane %v2848, 4
        %v2850 = vadd.f32 %v2848, %v2849
        %v2851 = vrot.slane %v2850, 2
        %v2852 = vadd.f32 %v2850, %v2851
        %v2853 = vrot.slane %v2852, 1
        %v2854 = vadd.f32 %v2852, %v2853
        %v2855 = vadd.f32 %v2827, %v2829
        %v2856 = vadd.f32 %v2855, %v2831
        %v2857 = vadd.f32 %v2856, %v2833
        %v2858 = vadd.f32 %v2857, %v2835
        %v2859 = vadd.f32 %v2858, %v2837
        %v2860 = vadd.f32 %v2859, %v2839
        %v2861 = vadd.f32 %v2860, %v2841
        %v2862 = vrot.slane %v2861, 4
        %v2863 = vadd.f32 %v2861, %v2862
        %v2864 = vrot.slane %v2863, 2
        %v2865 = vadd.f32 %v2863, %v2864
        %v2866 = vrot.slane %v2865, 1
        %v2867 = vadd.f32 %v2865, %v2866
        %v2868 = vmul.f32 %v329, %v2798
        %v2869 = vmul.f32 %v342, %v2799
        %v2870 = vadd.f32 %v2868, 1e-12
        %v2871 = vadd.f32 %v2869, 1e-12
        %v2872 = vrsqrt.pop %v2870
        %v2873 = vmul.f32 %v2872, %v2870
        %v2874 = vmul.f32 %v2873, %v2872
        %v2875 = vmul.f32 0.5, %v2874
        %v2876 = vsub.f32 1.5, %v2875
        %v2877 = vmul.f32 %v2872, %v2876
        %vm2878 = vweird.f32 %v2870
        %vm2879 = vweird.f32 %v2872
        %vm2880 = vmor %vm2878, %vm2879
        %v2881 = vsel %vm2880, %v2872, %v2877
        %v2882 = vrsqrt.pop %v2871
        %v2883 = vmul.f32 %v2882, %v2871
        %v2884 = vmul.f32 %v2883, %v2882
        %v2885 = vmul.f32 0.5, %v2884
        %v2886 = vsub.f32 1.5, %v2885
        %v2887 = vmul.f32 %v2882, %v2886
        %vm2888 = vweird.f32 %v2871
        %vm2889 = vweird.f32 %v2882
        %vm2890 = vmor %vm2888, %vm2889
        %v2891 = vsel %vm2890, %v2882, %v2887
        %v2892 = vmul.f32 %v2854, %v2881
        %v2893 = vmul.f32 %v2867, %v2891
        %vm2894 = vcmp.gt.f32.partialorder %v2892, %v2776
        %vm2895 = vcmp.gt.f32.partialorder %v2893, %v2777
        %v2896 = vsel %vm2894, %v2892, %v2776
        %v2897 = vsel %vm2895, %v2893, %v2777
        %v2898 = vsel %vm2894, 28.0, %v2778
        %v2899 = vsel %vm2895, 28.0, %v2779
        %s2900 = scalar_lea.vmem [#allocation2], 52
        %v2901 = vld [vmem:[%s2900] ss:$8 sm:$0x3]
        %s2902 = scalar_lea.vmem [#allocation2], 180
        %v2903 = vld [vmem:[%s2902] ss:$8 sm:$0x3]
        %v2904 = vmul.f32 %v2901, %v2901
        %v2906 = vperm.slane %v2904, 0
        %v2907 = vperm.slane %v2904, 1
        %v2910 = vsub.f32 %v2798, %v2906
        %v2911 = vsub.f32 %v2799, %v2907
        %v2912 = vmul.f32 %v2903, %v2903
        %v2914 = vperm.slane %v2912, 0
        %v2915 = vperm.slane %v2912, 1
        %v2918 = vadd.f32 %v2910, %v2914
        %v2919 = vadd.f32 %v2911, %v2915
        %v2920 = vld [vmem:[#allocation2 + $0x30] sm:$0xe0]
        %v2921 = vld [vmem:[#allocation2 + $0x38] sm:$0xe0]
        %v2922 = vld [vmem:[#allocation2 + $0xb0] sm:$0x1f]
        %v2923 = vld [vmem:[#allocation2 + $0xb8] sm:$0x1f]
        %v2928 = vrot.slane %v2920, 5
        %v2929 = vsel %vm920, %v2928, %v931
        %v2930 = vrot.slane %v2921, 5
        %v2931 = vsel %vm920, %v2930, %v933
        %v2932 = vrot.slane %v2342, 5
        %v2933 = vsel %vm920, %v1994, %v2932
        %v2934 = vrot.slane %v2343, 5
        %v2935 = vsel %vm920, %v1996, %v2934
        %v2936 = vrot.slane %v2922, 5
        %v2937 = vsel %vm920, %v2932, %v2936
        %v2938 = vrot.slane %v2923, 5
        %v2939 = vsel %vm920, %v2934, %v2938
        %v2946 = vmul.f32 %v285, %v2929
        %v2947 = vmul.f32 %v286, %v2931
        %v2948 = vmul.f32 %v287, %v936
        %v2949 = vmul.f32 %v288, %v938
        %v2950 = vmul.f32 %v289, %v940
        %v2951 = vmul.f32 %v290, %v942
        %v2952 = vmul.f32 %v291, %v944
        %v2953 = vmul.f32 %v292, %v946
        %v2954 = vmul.f32 %v293, %v948
        %v2955 = vmul.f32 %v294, %v950
        %v2956 = vmul.f32 %v295, %v1995
        %v2957 = vmul.f32 %v296, %v1997
        %v2958 = vmul.f32 %v297, %v2933
        %v2959 = vmul.f32 %v298, %v2935
        %v2960 = vmul.f32 %v299, %v2937
        %v2961 = vmul.f32 %v300, %v2939
        %v2962 = vadd.f32 %v2946, %v2948
        %v2963 = vadd.f32 %v2962, %v2950
        %v2964 = vadd.f32 %v2963, %v2952
        %v2965 = vadd.f32 %v2964, %v2954
        %v2966 = vadd.f32 %v2965, %v2956
        %v2967 = vadd.f32 %v2966, %v2958
        %v2968 = vadd.f32 %v2967, %v2960
        %v2969 = vrot.slane %v2968, 4
        %v2970 = vadd.f32 %v2968, %v2969
        %v2971 = vrot.slane %v2970, 2
        %v2972 = vadd.f32 %v2970, %v2971
        %v2973 = vrot.slane %v2972, 1
        %v2974 = vadd.f32 %v2972, %v2973
        %v2975 = vadd.f32 %v2947, %v2949
        %v2976 = vadd.f32 %v2975, %v2951
        %v2977 = vadd.f32 %v2976, %v2953
        %v2978 = vadd.f32 %v2977, %v2955
        %v2979 = vadd.f32 %v2978, %v2957
        %v2980 = vadd.f32 %v2979, %v2959
        %v2981 = vadd.f32 %v2980, %v2961
        %v2982 = vrot.slane %v2981, 4
        %v2983 = vadd.f32 %v2981, %v2982
        %v2984 = vrot.slane %v2983, 2
        %v2985 = vadd.f32 %v2983, %v2984
        %v2986 = vrot.slane %v2985, 1
        %v2987 = vadd.f32 %v2985, %v2986
        %v2988 = vmul.f32 %v329, %v2918
        %v2989 = vmul.f32 %v342, %v2919
        %v2990 = vadd.f32 %v2988, 1e-12
        %v2991 = vadd.f32 %v2989, 1e-12
        %v2992 = vrsqrt.pop %v2990
        %v2993 = vmul.f32 %v2992, %v2990
        %v2994 = vmul.f32 %v2993, %v2992
        %v2995 = vmul.f32 0.5, %v2994
        %v2996 = vsub.f32 1.5, %v2995
        %v2997 = vmul.f32 %v2992, %v2996
        %vm2998 = vweird.f32 %v2990
        %vm2999 = vweird.f32 %v2992
        %vm3000 = vmor %vm2998, %vm2999
        %v3001 = vsel %vm3000, %v2992, %v2997
        %v3002 = vrsqrt.pop %v2991
        %v3003 = vmul.f32 %v3002, %v2991
        %v3004 = vmul.f32 %v3003, %v3002
        %v3005 = vmul.f32 0.5, %v3004
        %v3006 = vsub.f32 1.5, %v3005
        %v3007 = vmul.f32 %v3002, %v3006
        %vm3008 = vweird.f32 %v2991
        %vm3009 = vweird.f32 %v3002
        %vm3010 = vmor %vm3008, %vm3009
        %v3011 = vsel %vm3010, %v3002, %v3007
        %v3012 = vmul.f32 %v2974, %v3001
        %v3013 = vmul.f32 %v2987, %v3011
        %vm3014 = vcmp.gt.f32.partialorder %v3012, %v2896
        %vm3015 = vcmp.gt.f32.partialorder %v3013, %v2897
        %v3016 = vsel %vm3014, %v3012, %v2896
        %v3017 = vsel %vm3015, %v3013, %v2897
        %v3018 = vsel %vm3014, 29.0, %v2898
        %v3019 = vsel %vm3015, 29.0, %v2899
        %s3020 = scalar_lea.vmem [#allocation2], 53
        %v3021 = vld [vmem:[%s3020] ss:$8 sm:$0x3]
        %s3022 = scalar_lea.vmem [#allocation2], 181
        %v3023 = vld [vmem:[%s3022] ss:$8 sm:$0x3]
        %v3024 = vmul.f32 %v3021, %v3021
        %v3026 = vperm.slane %v3024, 0
        %v3027 = vperm.slane %v3024, 1
        %v3030 = vsub.f32 %v2918, %v3026
        %v3031 = vsub.f32 %v2919, %v3027
        %v3032 = vmul.f32 %v3023, %v3023
        %v3034 = vperm.slane %v3032, 0
        %v3035 = vperm.slane %v3032, 1
        %v3038 = vadd.f32 %v3030, %v3034
        %v3039 = vadd.f32 %v3031, %v3035
        %v3040 = vld [vmem:[#allocation2 + $0x30] sm:$0xc0]
        %v3041 = vld [vmem:[#allocation2 + $0x38] sm:$0xc0]
        %v3042 = vld [vmem:[#allocation2 + $0xb0] sm:$0x3f]
        %v3043 = vld [vmem:[#allocation2 + $0xb8] sm:$0x3f]
        %v3048 = vrot.slane %v3040, 6
        %v3049 = vsel %vm1073, %v3048, %v1084
        %v3050 = vrot.slane %v3041, 6
        %v3051 = vsel %vm1073, %v3050, %v1086
        %v3052 = vrot.slane %v2342, 6
        %v3053 = vsel %vm1073, %v2114, %v3052
        %v3054 = vrot.slane %v2343, 6
        %v3055 = vsel %vm1073, %v2116, %v3054
        %v3056 = vrot.slane %v3042, 6
        %v3057 = vsel %vm1073, %v3052, %v3056
        %v3058 = vrot.slane %v3043, 6
        %v3059 = vsel %vm1073, %v3054, %v3058
        %v3066 = vmul.f32 %v285, %v3049
        %v3067 = vmul.f32 %v286, %v3051
        %v3068 = vmul.f32 %v287, %v1089
        %v3069 = vmul.f32 %v288, %v1091
        %v3070 = vmul.f32 %v289, %v1093
        %v3071 = vmul.f32 %v290, %v1095
        %v3072 = vmul.f32 %v291, %v1097
        %v3073 = vmul.f32 %v292, %v1099
        %v3074 = vmul.f32 %v293, %v1101
        %v3075 = vmul.f32 %v294, %v1103
        %v3076 = vmul.f32 %v295, %v2115
        %v3077 = vmul.f32 %v296, %v2117
        %v3078 = vmul.f32 %v297, %v3053
        %v3079 = vmul.f32 %v298, %v3055
        %v3080 = vmul.f32 %v299, %v3057
        %v3081 = vmul.f32 %v300, %v3059
        %v3082 = vadd.f32 %v3066, %v3068
        %v3083 = vadd.f32 %v3082, %v3070
        %v3084 = vadd.f32 %v3083, %v3072
        %v3085 = vadd.f32 %v3084, %v3074
        %v3086 = vadd.f32 %v3085, %v3076
        %v3087 = vadd.f32 %v3086, %v3078
        %v3088 = vadd.f32 %v3087, %v3080
        %v3089 = vrot.slane %v3088, 4
        %v3090 = vadd.f32 %v3088, %v3089
        %v3091 = vrot.slane %v3090, 2
        %v3092 = vadd.f32 %v3090, %v3091
        %v3093 = vrot.slane %v3092, 1
        %v3094 = vadd.f32 %v3092, %v3093
        %v3095 = vadd.f32 %v3067, %v3069
        %v3096 = vadd.f32 %v3095, %v3071
        %v3097 = vadd.f32 %v3096, %v3073
        %v3098 = vadd.f32 %v3097, %v3075
        %v3099 = vadd.f32 %v3098, %v3077
        %v3100 = vadd.f32 %v3099, %v3079
        %v3101 = vadd.f32 %v3100, %v3081
        %v3102 = vrot.slane %v3101, 4
        %v3103 = vadd.f32 %v3101, %v3102
        %v3104 = vrot.slane %v3103, 2
        %v3105 = vadd.f32 %v3103, %v3104
        %v3106 = vrot.slane %v3105, 1
        %v3107 = vadd.f32 %v3105, %v3106
        %v3108 = vmul.f32 %v329, %v3038
        %v3109 = vmul.f32 %v342, %v3039
        %v3110 = vadd.f32 %v3108, 1e-12
        %v3111 = vadd.f32 %v3109, 1e-12
        %v3112 = vrsqrt.pop %v3110
        %v3113 = vmul.f32 %v3112, %v3110
        %v3114 = vmul.f32 %v3113, %v3112
        %v3115 = vmul.f32 0.5, %v3114
        %v3116 = vsub.f32 1.5, %v3115
        %v3117 = vmul.f32 %v3112, %v3116
        %vm3118 = vweird.f32 %v3110
        %vm3119 = vweird.f32 %v3112
        %vm3120 = vmor %vm3118, %vm3119
        %v3121 = vsel %vm3120, %v3112, %v3117
        %v3122 = vrsqrt.pop %v3111
        %v3123 = vmul.f32 %v3122, %v3111
        %v3124 = vmul.f32 %v3123, %v3122
        %v3125 = vmul.f32 0.5, %v3124
        %v3126 = vsub.f32 1.5, %v3125
        %v3127 = vmul.f32 %v3122, %v3126
        %vm3128 = vweird.f32 %v3111
        %vm3129 = vweird.f32 %v3122
        %vm3130 = vmor %vm3128, %vm3129
        %v3131 = vsel %vm3130, %v3122, %v3127
        %v3132 = vmul.f32 %v3094, %v3121
        %v3133 = vmul.f32 %v3107, %v3131
        %vm3134 = vcmp.gt.f32.partialorder %v3132, %v3016
        %vm3135 = vcmp.gt.f32.partialorder %v3133, %v3017
        %v3136 = vsel %vm3134, %v3132, %v3016
        %v3137 = vsel %vm3135, %v3133, %v3017
        %v3138 = vsel %vm3134, 30.0, %v3018
        %v3139 = vsel %vm3135, 30.0, %v3019
        %s3140 = scalar_lea.vmem [#allocation2], 54
        %v3141 = vld [vmem:[%s3140] ss:$8 sm:$0x3]
        %s3142 = scalar_lea.vmem [#allocation2], 182
        %v3143 = vld [vmem:[%s3142] ss:$8 sm:$0x3]
        %v3144 = vmul.f32 %v3141, %v3141
        %v3146 = vperm.slane %v3144, 0
        %v3147 = vperm.slane %v3144, 1
        %v3150 = vsub.f32 %v3038, %v3146
        %v3151 = vsub.f32 %v3039, %v3147
        %v3152 = vmul.f32 %v3143, %v3143
        %v3154 = vperm.slane %v3152, 0
        %v3155 = vperm.slane %v3152, 1
        %v3158 = vadd.f32 %v3150, %v3154
        %v3159 = vadd.f32 %v3151, %v3155
        %v3160 = vld [vmem:[#allocation2 + $0x30] sm:$0x80]
        %v3161 = vld [vmem:[#allocation2 + $0x38] sm:$0x80]
        %v3162 = vld [vmem:[#allocation2 + $0xb0] sm:$0x7f]
        %v3163 = vld [vmem:[#allocation2 + $0xb8] sm:$0x7f]
        %v3168 = vrot.slane %v3160, 7
        %v3169 = vsel %vm1226, %v3168, %v1237
        %v3170 = vrot.slane %v3161, 7
        %v3171 = vsel %vm1226, %v3170, %v1239
        %v3172 = vrot.slane %v2342, 7
        %v3173 = vsel %vm1226, %v2234, %v3172
        %v3174 = vrot.slane %v2343, 7
        %v3175 = vsel %vm1226, %v2236, %v3174
        %v3176 = vrot.slane %v3162, 7
        %v3177 = vsel %vm1226, %v3172, %v3176
        %v3178 = vrot.slane %v3163, 7
        %v3179 = vsel %vm1226, %v3174, %v3178
        %v3186 = vmul.f32 %v285, %v3169
        %v3187 = vmul.f32 %v286, %v3171
        %v3188 = vmul.f32 %v287, %v1242
        %v3189 = vmul.f32 %v288, %v1244
        %v3190 = vmul.f32 %v289, %v1246
        %v3191 = vmul.f32 %v290, %v1248
        %v3192 = vmul.f32 %v291, %v1250
        %v3193 = vmul.f32 %v292, %v1252
        %v3194 = vmul.f32 %v293, %v1254
        %v3195 = vmul.f32 %v294, %v1256
        %v3196 = vmul.f32 %v295, %v2235
        %v3197 = vmul.f32 %v296, %v2237
        %v3198 = vmul.f32 %v297, %v3173
        %v3199 = vmul.f32 %v298, %v3175
        %v3200 = vmul.f32 %v299, %v3177
        %v3201 = vmul.f32 %v300, %v3179
        %v3202 = vadd.f32 %v3186, %v3188
        %v3203 = vadd.f32 %v3202, %v3190
        %v3204 = vadd.f32 %v3203, %v3192
        %v3205 = vadd.f32 %v3204, %v3194
        %v3206 = vadd.f32 %v3205, %v3196
        %v3207 = vadd.f32 %v3206, %v3198
        %v3208 = vadd.f32 %v3207, %v3200
        %v3209 = vrot.slane %v3208, 4
        %v3210 = vadd.f32 %v3208, %v3209
        %v3211 = vrot.slane %v3210, 2
        %v3212 = vadd.f32 %v3210, %v3211
        %v3213 = vrot.slane %v3212, 1
        %v3214 = vadd.f32 %v3212, %v3213
        %v3215 = vadd.f32 %v3187, %v3189
        %v3216 = vadd.f32 %v3215, %v3191
        %v3217 = vadd.f32 %v3216, %v3193
        %v3218 = vadd.f32 %v3217, %v3195
        %v3219 = vadd.f32 %v3218, %v3197
        %v3220 = vadd.f32 %v3219, %v3199
        %v3221 = vadd.f32 %v3220, %v3201
        %v3222 = vrot.slane %v3221, 4
        %v3223 = vadd.f32 %v3221, %v3222
        %v3224 = vrot.slane %v3223, 2
        %v3225 = vadd.f32 %v3223, %v3224
        %v3226 = vrot.slane %v3225, 1
        %v3227 = vadd.f32 %v3225, %v3226
        %v3228 = vmul.f32 %v329, %v3158
        %v3229 = vmul.f32 %v342, %v3159
        %v3230 = vadd.f32 %v3228, 1e-12
        %v3231 = vadd.f32 %v3229, 1e-12
        %v3232 = vrsqrt.pop %v3230
        %v3233 = vmul.f32 %v3232, %v3230
        %v3234 = vmul.f32 %v3233, %v3232
        %v3235 = vmul.f32 0.5, %v3234
        %v3236 = vsub.f32 1.5, %v3235
        %v3237 = vmul.f32 %v3232, %v3236
        %vm3238 = vweird.f32 %v3230
        %vm3239 = vweird.f32 %v3232
        %vm3240 = vmor %vm3238, %vm3239
        %v3241 = vsel %vm3240, %v3232, %v3237
        %v3242 = vrsqrt.pop %v3231
        %v3243 = vmul.f32 %v3242, %v3231
        %v3244 = vmul.f32 %v3243, %v3242
        %v3245 = vmul.f32 0.5, %v3244
        %v3246 = vsub.f32 1.5, %v3245
        %v3247 = vmul.f32 %v3242, %v3246
        %vm3248 = vweird.f32 %v3231
        %vm3249 = vweird.f32 %v3242
        %vm3250 = vmor %vm3248, %vm3249
        %v3251 = vsel %vm3250, %v3242, %v3247
        %v3252 = vmul.f32 %v3214, %v3241
        %v3253 = vmul.f32 %v3227, %v3251
        %vm3254 = vcmp.gt.f32.partialorder %v3252, %v3136
        %vm3255 = vcmp.gt.f32.partialorder %v3253, %v3137
        %v3256 = vsel %vm3254, %v3252, %v3136
        %v3257 = vsel %vm3255, %v3253, %v3137
        %v3258 = vsel %vm3254, 31.0, %v3138
        %v3259 = vsel %vm3255, 31.0, %v3139
        %s3260 = scalar_lea.vmem [#allocation2], 55
        %v3261 = vld [vmem:[%s3260] ss:$8 sm:$0x3]
        %s3262 = scalar_lea.vmem [#allocation2], 183
        %v3263 = vld [vmem:[%s3262] ss:$8 sm:$0x3]
        %v3264 = vmul.f32 %v3261, %v3261
        %v3266 = vperm.slane %v3264, 0
        %v3267 = vperm.slane %v3264, 1
        %v3270 = vsub.f32 %v3158, %v3266
        %v3271 = vsub.f32 %v3159, %v3267
        %v3272 = vmul.f32 %v3263, %v3263
        %v3274 = vperm.slane %v3272, 0
        %v3275 = vperm.slane %v3272, 1
        %v3278 = vadd.f32 %v3270, %v3274
        %v3279 = vadd.f32 %v3271, %v3275
        %v3280 = vld [vmem:[#allocation2 + $0xb0] sm:$0xff]
        %v3281 = vld [vmem:[#allocation2 + $0xb8] sm:$0xff]
        %v3282 = vmul.f32 %v285, %v293
        %v3283 = vmul.f32 %v286, %v294
        %v3284 = vmul.f32 %v287, %v295
        %v3285 = vmul.f32 %v288, %v296
        %v3286 = vmul.f32 %v289, %v297
        %v3287 = vmul.f32 %v290, %v298
        %v3288 = vmul.f32 %v291, %v299
        %v3289 = vmul.f32 %v292, %v300
        %v3290 = vmul.f32 %v293, %v345
        %v3291 = vmul.f32 %v294, %v346
        %v3292 = vmul.f32 %v295, %v1371
        %v3293 = vmul.f32 %v296, %v1372
        %v3294 = vmul.f32 %v297, %v2342
        %v3295 = vmul.f32 %v298, %v2343
        %v3296 = vmul.f32 %v299, %v3280
        %v3297 = vmul.f32 %v300, %v3281
        %v3298 = vadd.f32 %v3282, %v3284
        %v3299 = vadd.f32 %v3298, %v3286
        %v3300 = vadd.f32 %v3299, %v3288
        %v3301 = vadd.f32 %v3300, %v3290
        %v3302 = vadd.f32 %v3301, %v3292
        %v3303 = vadd.f32 %v3302, %v3294
        %v3304 = vadd.f32 %v3303, %v3296
        %v3305 = vrot.slane %v3304, 4
        %v3306 = vadd.f32 %v3304, %v3305
        %v3307 = vrot.slane %v3306, 2
        %v3308 = vadd.f32 %v3306, %v3307
        %v3309 = vrot.slane %v3308, 1
        %v3310 = vadd.f32 %v3308, %v3309
        %v3311 = vadd.f32 %v3283, %v3285
        %v3312 = vadd.f32 %v3311, %v3287
        %v3313 = vadd.f32 %v3312, %v3289
        %v3314 = vadd.f32 %v3313, %v3291
        %v3315 = vadd.f32 %v3314, %v3293
        %v3316 = vadd.f32 %v3315, %v3295
        %v3317 = vadd.f32 %v3316, %v3297
        %v3318 = vrot.slane %v3317, 4
        %v3319 = vadd.f32 %v3317, %v3318
        %v3320 = vrot.slane %v3319, 2
        %v3321 = vadd.f32 %v3319, %v3320
        %v3322 = vrot.slane %v3321, 1
        %v3323 = vadd.f32 %v3321, %v3322
        %v3324 = vmul.f32 %v329, %v3278
        %v3325 = vmul.f32 %v342, %v3279
        %v3326 = vadd.f32 %v3324, 1e-12
        %v3327 = vadd.f32 %v3325, 1e-12
        %v3328 = vrsqrt.pop %v3326
        %v3329 = vmul.f32 %v3328, %v3326
        %v3330 = vmul.f32 %v3329, %v3328
        %v3331 = vmul.f32 0.5, %v3330
        %v3332 = vsub.f32 1.5, %v3331
        %v3333 = vmul.f32 %v3328, %v3332
        %vm3334 = vweird.f32 %v3326
        %vm3335 = vweird.f32 %v3328
        %vm3336 = vmor %vm3334, %vm3335
        %v3337 = vsel %vm3336, %v3328, %v3333
        %v3338 = vrsqrt.pop %v3327
        %v3339 = vmul.f32 %v3338, %v3327
        %v3340 = vmul.f32 %v3339, %v3338
        %v3341 = vmul.f32 0.5, %v3340
        %v3342 = vsub.f32 1.5, %v3341
        %v3343 = vmul.f32 %v3338, %v3342
        %vm3344 = vweird.f32 %v3327
        %vm3345 = vweird.f32 %v3338
        %vm3346 = vmor %vm3344, %vm3345
        %v3347 = vsel %vm3346, %v3338, %v3343
        %v3348 = vmul.f32 %v3310, %v3337
        %v3349 = vmul.f32 %v3323, %v3347
        %vm3350 = vcmp.gt.f32.partialorder %v3348, %v3256
        %vm3351 = vcmp.gt.f32.partialorder %v3349, %v3257
        %v3352 = vsel %vm3350, %v3348, %v3256
        %v3353 = vsel %vm3351, %v3349, %v3257
        %v3354 = vsel %vm3350, 32.0, %v3258
        %v3355 = vsel %vm3351, 32.0, %v3259
        %s3356 = scalar_lea.vmem [#allocation2], 64
        %v3357 = vld [vmem:[%s3356] ss:$8 sm:$0x3]
        %s3358 = scalar_lea.vmem [#allocation2], 192
        %v3359 = vld [vmem:[%s3358] ss:$8 sm:$0x3]
        %v3360 = vmul.f32 %v3357, %v3357
        %v3362 = vperm.slane %v3360, 0
        %v3363 = vperm.slane %v3360, 1
        %v3366 = vsub.f32 %v3278, %v3362
        %v3367 = vsub.f32 %v3279, %v3363
        %v3368 = vmul.f32 %v3359, %v3359
        %v3370 = vperm.slane %v3368, 0
        %v3371 = vperm.slane %v3368, 1
        %v3374 = vadd.f32 %v3366, %v3370
        %v3375 = vadd.f32 %v3367, %v3371
        %v3376 = vld [vmem:[#allocation2 + $0x40] sm:$0xfe]
        %v3377 = vld [vmem:[#allocation2 + $0x48] sm:$0xfe]
        %v3378 = vld [vmem:[#allocation2 + $0xc0] sm:$0x1]
        %v3379 = vld [vmem:[#allocation2 + $0xc8] sm:$0x1]
        %v3386 = vrot.slane %v3376, 1
        %v3387 = vsel %vm1477, %v3386, %v1488
        %v3388 = vrot.slane %v3377, 1
        %v3389 = vsel %vm1477, %v3388, %v1490
        %v3390 = vrot.slane %v3280, 1
        %v3391 = vsel %vm1477, %v2452, %v3390
        %v3392 = vrot.slane %v3281, 1
        %v3393 = vsel %vm1477, %v2454, %v3392
        %v3394 = vrot.slane %v3378, 1
        %v3395 = vsel %vm1477, %v3390, %v3394
        %v3396 = vrot.slane %v3379, 1
        %v3397 = vsel %vm1477, %v3392, %v3396
        %v3404 = vmul.f32 %v285, %v3387
        %v3405 = vmul.f32 %v286, %v3389
        %v3406 = vmul.f32 %v287, %v1493
        %v3407 = vmul.f32 %v288, %v1495
        %v3408 = vmul.f32 %v289, %v1497
        %v3409 = vmul.f32 %v290, %v1499
        %v3410 = vmul.f32 %v291, %v1501
        %v3411 = vmul.f32 %v292, %v1503
        %v3412 = vmul.f32 %v293, %v1505
        %v3413 = vmul.f32 %v294, %v1507
        %v3414 = vmul.f32 %v295, %v2453
        %v3415 = vmul.f32 %v296, %v2455
        %v3416 = vmul.f32 %v297, %v3391
        %v3417 = vmul.f32 %v298, %v3393
        %v3418 = vmul.f32 %v299, %v3395
        %v3419 = vmul.f32 %v300, %v3397
        %v3420 = vadd.f32 %v3404, %v3406
        %v3421 = vadd.f32 %v3420, %v3408
        %v3422 = vadd.f32 %v3421, %v3410
        %v3423 = vadd.f32 %v3422, %v3412
        %v3424 = vadd.f32 %v3423, %v3414
        %v3425 = vadd.f32 %v3424, %v3416
        %v3426 = vadd.f32 %v3425, %v3418
        %v3427 = vrot.slane %v3426, 4
        %v3428 = vadd.f32 %v3426, %v3427
        %v3429 = vrot.slane %v3428, 2
        %v3430 = vadd.f32 %v3428, %v3429
        %v3431 = vrot.slane %v3430, 1
        %v3432 = vadd.f32 %v3430, %v3431
        %v3433 = vadd.f32 %v3405, %v3407
        %v3434 = vadd.f32 %v3433, %v3409
        %v3435 = vadd.f32 %v3434, %v3411
        %v3436 = vadd.f32 %v3435, %v3413
        %v3437 = vadd.f32 %v3436, %v3415
        %v3438 = vadd.f32 %v3437, %v3417
        %v3439 = vadd.f32 %v3438, %v3419
        %v3440 = vrot.slane %v3439, 4
        %v3441 = vadd.f32 %v3439, %v3440
        %v3442 = vrot.slane %v3441, 2
        %v3443 = vadd.f32 %v3441, %v3442
        %v3444 = vrot.slane %v3443, 1
        %v3445 = vadd.f32 %v3443, %v3444
        %v3446 = vmul.f32 %v329, %v3374
        %v3447 = vmul.f32 %v342, %v3375
        %v3448 = vadd.f32 %v3446, 1e-12
        %v3449 = vadd.f32 %v3447, 1e-12
        %v3450 = vrsqrt.pop %v3448
        %v3451 = vmul.f32 %v3450, %v3448
        %v3452 = vmul.f32 %v3451, %v3450
        %v3453 = vmul.f32 0.5, %v3452
        %v3454 = vsub.f32 1.5, %v3453
        %v3455 = vmul.f32 %v3450, %v3454
        %vm3456 = vweird.f32 %v3448
        %vm3457 = vweird.f32 %v3450
        %vm3458 = vmor %vm3456, %vm3457
        %v3459 = vsel %vm3458, %v3450, %v3455
        %v3460 = vrsqrt.pop %v3449
        %v3461 = vmul.f32 %v3460, %v3449
        %v3462 = vmul.f32 %v3461, %v3460
        %v3463 = vmul.f32 0.5, %v3462
        %v3464 = vsub.f32 1.5, %v3463
        %v3465 = vmul.f32 %v3460, %v3464
        %vm3466 = vweird.f32 %v3449
        %vm3467 = vweird.f32 %v3460
        %vm3468 = vmor %vm3466, %vm3467
        %v3469 = vsel %vm3468, %v3460, %v3465
        %v3470 = vmul.f32 %v3432, %v3459
        %v3471 = vmul.f32 %v3445, %v3469
        %vm3472 = vcmp.gt.f32.partialorder %v3470, %v3352
        %vm3473 = vcmp.gt.f32.partialorder %v3471, %v3353
        %v3474 = vsel %vm3472, %v3470, %v3352
        %v3475 = vsel %vm3473, %v3471, %v3353
        %v3476 = vsel %vm3472, 33.0, %v3354
        %v3477 = vsel %vm3473, 33.0, %v3355
        %s3478 = scalar_lea.vmem [#allocation2], 65
        %v3479 = vld [vmem:[%s3478] ss:$8 sm:$0x3]
        %s3480 = scalar_lea.vmem [#allocation2], 193
        %v3481 = vld [vmem:[%s3480] ss:$8 sm:$0x3]
        %v3482 = vmul.f32 %v3479, %v3479
        %v3484 = vperm.slane %v3482, 0
        %v3485 = vperm.slane %v3482, 1
        %v3488 = vsub.f32 %v3374, %v3484
        %v3489 = vsub.f32 %v3375, %v3485
        %v3490 = vmul.f32 %v3481, %v3481
        %v3492 = vperm.slane %v3490, 0
        %v3493 = vperm.slane %v3490, 1
        %v3496 = vadd.f32 %v3488, %v3492
        %v3497 = vadd.f32 %v3489, %v3493
        %v3498 = vld [vmem:[#allocation2 + $0x40] sm:$0xfc]
        %v3499 = vld [vmem:[#allocation2 + $0x48] sm:$0xfc]
        %v3500 = vld [vmem:[#allocation2 + $0xc0] sm:$0x3]
        %v3501 = vld [vmem:[#allocation2 + $0xc8] sm:$0x3]
        %v3506 = vrot.slane %v3498, 2
        %v3507 = vsel %vm373, %v3506, %v482
        %v3508 = vrot.slane %v3499, 2
        %v3509 = vsel %vm373, %v3508, %v484
        %v3510 = vrot.slane %v3280, 2
        %v3511 = vsel %vm373, %v2572, %v3510
        %v3512 = vrot.slane %v3281, 2
        %v3513 = vsel %vm373, %v2574, %v3512
        %v3514 = vrot.slane %v3500, 2
        %v3515 = vsel %vm373, %v3510, %v3514
        %v3516 = vrot.slane %v3501, 2
        %v3517 = vsel %vm373, %v3512, %v3516
        %v3524 = vmul.f32 %v285, %v3507
        %v3525 = vmul.f32 %v286, %v3509
        %v3526 = vmul.f32 %v287, %v487
        %v3527 = vmul.f32 %v288, %v489
        %v3528 = vmul.f32 %v289, %v491
        %v3529 = vmul.f32 %v290, %v493
        %v3530 = vmul.f32 %v291, %v495
        %v3531 = vmul.f32 %v292, %v497
        %v3532 = vmul.f32 %v293, %v1635
        %v3533 = vmul.f32 %v294, %v1637
        %v3534 = vmul.f32 %v295, %v2573
        %v3535 = vmul.f32 %v296, %v2575
        %v3536 = vmul.f32 %v297, %v3511
        %v3537 = vmul.f32 %v298, %v3513
        %v3538 = vmul.f32 %v299, %v3515
        %v3539 = vmul.f32 %v300, %v3517
        %v3540 = vadd.f32 %v3524, %v3526
        %v3541 = vadd.f32 %v3540, %v3528
        %v3542 = vadd.f32 %v3541, %v3530
        %v3543 = vadd.f32 %v3542, %v3532
        %v3544 = vadd.f32 %v3543, %v3534
        %v3545 = vadd.f32 %v3544, %v3536
        %v3546 = vadd.f32 %v3545, %v3538
        %v3547 = vrot.slane %v3546, 4
        %v3548 = vadd.f32 %v3546, %v3547
        %v3549 = vrot.slane %v3548, 2
        %v3550 = vadd.f32 %v3548, %v3549
        %v3551 = vrot.slane %v3550, 1
        %v3552 = vadd.f32 %v3550, %v3551
        %v3553 = vadd.f32 %v3525, %v3527
        %v3554 = vadd.f32 %v3553, %v3529
        %v3555 = vadd.f32 %v3554, %v3531
        %v3556 = vadd.f32 %v3555, %v3533
        %v3557 = vadd.f32 %v3556, %v3535
        %v3558 = vadd.f32 %v3557, %v3537
        %v3559 = vadd.f32 %v3558, %v3539
        %v3560 = vrot.slane %v3559, 4
        %v3561 = vadd.f32 %v3559, %v3560
        %v3562 = vrot.slane %v3561, 2
        %v3563 = vadd.f32 %v3561, %v3562
        %v3564 = vrot.slane %v3563, 1
        %v3565 = vadd.f32 %v3563, %v3564
        %v3566 = vmul.f32 %v329, %v3496
        %v3567 = vmul.f32 %v342, %v3497
        %v3568 = vadd.f32 %v3566, 1e-12
        %v3569 = vadd.f32 %v3567, 1e-12
        %v3570 = vrsqrt.pop %v3568
        %v3571 = vmul.f32 %v3570, %v3568
        %v3572 = vmul.f32 %v3571, %v3570
        %v3573 = vmul.f32 0.5, %v3572
        %v3574 = vsub.f32 1.5, %v3573
        %v3575 = vmul.f32 %v3570, %v3574
        %vm3576 = vweird.f32 %v3568
        %vm3577 = vweird.f32 %v3570
        %vm3578 = vmor %vm3576, %vm3577
        %v3579 = vsel %vm3578, %v3570, %v3575
        %v3580 = vrsqrt.pop %v3569
        %v3581 = vmul.f32 %v3580, %v3569
        %v3582 = vmul.f32 %v3581, %v3580
        %v3583 = vmul.f32 0.5, %v3582
        %v3584 = vsub.f32 1.5, %v3583
        %v3585 = vmul.f32 %v3580, %v3584
        %vm3586 = vweird.f32 %v3569
        %vm3587 = vweird.f32 %v3580
        %vm3588 = vmor %vm3586, %vm3587
        %v3589 = vsel %vm3588, %v3580, %v3585
        %v3590 = vmul.f32 %v3552, %v3579
        %v3591 = vmul.f32 %v3565, %v3589
        %vm3592 = vcmp.gt.f32.partialorder %v3590, %v3474
        %vm3593 = vcmp.gt.f32.partialorder %v3591, %v3475
        %v3594 = vsel %vm3592, %v3590, %v3474
        %v3595 = vsel %vm3593, %v3591, %v3475
        %v3596 = vsel %vm3592, 34.0, %v3476
        %v3597 = vsel %vm3593, 34.0, %v3477
        %s3598 = scalar_lea.vmem [#allocation2], 66
        %v3599 = vld [vmem:[%s3598] ss:$8 sm:$0x3]
        %s3600 = scalar_lea.vmem [#allocation2], 194
        %v3601 = vld [vmem:[%s3600] ss:$8 sm:$0x3]
        %v3602 = vmul.f32 %v3599, %v3599
        %v3604 = vperm.slane %v3602, 0
        %v3605 = vperm.slane %v3602, 1
        %v3608 = vsub.f32 %v3496, %v3604
        %v3609 = vsub.f32 %v3497, %v3605
        %v3610 = vmul.f32 %v3601, %v3601
        %v3612 = vperm.slane %v3610, 0
        %v3613 = vperm.slane %v3610, 1
        %v3616 = vadd.f32 %v3608, %v3612
        %v3617 = vadd.f32 %v3609, %v3613
        %v3618 = vld [vmem:[#allocation2 + $0x40] sm:$0xf8]
        %v3619 = vld [vmem:[#allocation2 + $0x48] sm:$0xf8]
        %v3620 = vld [vmem:[#allocation2 + $0xc0] sm:$0x7]
        %v3621 = vld [vmem:[#allocation2 + $0xc8] sm:$0x7]
        %v3626 = vrot.slane %v3618, 3
        %v3627 = vsel %vm614, %v3626, %v629
        %v3628 = vrot.slane %v3619, 3
        %v3629 = vsel %vm614, %v3628, %v631
        %v3630 = vrot.slane %v3280, 3
        %v3631 = vsel %vm614, %v2692, %v3630
        %v3632 = vrot.slane %v3281, 3
        %v3633 = vsel %vm614, %v2694, %v3632
        %v3634 = vrot.slane %v3620, 3
        %v3635 = vsel %vm614, %v3630, %v3634
        %v3636 = vrot.slane %v3621, 3
        %v3637 = vsel %vm614, %v3632, %v3636
        %v3644 = vmul.f32 %v285, %v3627
        %v3645 = vmul.f32 %v286, %v3629
        %v3646 = vmul.f32 %v287, %v634
        %v3647 = vmul.f32 %v288, %v636
        %v3648 = vmul.f32 %v289, %v638
        %v3649 = vmul.f32 %v290, %v640
        %v3650 = vmul.f32 %v291, %v642
        %v3651 = vmul.f32 %v292, %v644
        %v3652 = vmul.f32 %v293, %v1755
        %v3653 = vmul.f32 %v294, %v1757
        %v3654 = vmul.f32 %v295, %v2693
        %v3655 = vmul.f32 %v296, %v2695
        %v3656 = vmul.f32 %v297, %v3631
        %v3657 = vmul.f32 %v298, %v3633
        %v3658 = vmul.f32 %v299, %v3635
        %v3659 = vmul.f32 %v300, %v3637
        %v3660 = vadd.f32 %v3644, %v3646
        %v3661 = vadd.f32 %v3660, %v3648
        %v3662 = vadd.f32 %v3661, %v3650
        %v3663 = vadd.f32 %v3662, %v3652
        %v3664 = vadd.f32 %v3663, %v3654
        %v3665 = vadd.f32 %v3664, %v3656
        %v3666 = vadd.f32 %v3665, %v3658
        %v3667 = vrot.slane %v3666, 4
        %v3668 = vadd.f32 %v3666, %v3667
        %v3669 = vrot.slane %v3668, 2
        %v3670 = vadd.f32 %v3668, %v3669
        %v3671 = vrot.slane %v3670, 1
        %v3672 = vadd.f32 %v3670, %v3671
        %v3673 = vadd.f32 %v3645, %v3647
        %v3674 = vadd.f32 %v3673, %v3649
        %v3675 = vadd.f32 %v3674, %v3651
        %v3676 = vadd.f32 %v3675, %v3653
        %v3677 = vadd.f32 %v3676, %v3655
        %v3678 = vadd.f32 %v3677, %v3657
        %v3679 = vadd.f32 %v3678, %v3659
        %v3680 = vrot.slane %v3679, 4
        %v3681 = vadd.f32 %v3679, %v3680
        %v3682 = vrot.slane %v3681, 2
        %v3683 = vadd.f32 %v3681, %v3682
        %v3684 = vrot.slane %v3683, 1
        %v3685 = vadd.f32 %v3683, %v3684
        %v3686 = vmul.f32 %v329, %v3616
        %v3687 = vmul.f32 %v342, %v3617
        %v3688 = vadd.f32 %v3686, 1e-12
        %v3689 = vadd.f32 %v3687, 1e-12
        %v3690 = vrsqrt.pop %v3688
        %v3691 = vmul.f32 %v3690, %v3688
        %v3692 = vmul.f32 %v3691, %v3690
        %v3693 = vmul.f32 0.5, %v3692
        %v3694 = vsub.f32 1.5, %v3693
        %v3695 = vmul.f32 %v3690, %v3694
        %vm3696 = vweird.f32 %v3688
        %vm3697 = vweird.f32 %v3690
        %vm3698 = vmor %vm3696, %vm3697
        %v3699 = vsel %vm3698, %v3690, %v3695
        %v3700 = vrsqrt.pop %v3689
        %v3701 = vmul.f32 %v3700, %v3689
        %v3702 = vmul.f32 %v3701, %v3700
        %v3703 = vmul.f32 0.5, %v3702
        %v3704 = vsub.f32 1.5, %v3703
        %v3705 = vmul.f32 %v3700, %v3704
        %vm3706 = vweird.f32 %v3689
        %vm3707 = vweird.f32 %v3700
        %vm3708 = vmor %vm3706, %vm3707
        %v3709 = vsel %vm3708, %v3700, %v3705
        %v3710 = vmul.f32 %v3672, %v3699
        %v3711 = vmul.f32 %v3685, %v3709
        %vm3712 = vcmp.gt.f32.partialorder %v3710, %v3594
        %vm3713 = vcmp.gt.f32.partialorder %v3711, %v3595
        %v3714 = vsel %vm3712, %v3710, %v3594
        %v3715 = vsel %vm3713, %v3711, %v3595
        %v3716 = vsel %vm3712, 35.0, %v3596
        %v3717 = vsel %vm3713, 35.0, %v3597
        %s3718 = scalar_lea.vmem [#allocation2], 67
        %v3719 = vld [vmem:[%s3718] ss:$8 sm:$0x3]
        %s3720 = scalar_lea.vmem [#allocation2], 195
        %v3721 = vld [vmem:[%s3720] ss:$8 sm:$0x3]
        %v3722 = vmul.f32 %v3719, %v3719
        %v3724 = vperm.slane %v3722, 0
        %v3725 = vperm.slane %v3722, 1
        %v3728 = vsub.f32 %v3616, %v3724
        %v3729 = vsub.f32 %v3617, %v3725
        %v3730 = vmul.f32 %v3721, %v3721
        %v3732 = vperm.slane %v3730, 0
        %v3733 = vperm.slane %v3730, 1
        %v3736 = vadd.f32 %v3728, %v3732
        %v3737 = vadd.f32 %v3729, %v3733
        %v3738 = vld [vmem:[#allocation2 + $0x40] sm:$0xf0]
        %v3739 = vld [vmem:[#allocation2 + $0x48] sm:$0xf0]
        %v3740 = vld [vmem:[#allocation2 + $0xc0] sm:$0xf]
        %v3741 = vld [vmem:[#allocation2 + $0xc8] sm:$0xf]
        %v3746 = vrot.slane %v3738, 4
        %v3747 = vsel %vm767, %v3746, %v782
        %v3748 = vrot.slane %v3739, 4
        %v3749 = vsel %vm767, %v3748, %v784
        %v3750 = vrot.slane %v3280, 4
        %v3751 = vsel %vm767, %v2812, %v3750
        %v3752 = vrot.slane %v3281, 4
        %v3753 = vsel %vm767, %v2814, %v3752
        %v3754 = vrot.slane %v3740, 4
        %v3755 = vsel %vm767, %v3750, %v3754
        %v3756 = vrot.slane %v3741, 4
        %v3757 = vsel %vm767, %v3752, %v3756
        %v3764 = vmul.f32 %v285, %v3747
        %v3765 = vmul.f32 %v286, %v3749
        %v3766 = vmul.f32 %v287, %v787
        %v3767 = vmul.f32 %v288, %v789
        %v3768 = vmul.f32 %v289, %v791
        %v3769 = vmul.f32 %v290, %v793
        %v3770 = vmul.f32 %v291, %v795
        %v3771 = vmul.f32 %v292, %v797
        %v3772 = vmul.f32 %v293, %v1875
        %v3773 = vmul.f32 %v294, %v1877
        %v3774 = vmul.f32 %v295, %v2813
        %v3775 = vmul.f32 %v296, %v2815
        %v3776 = vmul.f32 %v297, %v3751
        %v3777 = vmul.f32 %v298, %v3753
        %v3778 = vmul.f32 %v299, %v3755
        %v3779 = vmul.f32 %v300, %v3757
        %v3780 = vadd.f32 %v3764, %v3766
        %v3781 = vadd.f32 %v3780, %v3768
        %v3782 = vadd.f32 %v3781, %v3770
        %v3783 = vadd.f32 %v3782, %v3772
        %v3784 = vadd.f32 %v3783, %v3774
        %v3785 = vadd.f32 %v3784, %v3776
        %v3786 = vadd.f32 %v3785, %v3778
        %v3787 = vrot.slane %v3786, 4
        %v3788 = vadd.f32 %v3786, %v3787
        %v3789 = vrot.slane %v3788, 2
        %v3790 = vadd.f32 %v3788, %v3789
        %v3791 = vrot.slane %v3790, 1
        %v3792 = vadd.f32 %v3790, %v3791
        %v3793 = vadd.f32 %v3765, %v3767
        %v3794 = vadd.f32 %v3793, %v3769
        %v3795 = vadd.f32 %v3794, %v3771
        %v3796 = vadd.f32 %v3795, %v3773
        %v3797 = vadd.f32 %v3796, %v3775
        %v3798 = vadd.f32 %v3797, %v3777
        %v3799 = vadd.f32 %v3798, %v3779
        %v3800 = vrot.slane %v3799, 4
        %v3801 = vadd.f32 %v3799, %v3800
        %v3802 = vrot.slane %v3801, 2
        %v3803 = vadd.f32 %v3801, %v3802
        %v3804 = vrot.slane %v3803, 1
        %v3805 = vadd.f32 %v3803, %v3804
        %v3806 = vmul.f32 %v329, %v3736
        %v3807 = vmul.f32 %v342, %v3737
        %v3808 = vadd.f32 %v3806, 1e-12
        %v3809 = vadd.f32 %v3807, 1e-12
        %v3810 = vrsqrt.pop %v3808
        %v3811 = vmul.f32 %v3810, %v3808
        %v3812 = vmul.f32 %v3811, %v3810
        %v3813 = vmul.f32 0.5, %v3812
        %v3814 = vsub.f32 1.5, %v3813
        %v3815 = vmul.f32 %v3810, %v3814
        %vm3816 = vweird.f32 %v3808
        %vm3817 = vweird.f32 %v3810
        %vm3818 = vmor %vm3816, %vm3817
        %v3819 = vsel %vm3818, %v3810, %v3815
        %v3820 = vrsqrt.pop %v3809
        %v3821 = vmul.f32 %v3820, %v3809
        %v3822 = vmul.f32 %v3821, %v3820
        %v3823 = vmul.f32 0.5, %v3822
        %v3824 = vsub.f32 1.5, %v3823
        %v3825 = vmul.f32 %v3820, %v3824
        %vm3826 = vweird.f32 %v3809
        %vm3827 = vweird.f32 %v3820
        %vm3828 = vmor %vm3826, %vm3827
        %v3829 = vsel %vm3828, %v3820, %v3825
        %v3830 = vmul.f32 %v3792, %v3819
        %v3831 = vmul.f32 %v3805, %v3829
        %vm3832 = vcmp.gt.f32.partialorder %v3830, %v3714
        %vm3833 = vcmp.gt.f32.partialorder %v3831, %v3715
        %v3834 = vsel %vm3832, %v3830, %v3714
        %v3835 = vsel %vm3833, %v3831, %v3715
        %v3836 = vsel %vm3832, 36.0, %v3716
        %v3837 = vsel %vm3833, 36.0, %v3717
        %s3838 = scalar_lea.vmem [#allocation2], 68
        %v3839 = vld [vmem:[%s3838] ss:$8 sm:$0x3]
        %s3840 = scalar_lea.vmem [#allocation2], 196
        %v3841 = vld [vmem:[%s3840] ss:$8 sm:$0x3]
        %v3842 = vmul.f32 %v3839, %v3839
        %v3844 = vperm.slane %v3842, 0
        %v3845 = vperm.slane %v3842, 1
        %v3848 = vsub.f32 %v3736, %v3844
        %v3849 = vsub.f32 %v3737, %v3845
        %v3850 = vmul.f32 %v3841, %v3841
        %v3852 = vperm.slane %v3850, 0
        %v3853 = vperm.slane %v3850, 1
        %v3856 = vadd.f32 %v3848, %v3852
        %v3857 = vadd.f32 %v3849, %v3853
        %v3858 = vld [vmem:[#allocation2 + $0x40] sm:$0xe0]
        %v3859 = vld [vmem:[#allocation2 + $0x48] sm:$0xe0]
        %v3860 = vld [vmem:[#allocation2 + $0xc0] sm:$0x1f]
        %v3861 = vld [vmem:[#allocation2 + $0xc8] sm:$0x1f]
        %v3866 = vrot.slane %v3858, 5
        %v3867 = vsel %vm920, %v3866, %v935
        %v3868 = vrot.slane %v3859, 5
        %v3869 = vsel %vm920, %v3868, %v937
        %v3870 = vrot.slane %v3280, 5
        %v3871 = vsel %vm920, %v2932, %v3870
        %v3872 = vrot.slane %v3281, 5
        %v3873 = vsel %vm920, %v2934, %v3872
        %v3874 = vrot.slane %v3860, 5
        %v3875 = vsel %vm920, %v3870, %v3874
        %v3876 = vrot.slane %v3861, 5
        %v3877 = vsel %vm920, %v3872, %v3876
        %v3884 = vmul.f32 %v285, %v3867
        %v3885 = vmul.f32 %v286, %v3869
        %v3886 = vmul.f32 %v287, %v940
        %v3887 = vmul.f32 %v288, %v942
        %v3888 = vmul.f32 %v289, %v944
        %v3889 = vmul.f32 %v290, %v946
        %v3890 = vmul.f32 %v291, %v948
        %v3891 = vmul.f32 %v292, %v950
        %v3892 = vmul.f32 %v293, %v1995
        %v3893 = vmul.f32 %v294, %v1997
        %v3894 = vmul.f32 %v295, %v2933
        %v3895 = vmul.f32 %v296, %v2935
        %v3896 = vmul.f32 %v297, %v3871
        %v3897 = vmul.f32 %v298, %v3873
        %v3898 = vmul.f32 %v299, %v3875
        %v3899 = vmul.f32 %v300, %v3877
        %v3900 = vadd.f32 %v3884, %v3886
        %v3901 = vadd.f32 %v3900, %v3888
        %v3902 = vadd.f32 %v3901, %v3890
        %v3903 = vadd.f32 %v3902, %v3892
        %v3904 = vadd.f32 %v3903, %v3894
        %v3905 = vadd.f32 %v3904, %v3896
        %v3906 = vadd.f32 %v3905, %v3898
        %v3907 = vrot.slane %v3906, 4
        %v3908 = vadd.f32 %v3906, %v3907
        %v3909 = vrot.slane %v3908, 2
        %v3910 = vadd.f32 %v3908, %v3909
        %v3911 = vrot.slane %v3910, 1
        %v3912 = vadd.f32 %v3910, %v3911
        %v3913 = vadd.f32 %v3885, %v3887
        %v3914 = vadd.f32 %v3913, %v3889
        %v3915 = vadd.f32 %v3914, %v3891
        %v3916 = vadd.f32 %v3915, %v3893
        %v3917 = vadd.f32 %v3916, %v3895
        %v3918 = vadd.f32 %v3917, %v3897
        %v3919 = vadd.f32 %v3918, %v3899
        %v3920 = vrot.slane %v3919, 4
        %v3921 = vadd.f32 %v3919, %v3920
        %v3922 = vrot.slane %v3921, 2
        %v3923 = vadd.f32 %v3921, %v3922
        %v3924 = vrot.slane %v3923, 1
        %v3925 = vadd.f32 %v3923, %v3924
        %v3926 = vmul.f32 %v329, %v3856
        %v3927 = vmul.f32 %v342, %v3857
        %v3928 = vadd.f32 %v3926, 1e-12
        %v3929 = vadd.f32 %v3927, 1e-12
        %v3930 = vrsqrt.pop %v3928
        %v3931 = vmul.f32 %v3930, %v3928
        %v3932 = vmul.f32 %v3931, %v3930
        %v3933 = vmul.f32 0.5, %v3932
        %v3934 = vsub.f32 1.5, %v3933
        %v3935 = vmul.f32 %v3930, %v3934
        %vm3936 = vweird.f32 %v3928
        %vm3937 = vweird.f32 %v3930
        %vm3938 = vmor %vm3936, %vm3937
        %v3939 = vsel %vm3938, %v3930, %v3935
        %v3940 = vrsqrt.pop %v3929
        %v3941 = vmul.f32 %v3940, %v3929
        %v3942 = vmul.f32 %v3941, %v3940
        %v3943 = vmul.f32 0.5, %v3942
        %v3944 = vsub.f32 1.5, %v3943
        %v3945 = vmul.f32 %v3940, %v3944
        %vm3946 = vweird.f32 %v3929
        %vm3947 = vweird.f32 %v3940
        %vm3948 = vmor %vm3946, %vm3947
        %v3949 = vsel %vm3948, %v3940, %v3945
        %v3950 = vmul.f32 %v3912, %v3939
        %v3951 = vmul.f32 %v3925, %v3949
        %vm3952 = vcmp.gt.f32.partialorder %v3950, %v3834
        %vm3953 = vcmp.gt.f32.partialorder %v3951, %v3835
        %v3954 = vsel %vm3952, %v3950, %v3834
        %v3955 = vsel %vm3953, %v3951, %v3835
        %v3956 = vsel %vm3952, 37.0, %v3836
        %v3957 = vsel %vm3953, 37.0, %v3837
        %s3958 = scalar_lea.vmem [#allocation2], 69
        %v3959 = vld [vmem:[%s3958] ss:$8 sm:$0x3]
        %s3960 = scalar_lea.vmem [#allocation2], 197
        %v3961 = vld [vmem:[%s3960] ss:$8 sm:$0x3]
        %v3962 = vmul.f32 %v3959, %v3959
        %v3964 = vperm.slane %v3962, 0
        %v3965 = vperm.slane %v3962, 1
        %v3968 = vsub.f32 %v3856, %v3964
        %v3969 = vsub.f32 %v3857, %v3965
        %v3970 = vmul.f32 %v3961, %v3961
        %v3972 = vperm.slane %v3970, 0
        %v3973 = vperm.slane %v3970, 1
        %v3976 = vadd.f32 %v3968, %v3972
        %v3977 = vadd.f32 %v3969, %v3973
        %v3978 = vld [vmem:[#allocation2 + $0x40] sm:$0xc0]
        %v3979 = vld [vmem:[#allocation2 + $0x48] sm:$0xc0]
        %v3980 = vld [vmem:[#allocation2 + $0xc0] sm:$0x3f]
        %v3981 = vld [vmem:[#allocation2 + $0xc8] sm:$0x3f]
        %v3986 = vrot.slane %v3978, 6
        %v3987 = vsel %vm1073, %v3986, %v1088
        %v3988 = vrot.slane %v3979, 6
        %v3989 = vsel %vm1073, %v3988, %v1090
        %v3990 = vrot.slane %v3280, 6
        %v3991 = vsel %vm1073, %v3052, %v3990
        %v3992 = vrot.slane %v3281, 6
        %v3993 = vsel %vm1073, %v3054, %v3992
        %v3994 = vrot.slane %v3980, 6
        %v3995 = vsel %vm1073, %v3990, %v3994
        %v3996 = vrot.slane %v3981, 6
        %v3997 = vsel %vm1073, %v3992, %v3996
        %v4004 = vmul.f32 %v285, %v3987
        %v4005 = vmul.f32 %v286, %v3989
        %v4006 = vmul.f32 %v287, %v1093
        %v4007 = vmul.f32 %v288, %v1095
        %v4008 = vmul.f32 %v289, %v1097
        %v4009 = vmul.f32 %v290, %v1099
        %v4010 = vmul.f32 %v291, %v1101
        %v4011 = vmul.f32 %v292, %v1103
        %v4012 = vmul.f32 %v293, %v2115
        %v4013 = vmul.f32 %v294, %v2117
        %v4014 = vmul.f32 %v295, %v3053
        %v4015 = vmul.f32 %v296, %v3055
        %v4016 = vmul.f32 %v297, %v3991
        %v4017 = vmul.f32 %v298, %v3993
        %v4018 = vmul.f32 %v299, %v3995
        %v4019 = vmul.f32 %v300, %v3997
        %v4020 = vadd.f32 %v4004, %v4006
        %v4021 = vadd.f32 %v4020, %v4008
        %v4022 = vadd.f32 %v4021, %v4010
        %v4023 = vadd.f32 %v4022, %v4012
        %v4024 = vadd.f32 %v4023, %v4014
        %v4025 = vadd.f32 %v4024, %v4016
        %v4026 = vadd.f32 %v4025, %v4018
        %v4027 = vrot.slane %v4026, 4
        %v4028 = vadd.f32 %v4026, %v4027
        %v4029 = vrot.slane %v4028, 2
        %v4030 = vadd.f32 %v4028, %v4029
        %v4031 = vrot.slane %v4030, 1
        %v4032 = vadd.f32 %v4030, %v4031
        %v4033 = vadd.f32 %v4005, %v4007
        %v4034 = vadd.f32 %v4033, %v4009
        %v4035 = vadd.f32 %v4034, %v4011
        %v4036 = vadd.f32 %v4035, %v4013
        %v4037 = vadd.f32 %v4036, %v4015
        %v4038 = vadd.f32 %v4037, %v4017
        %v4039 = vadd.f32 %v4038, %v4019
        %v4040 = vrot.slane %v4039, 4
        %v4041 = vadd.f32 %v4039, %v4040
        %v4042 = vrot.slane %v4041, 2
        %v4043 = vadd.f32 %v4041, %v4042
        %v4044 = vrot.slane %v4043, 1
        %v4045 = vadd.f32 %v4043, %v4044
        %v4046 = vmul.f32 %v329, %v3976
        %v4047 = vmul.f32 %v342, %v3977
        %v4048 = vadd.f32 %v4046, 1e-12
        %v4049 = vadd.f32 %v4047, 1e-12
        %v4050 = vrsqrt.pop %v4048
        %v4051 = vmul.f32 %v4050, %v4048
        %v4052 = vmul.f32 %v4051, %v4050
        %v4053 = vmul.f32 0.5, %v4052
        %v4054 = vsub.f32 1.5, %v4053
        %v4055 = vmul.f32 %v4050, %v4054
        %vm4056 = vweird.f32 %v4048
        %vm4057 = vweird.f32 %v4050
        %vm4058 = vmor %vm4056, %vm4057
        %v4059 = vsel %vm4058, %v4050, %v4055
        %v4060 = vrsqrt.pop %v4049
        %v4061 = vmul.f32 %v4060, %v4049
        %v4062 = vmul.f32 %v4061, %v4060
        %v4063 = vmul.f32 0.5, %v4062
        %v4064 = vsub.f32 1.5, %v4063
        %v4065 = vmul.f32 %v4060, %v4064
        %vm4066 = vweird.f32 %v4049
        %vm4067 = vweird.f32 %v4060
        %vm4068 = vmor %vm4066, %vm4067
        %v4069 = vsel %vm4068, %v4060, %v4065
        %v4070 = vmul.f32 %v4032, %v4059
        %v4071 = vmul.f32 %v4045, %v4069
        %vm4072 = vcmp.gt.f32.partialorder %v4070, %v3954
        %vm4073 = vcmp.gt.f32.partialorder %v4071, %v3955
        %v4074 = vsel %vm4072, %v4070, %v3954
        %v4075 = vsel %vm4073, %v4071, %v3955
        %v4076 = vsel %vm4072, 38.0, %v3956
        %v4077 = vsel %vm4073, 38.0, %v3957
        %s4078 = scalar_lea.vmem [#allocation2], 70
        %v4079 = vld [vmem:[%s4078] ss:$8 sm:$0x3]
        %s4080 = scalar_lea.vmem [#allocation2], 198
        %v4081 = vld [vmem:[%s4080] ss:$8 sm:$0x3]
        %v4082 = vmul.f32 %v4079, %v4079
        %v4084 = vperm.slane %v4082, 0
        %v4085 = vperm.slane %v4082, 1
        %v4088 = vsub.f32 %v3976, %v4084
        %v4089 = vsub.f32 %v3977, %v4085
        %v4090 = vmul.f32 %v4081, %v4081
        %v4092 = vperm.slane %v4090, 0
        %v4093 = vperm.slane %v4090, 1
        %v4096 = vadd.f32 %v4088, %v4092
        %v4097 = vadd.f32 %v4089, %v4093
        %v4098 = vld [vmem:[#allocation2 + $0x40] sm:$0x80]
        %v4099 = vld [vmem:[#allocation2 + $0x48] sm:$0x80]
        %v4100 = vld [vmem:[#allocation2 + $0xc0] sm:$0x7f]
        %v4101 = vld [vmem:[#allocation2 + $0xc8] sm:$0x7f]
        %v4106 = vrot.slane %v4098, 7
        %v4107 = vsel %vm1226, %v4106, %v1241
        %v4108 = vrot.slane %v4099, 7
        %v4109 = vsel %vm1226, %v4108, %v1243
        %v4110 = vrot.slane %v3280, 7
        %v4111 = vsel %vm1226, %v3172, %v4110
        %v4112 = vrot.slane %v3281, 7
        %v4113 = vsel %vm1226, %v3174, %v4112
        %v4114 = vrot.slane %v4100, 7
        %v4115 = vsel %vm1226, %v4110, %v4114
        %v4116 = vrot.slane %v4101, 7
        %v4117 = vsel %vm1226, %v4112, %v4116
        %v4124 = vmul.f32 %v285, %v4107
        %v4125 = vmul.f32 %v286, %v4109
        %v4126 = vmul.f32 %v287, %v1246
        %v4127 = vmul.f32 %v288, %v1248
        %v4128 = vmul.f32 %v289, %v1250
        %v4129 = vmul.f32 %v290, %v1252
        %v4130 = vmul.f32 %v291, %v1254
        %v4131 = vmul.f32 %v292, %v1256
        %v4132 = vmul.f32 %v293, %v2235
        %v4133 = vmul.f32 %v294, %v2237
        %v4134 = vmul.f32 %v295, %v3173
        %v4135 = vmul.f32 %v296, %v3175
        %v4136 = vmul.f32 %v297, %v4111
        %v4137 = vmul.f32 %v298, %v4113
        %v4138 = vmul.f32 %v299, %v4115
        %v4139 = vmul.f32 %v300, %v4117
        %v4140 = vadd.f32 %v4124, %v4126
        %v4141 = vadd.f32 %v4140, %v4128
        %v4142 = vadd.f32 %v4141, %v4130
        %v4143 = vadd.f32 %v4142, %v4132
        %v4144 = vadd.f32 %v4143, %v4134
        %v4145 = vadd.f32 %v4144, %v4136
        %v4146 = vadd.f32 %v4145, %v4138
        %v4147 = vrot.slane %v4146, 4
        %v4148 = vadd.f32 %v4146, %v4147
        %v4149 = vrot.slane %v4148, 2
        %v4150 = vadd.f32 %v4148, %v4149
        %v4151 = vrot.slane %v4150, 1
        %v4152 = vadd.f32 %v4150, %v4151
        %v4153 = vadd.f32 %v4125, %v4127
        %v4154 = vadd.f32 %v4153, %v4129
        %v4155 = vadd.f32 %v4154, %v4131
        %v4156 = vadd.f32 %v4155, %v4133
        %v4157 = vadd.f32 %v4156, %v4135
        %v4158 = vadd.f32 %v4157, %v4137
        %v4159 = vadd.f32 %v4158, %v4139
        %v4160 = vrot.slane %v4159, 4
        %v4161 = vadd.f32 %v4159, %v4160
        %v4162 = vrot.slane %v4161, 2
        %v4163 = vadd.f32 %v4161, %v4162
        %v4164 = vrot.slane %v4163, 1
        %v4165 = vadd.f32 %v4163, %v4164
        %v4166 = vmul.f32 %v329, %v4096
        %v4167 = vmul.f32 %v342, %v4097
        %v4168 = vadd.f32 %v4166, 1e-12
        %v4169 = vadd.f32 %v4167, 1e-12
        %v4170 = vrsqrt.pop %v4168
        %v4171 = vmul.f32 %v4170, %v4168
        %v4172 = vmul.f32 %v4171, %v4170
        %v4173 = vmul.f32 0.5, %v4172
        %v4174 = vsub.f32 1.5, %v4173
        %v4175 = vmul.f32 %v4170, %v4174
        %vm4176 = vweird.f32 %v4168
        %vm4177 = vweird.f32 %v4170
        %vm4178 = vmor %vm4176, %vm4177
        %v4179 = vsel %vm4178, %v4170, %v4175
        %v4180 = vrsqrt.pop %v4169
        %v4181 = vmul.f32 %v4180, %v4169
        %v4182 = vmul.f32 %v4181, %v4180
        %v4183 = vmul.f32 0.5, %v4182
        %v4184 = vsub.f32 1.5, %v4183
        %v4185 = vmul.f32 %v4180, %v4184
        %vm4186 = vweird.f32 %v4169
        %vm4187 = vweird.f32 %v4180
        %vm4188 = vmor %vm4186, %vm4187
        %v4189 = vsel %vm4188, %v4180, %v4185
        %v4190 = vmul.f32 %v4152, %v4179
        %v4191 = vmul.f32 %v4165, %v4189
        %vm4192 = vcmp.gt.f32.partialorder %v4190, %v4074
        %vm4193 = vcmp.gt.f32.partialorder %v4191, %v4075
        %v4194 = vsel %vm4192, %v4190, %v4074
        %v4195 = vsel %vm4193, %v4191, %v4075
        %v4196 = vsel %vm4192, 39.0, %v4076
        %v4197 = vsel %vm4193, 39.0, %v4077
        %s4198 = scalar_lea.vmem [#allocation2], 71
        %v4199 = vld [vmem:[%s4198] ss:$8 sm:$0x3]
        %s4200 = scalar_lea.vmem [#allocation2], 199
        %v4201 = vld [vmem:[%s4200] ss:$8 sm:$0x3]
        %v4202 = vmul.f32 %v4199, %v4199
        %v4204 = vperm.slane %v4202, 0
        %v4205 = vperm.slane %v4202, 1
        %v4208 = vsub.f32 %v4096, %v4204
        %v4209 = vsub.f32 %v4097, %v4205
        %v4210 = vmul.f32 %v4201, %v4201
        %v4212 = vperm.slane %v4210, 0
        %v4213 = vperm.slane %v4210, 1
        %v4216 = vadd.f32 %v4208, %v4212
        %v4217 = vadd.f32 %v4209, %v4213
        %v4218 = vld [vmem:[#allocation2 + $0xc0] sm:$0xff]
        %v4219 = vld [vmem:[#allocation2 + $0xc8] sm:$0xff]
        %v4220 = vmul.f32 %v285, %v295
        %v4221 = vmul.f32 %v286, %v296
        %v4222 = vmul.f32 %v287, %v297
        %v4223 = vmul.f32 %v288, %v298
        %v4224 = vmul.f32 %v289, %v299
        %v4225 = vmul.f32 %v290, %v300
        %v4226 = vmul.f32 %v291, %v345
        %v4227 = vmul.f32 %v292, %v346
        %v4228 = vmul.f32 %v293, %v1371
        %v4229 = vmul.f32 %v294, %v1372
        %v4230 = vmul.f32 %v295, %v2342
        %v4231 = vmul.f32 %v296, %v2343
        %v4232 = vmul.f32 %v297, %v3280
        %v4233 = vmul.f32 %v298, %v3281
        %v4234 = vmul.f32 %v299, %v4218
        %v4235 = vmul.f32 %v300, %v4219
        %v4236 = vadd.f32 %v4220, %v4222
        %v4237 = vadd.f32 %v4236, %v4224
        %v4238 = vadd.f32 %v4237, %v4226
        %v4239 = vadd.f32 %v4238, %v4228
        %v4240 = vadd.f32 %v4239, %v4230
        %v4241 = vadd.f32 %v4240, %v4232
        %v4242 = vadd.f32 %v4241, %v4234
        %v4243 = vrot.slane %v4242, 4
        %v4244 = vadd.f32 %v4242, %v4243
        %v4245 = vrot.slane %v4244, 2
        %v4246 = vadd.f32 %v4244, %v4245
        %v4247 = vrot.slane %v4246, 1
        %v4248 = vadd.f32 %v4246, %v4247
        %v4249 = vadd.f32 %v4221, %v4223
        %v4250 = vadd.f32 %v4249, %v4225
        %v4251 = vadd.f32 %v4250, %v4227
        %v4252 = vadd.f32 %v4251, %v4229
        %v4253 = vadd.f32 %v4252, %v4231
        %v4254 = vadd.f32 %v4253, %v4233
        %v4255 = vadd.f32 %v4254, %v4235
        %v4256 = vrot.slane %v4255, 4
        %v4257 = vadd.f32 %v4255, %v4256
        %v4258 = vrot.slane %v4257, 2
        %v4259 = vadd.f32 %v4257, %v4258
        %v4260 = vrot.slane %v4259, 1
        %v4261 = vadd.f32 %v4259, %v4260
        %v4262 = vmul.f32 %v329, %v4216
        %v4263 = vmul.f32 %v342, %v4217
        %v4264 = vadd.f32 %v4262, 1e-12
        %v4265 = vadd.f32 %v4263, 1e-12
        %v4266 = vrsqrt.pop %v4264
        %v4267 = vmul.f32 %v4266, %v4264
        %v4268 = vmul.f32 %v4267, %v4266
        %v4269 = vmul.f32 0.5, %v4268
        %v4270 = vsub.f32 1.5, %v4269
        %v4271 = vmul.f32 %v4266, %v4270
        %vm4272 = vweird.f32 %v4264
        %vm4273 = vweird.f32 %v4266
        %vm4274 = vmor %vm4272, %vm4273
        %v4275 = vsel %vm4274, %v4266, %v4271
        %v4276 = vrsqrt.pop %v4265
        %v4277 = vmul.f32 %v4276, %v4265
        %v4278 = vmul.f32 %v4277, %v4276
        %v4279 = vmul.f32 0.5, %v4278
        %v4280 = vsub.f32 1.5, %v4279
        %v4281 = vmul.f32 %v4276, %v4280
        %vm4282 = vweird.f32 %v4265
        %vm4283 = vweird.f32 %v4276
        %vm4284 = vmor %vm4282, %vm4283
        %v4285 = vsel %vm4284, %v4276, %v4281
        %v4286 = vmul.f32 %v4248, %v4275
        %v4287 = vmul.f32 %v4261, %v4285
        %vm4288 = vcmp.gt.f32.partialorder %v4286, %v4194
        %vm4289 = vcmp.gt.f32.partialorder %v4287, %v4195
        %v4290 = vsel %vm4288, %v4286, %v4194
        %v4291 = vsel %vm4289, %v4287, %v4195
        %v4292 = vsel %vm4288, 40.0, %v4196
        %v4293 = vsel %vm4289, 40.0, %v4197
        %vm4294 = vcmp.gt.f32.partialorder %v4290, 0.3
        %vm4295 = vcmp.gt.f32.partialorder %v4291, 0.3
        %v4296 = vrcp.pop %v4292
        %v4297 = vmul.f32 %v4292, %v4296
        %v4298 = vsub.f32 1.0, %v4297
        %v4299 = vmul.f32 %v4296, %v4298
        %v4300 = vadd.f32 %v4296, %v4299
        %vm4301 = vweird.f32 %v4292
        %vm4302 = vweird.f32 %v4296
        %vm4303 = vmor %vm4301, %vm4302
        %v4304 = vsel %vm4303, %v4296, %v4300
        %v4305 = vand.u32 2147483647, %v4292
        %vm4306 = vcmp.eq.f32.partialorder %v4305, 8.507059e+37
        %v4307 = vand.u32 %v4292, 2147483648
        %v4308 = vor.u32 1.1754944e-38, %v4307
        %v4309 = vsel %vm4306, %v4308, %v4304
        %v4310 = vmul.f32 8000.0, %v4309
        %v4311 = vrcp.pop %v4293
        %v4312 = vmul.f32 %v4293, %v4311
        %v4313 = vsub.f32 1.0, %v4312
        %v4314 = vmul.f32 %v4311, %v4313
        %v4315 = vadd.f32 %v4311, %v4314
        %vm4316 = vweird.f32 %v4293
        %vm4317 = vweird.f32 %v4311
        %vm4318 = vmor %vm4316, %vm4317
        %v4319 = vsel %vm4318, %v4311, %v4315
        %v4320 = vand.u32 2147483647, %v4293
        %vm4321 = vcmp.eq.f32.partialorder %v4320, 8.507059e+37
        %v4322 = vand.u32 %v4293, 2147483648
        %v4323 = vor.u32 1.1754944e-38, %v4322
        %v4324 = vsel %vm4321, %v4323, %v4319
        %v4325 = vmul.f32 8000.0, %v4324
        %v4326 = vsel %vm4294, %v4310, 0.0
        %v4327 = vsel %vm4295, %v4325, 0.0
        %v4330 = vrot.slane %v4327, 7
        %v4331 = vsel %vm1226, %v4326, %v4330
        %v4333 = vlaneseq
        %vm4334 = vcmp.ge.s32.totalorder %v4333, 0
        %vm4335 = vcmp.lt.s32.totalorder %v4333, 256
        %vm4336 = vmand %vm4334, %vm4335
        %4337 = vst.msk [vmem:[%s154] sm:$0x3] %vm4336, %v4331
        %s4338 = sand.u32 %s68, 1
        %s4339 = scalar_lea.sflag [#allocation5], %s4338
        %s4340 = sand.u32 %s68, 1
        %s4341 = smul.addr %s4340, 2
        %s4342 = scalar_lea.vmem [#allocation6], %s4341
        // Predicated region
        $region29: #{tpu_custom_call.1} parent=23 // pred_check
          %p4343 = pneg %p78
        $region30: #{tpu_custom_call.1} parent=23 // pred_check_branch
          %4345 = sbr.rel (%p4343) target = $region32
        $region31: #{tpu_custom_call.1} parent=23 // pred_region
          %s4346 = smul.u32 2, %s23
          %4348 = vsyncadd %s4339, 0
          %s4349 = smul.addr %s22, 2
          %s4350 = sadd.s32 %s4346, %s4349
          %s4351 = scalar_lea.hbm %s1, %s4350
          %s4353 = sshll.u32 %s4342, 4
          %s4354 = int_to_ptr.vmem [resolvable:$true] %s4353
          %s4355 = sshll.u32 %s4351, 4
          %s4356 = int_to_ptr.hbm [resolvable:$true] %s4355
          %4358 = dma.vmem_to_hbm [thread:$0]  %s4354, 32, %s4356, %s4339
        $region32: #{tpu_custom_call.1} parent=23 // pred_fallthru
          _
      $region24: #{tpu_custom_call.1} parent=5 // pred_fallthru
        _
      %p4359 = scmp.le.s32.totalorder 2, %s13
      // Predicated region
      $region33: #{tpu_custom_call.1} parent=5 // pred_check
        %p4360 = pneg %p4359
      $region34: #{tpu_custom_call.1} parent=5 // pred_check_branch
        %4362 = sbr.rel (%p4360) target = $region36
      $region35: #{tpu_custom_call.1} parent=5 // pred_region
        %s4363 = ssub.s32 %s13, 2
        // Predicated region
        $region37: #{tpu_custom_call.1} parent=35 // pred_check
          %p4364 = pneg %p84
        $region38: #{tpu_custom_call.1} parent=35 // pred_check_branch
          %4366 = sbr.rel (%p4364) target = $region40
        $region39: #{tpu_custom_call.1} parent=35 // pred_region
          %s4367 = sand.u32 %s69, 1
          %s4368 = scalar_lea.sflag [#allocation5], %s4367
          %s4369 = sand.u32 %s69, 1
          %s4370 = smul.addr %s4369, 2
          %s4371 = scalar_lea.vmem [#allocation6], %s4370
          %4373 = dma.done %s4368, 32
        $region40: #{tpu_custom_call.1} parent=35 // pred_fallthru
          _
      $region36: #{tpu_custom_call.1} parent=5 // pred_fallthru
        _
    $region6: #{tpu_custom_call.1} parent=1 // loop_footer
      %s17 = sadd.s32 1, %s13
    $region7: #{tpu_custom_call.1} parent=1 // loop_footer_branch
      %12 = sbr.rel target = $region3
    $region8: #{tpu_custom_call.1} parent=1 // loop_exit
      _
    %4374 = vsyncpa [#allocation4], 1
    %s4375 = scalar_lea.sflag [#allocation4], 1
    %4376 = vsyncpa %s4375, 1
    %4377 = vsyncpa [#allocation5], 1
    %s4378 = scalar_lea.sflag [#allocation5], 1
    %4379 = vsyncpa %s4378, 1

</llo_original>
